<compile_context>
chip_gen: v7x
topology: tpu7x:2x2x1
jax: 0.10.0
libtpu: 0.0.40
codegen_flags: <defaults>
</compile_context>

<pallas_src>
import jax
import jax.numpy as jnp
from jax.experimental import pallas as pl
from jax.experimental.pallas import tpu as pltpu

_F32 = jnp.float32
_BF16 = jnp.bfloat16
_VMEM = pl.BlockSpec(memory_space=pltpu.MemorySpace.VMEM)

_N_LAYER_ARGS = 25  # 9 (edge MLP) + 8 (node MLP) + 8 (global MLP)


# ----------------------------------------------------------------------------
# Shared math helpers (used both inside the Pallas kernel and by the JAX ref)
# ----------------------------------------------------------------------------
def _bdot(a, b):
    """bf16 x bf16 matmul with f32 accumulation (MXU-friendly)."""
    return jnp.dot(a.astype(_BF16), b.astype(_BF16), preferred_element_type=_F32)


def _mlp3(x_parts, w1_parts, b1, w2, b2, w3, b3):
    """MLP_GN(hidden_layer_num=2): Lin -> ReLU -> Lin -> ReLU -> Lin.
    The first Linear is expressed as a sum of split-weight partial matmuls so
    the concatenated input tensor is never materialized."""
    h = b1.astype(_F32)
    for xp, wp in zip(x_parts, w1_parts):
        h = h + _bdot(xp, wp)
    h = jnp.maximum(h, 0.0)
    h = jnp.maximum(_bdot(h, w2) + b2, 0.0)
    return _bdot(h, w3) + b3


# ----------------------------------------------------------------------------
# Fused whole-forward kernel
# ----------------------------------------------------------------------------
def _make_forward_kernel(num_layers, glob_in):
    """Kernel argument order (all whole-array VMEM refs):
       x, e, g_src, g_dst, g_ue, s_col, g_un, s_bat,
       [25 weight refs per layer] * num_layers,
       w_out, b_out, | node_out (output)."""

    def kernel(*refs):
        o_ref = refs[-1]
        x = refs[0][...]                              # (N*D, Fn0)  f32
        e = refs[1][...]                              # (E*D, Fe0)  f32
        g_src, g_dst, g_ue, s_col, g_un, s_bat = (r[...] for r in refs[2:8])
        w_out, b_out = refs[-3][...], refs[-2][...]

        BM = s_bat.shape[0]
        u = jnp.zeros((BM, glob_in), _F32)            # u = x.new_zeros(...)

        p = 8
        for l in range(num_layers):
            (we1s, we1d, we1e, we1u, be1, we2, be2, we3, be3,
             wn1x, wn1r, wn1u, bn1, wn2, bn2, wn3, bn3,
             wg1n, wg1e, wg1u, bg1, wg2, bg2, wg3, bg3) = (
                 r[...] for r in refs[p:p + _N_LAYER_ARGS])
            p += _N_LAYER_ARGS

            # ---- EdgeModel: MLP([x[row], x[col], edge_attr, u[batch[row]]]) ----
            src = _bdot(g_src, x)                     # gather x[row]        (EM, Fn)
            dst = _bdot(g_dst, x)                     # gather x[col]        (EM, Fn)
            u_e = _bdot(g_ue, u)                      # gather u[batch[row]] (EM, Fg)
            upd_e = _mlp3((src, dst, e, u_e), (we1s, we1d, we1e, we1u),
                          be1, we2, be2, we3, be3)    # (EM, Ue)

            # ---- NodeModel: MLP([x, scatter_add(upd_e, col), u[batch]]) ----
            recv = _bdot(s_col, upd_e)                # segment-sum over edges (NM, Ue)
            u_n = _bdot(g_un, u)                      # gather u[batch]        (NM, Fg)
            upd_x = _mlp3((x, recv, u_n), (wn1x, wn1r, wn1u),
                          bn1, wn2, bn2, wn3, bn3)    # (NM, Un)

            # ---- residual concat for x (stays in VMEM/vregs, never HBM) ----
            x_new = jnp.concatenate([upd_x, x], axis=-1)

            # ---- GlobalModel + e/u residuals: only needed by the NEXT layer.
            #      node_out does not depend on the last layer's global update.
            if l + 1 < num_layers:
                agg_node = _bdot(s_bat, upd_x)        # scatter_add(upd_x, batch)
                agg_edge = _bdot(s_bat, recv)         # reuse recv == scatter(scatter(upd_e,col),batch)
                upd_u = _mlp3((agg_node, agg_edge, u), (wg1n, wg1e, wg1u),
                              bg1, wg2, bg2, wg3, bg3)
                u = jnp.concatenate([upd_u, u], axis=-1)
                e = jnp.concatenate([upd_e, e], axis=-1)
            x = x_new

        # ---- final node_out Linear ----
        o_ref[...] = _bdot(x, w_out) + b_out

    return kernel


# ----------------------------------------------------------------------------
# Parameter initialization (weights split by input group, stored as bf16)
# ----------------------------------------------------------------------------
def _mlp_init_split(key, in_splits, hidden, out_size, scale=0.1):
    in_size = sum(in_splits)
    ks = jax.random.split(key, 6)
    w1 = jax.random.normal(ks[0], (in_size, hidden), _F32) * scale
    b1 = jax.random.normal(ks[1], (1, hidden), _F32) * scale
    w2 = jax.random.normal(ks[2], (hidden, hidden), _F32) * scale
    b2 = jax.random.normal(ks[3], (1, hidden), _F32) * scale
    w3 = jax.random.normal(ks[4], (hidden, out_size), _F32) * scale
    b3 = jax.random.normal(ks[5], (1, out_size), _F32) * scale
    chunks, off = [], 0
    for s in in_splits:
        chunks.append(w1[off:off + s, :].astype(_BF16))
        off += s
    return tuple(chunks) + (b1, w2.astype(_BF16), b2, w3.astype(_BF16), b3)


def init_graphnet_params(key, node_in, edge_in, glob_in, hidden,
                         upd_node, upd_edge, upd_glob, node_out_size, gn_layer_num):
    layers = []
    ln, le, lg = node_in, edge_in, glob_in
    keys = jax.random.split(key, gn_layer_num + 1)
    for i in range(gn_layer_num):
        k_e, k_n, k_g = jax.random.split(keys[i], 3)
        edge_mlp = _mlp_init_split(k_e, (ln, ln, le, lg), hidden, upd_edge)
        le += upd_edge
        node_mlp = _mlp_init_split(k_n, (ln, upd_edge, lg), hidden, upd_node)
        ln += upd_node
        glob_mlp = _mlp_init_split(k_g, (upd_node, upd_edge, lg), hidden, upd_glob)
        lg += upd_glob
        layers.append({'edge': edge_mlp, 'node': node_mlp, 'global': glob_mlp})
    kw, kb = jax.random.split(keys[-1])
    w_out = (jax.random.normal(kw, (ln, node_out_size), _F32) * 0.1).astype(_BF16)
    b_out = jax.random.normal(kb, (1, node_out_size), _F32) * 0.1
    return {'layers': layers, 'node_out': (w_out, b_out)}


# ----------------------------------------------------------------------------
# Forward wrapper: builds one-hot projectors once, launches ONE pallas_call
# ----------------------------------------------------------------------------
def graphnet_forward(params, x, edge_index, edge_attr, batch, num_graphs, global_input_size):
    N, D1, D2, Fn0 = x.shape
    D = D1 * D2
    E = edge_index.shape[1]
    B = int(num_graphs)
    NM, EM, BM = N * D, E * D, B * D
    row, col = edge_index[0], edge_index[1]

    x2 = x.reshape(NM, Fn0).astype(_F32)
    e2 = jnp.broadcast_to(edge_attr, (E, D1, D2, edge_attr.shape[-1])).reshape(EM, -1).astype(_F32)

    # one-hot gather / scatter projectors (exact in bf16, used as MXU matmuls)
    eye_d = jnp.eye(D, dtype=_F32)

    def gmat(idx, n):
        oh = (idx[:, None] == jnp.arange(n, dtype=jnp.int32)[None, :]).astype(_F32)
        return jnp.kron(oh, eye_d)

    g_src = gmat(row, N)              # (EM, NM)  x[row]
    g_dst = gmat(col, N)              # (EM, NM)  x[col]
    g_un = gmat(batch, B)             # (NM, BM)  u[batch]
    g_ue = gmat(batch[row], B)        # (EM, BM)  u[batch[row]]
    s_col = g_dst.T                   # (NM, EM)  scatter_add over col
    s_bat = g_un.T                    # (BM, NM)  scatter_add over batch
    projs = [m.astype(_BF16) for m in (g_src, g_dst, g_ue, s_col, g_un, s_bat)]

    flat = [x2, e2] + projs
    for lp in params['layers']:
        flat += list(lp['edge']) + list(lp['node']) + list(lp['global'])
    w_out, b_out = params['node_out']
    flat += [w_out, b_out]

    kernel = _make_forward_kernel(len(params['layers']), int(global_input_size))
    out2d = pl.pallas_call(
        kernel,
        out_shape=jax.ShapeDtypeStruct((NM, w_out.shape[1]), _F32),
        in_specs=[_VMEM] * len(flat),
        out_specs=_VMEM,
    )(*flat)
    return out2d.reshape(N, D1, D2, w_out.shape[1])


# ----------------------------------------------------------------------------
# Pure-JAX reference (same bf16 matmul policy) for validation
# ----------------------------------------------------------------------------
def graphnet_reference(params, x, edge_index, edge_attr, batch, num_graphs, glob_in):
    N, D1, D2, _ = x.shape
    E = edge_index.shape[1]
    row, col = edge_index[0], edge_index[1]
    x = x.astype(_F32)
    e = jnp.broadcast_to(edge_attr, (E, D1, D2, edge_attr.shape[-1])).astype(_F32)
    u = jnp.zeros((num_graphs, D1, D2, glob_in), _F32)

    def r16(t):  # mirror the kernel's bf16 rounding before segment sums
        return t.astype(_BF16).astype(_F32)

    def seg_sum(src, idx, size):
        return jax.ops.segment_sum(r16(src), idx, num_segments=size)

    for lp in params['layers']:
        upd_e = _mlp3((x[row], x[col], e, u[batch[row]]), lp['edge'][:4], *lp['edge'][4:])
        recv = seg_sum(upd_e, col, N)
        upd_x = _mlp3((x, recv, u[batch]), lp['node'][:3], *lp['node'][3:])
        agg_node = seg_sum(upd_x, batch, num_graphs)
        agg_edge = seg_sum(recv, batch, num_graphs)
        upd_u = _mlp3((agg_node, agg_edge, u), lp['global'][:3], *lp['global'][3:])
        x = jnp.concatenate([upd_x, x], axis=-1)
        e = jnp.concatenate([upd_e, e], axis=-1)
        u = jnp.concatenate([upd_u, u], axis=-1)

    w_out, b_out = params['node_out']
    return _bdot(x, w_out) + b_out


# ----------------------------------------------------------------------------
# Main
# ----------------------------------------------------------------------------
if __name__ == "__main__":
    key = jax.random.PRNGKey(0)

    # Small shapes consistent with the module's forward
    N, E, B = 8, 16, 2            # nodes, edges, graphs
    D1, D2 = 2, 2                 # extra per-node spatial dims (x is 4-D)
    node_in, edge_in, glob_in = 4, 3, 2
    hidden = 32
    upd_node, upd_edge, upd_glob = 8, 8, 4
    node_out_size = 5
    gn_layer_num = 2

    k_param, k_x, k_e, k_r0, k_c0, k_r1, k_c1 = jax.random.split(key, 7)
    params = init_graphnet_params(k_param, node_in, edge_in, glob_in, hidden,
                                  upd_node, upd_edge, upd_glob,
                                  node_out_size, gn_layer_num)

    x = jax.random.normal(k_x, (N, D1, D2, node_in), jnp.float32)
    edge_attr = jax.random.normal(k_e, (E, 1, 1, edge_in), jnp.float32)
    batch = jnp.array([0, 0, 0, 0, 1, 1, 1, 1], dtype=jnp.int32)

    # edges kept inside their own graph (nodes 0..3 -> graph 0, 4..7 -> graph 1)
    row0 = jax.random.randint(k_r0, (E // 2,), 0, 4)
    col0 = jax.random.randint(k_c0, (E // 2,), 0, 4)
    row1 = jax.random.randint(k_r1, (E // 2,), 0, 4) + 4
    col1 = jax.random.randint(k_c1, (E // 2,), 0, 4) + 4
    edge_index = jnp.stack([jnp.concatenate([row0, row1]),
                            jnp.concatenate([col0, col1])]).astype(jnp.int32)

    out = graphnet_forward(params, x, edge_index, edge_attr, batch, B, glob_in)
    out = jax.block_until_ready(out)

    ref = graphnet_reference(params, x, edge_index, edge_attr, batch, B, glob_in)

    assert out.shape == (N, D1, D2, node_out_size)
    assert jnp.all(jnp.isfinite(out))
    assert float(jnp.max(jnp.abs(out - ref))) < 1e-2
    print("KERNEL_OK")
</pallas_src>

<mosaic_0001>
module attributes {stable_mosaic.version = 11 : i64} {
  func.func @kernel(%arg0: memref<32x4xf32, #tpu.memory_space<vmem>>, %arg1: memref<64x3xf32, #tpu.memory_space<vmem>>, %arg2: memref<64x32xbf16, #tpu.memory_space<vmem>>, %arg3: memref<64x32xbf16, #tpu.memory_space<vmem>>, %arg4: memref<64x8xbf16, #tpu.memory_space<vmem>>, %arg5: memref<32x64xbf16, #tpu.memory_space<vmem>>, %arg6: memref<32x8xbf16, #tpu.memory_space<vmem>>, %arg7: memref<8x32xbf16, #tpu.memory_space<vmem>>, %arg8: memref<4x32xbf16, #tpu.memory_space<vmem>>, %arg9: memref<4x32xbf16, #tpu.memory_space<vmem>>, %arg10: memref<3x32xbf16, #tpu.memory_space<vmem>>, %arg11: memref<2x32xbf16, #tpu.memory_space<vmem>>, %arg12: memref<1x32xf32, #tpu.memory_space<vmem>>, %arg13: memref<32x32xbf16, #tpu.memory_space<vmem>>, %arg14: memref<1x32xf32, #tpu.memory_space<vmem>>, %arg15: memref<32x8xbf16, #tpu.memory_space<vmem>>, %arg16: memref<1x8xf32, #tpu.memory_space<vmem>>, %arg17: memref<4x32xbf16, #tpu.memory_space<vmem>>, %arg18: memref<8x32xbf16, #tpu.memory_space<vmem>>, %arg19: memref<2x32xbf16, #tpu.memory_space<vmem>>, %arg20: memref<1x32xf32, #tpu.memory_space<vmem>>, %arg21: memref<32x32xbf16, #tpu.memory_space<vmem>>, %arg22: memref<1x32xf32, #tpu.memory_space<vmem>>, %arg23: memref<32x8xbf16, #tpu.memory_space<vmem>>, %arg24: memref<1x8xf32, #tpu.memory_space<vmem>>, %arg25: memref<8x32xbf16, #tpu.memory_space<vmem>>, %arg26: memref<8x32xbf16, #tpu.memory_space<vmem>>, %arg27: memref<2x32xbf16, #tpu.memory_space<vmem>>, %arg28: memref<1x32xf32, #tpu.memory_space<vmem>>, %arg29: memref<32x32xbf16, #tpu.memory_space<vmem>>, %arg30: memref<1x32xf32, #tpu.memory_space<vmem>>, %arg31: memref<32x4xbf16, #tpu.memory_space<vmem>>, %arg32: memref<1x4xf32, #tpu.memory_space<vmem>>, %arg33: memref<12x32xbf16, #tpu.memory_space<vmem>>, %arg34: memref<12x32xbf16, #tpu.memory_space<vmem>>, %arg35: memref<11x32xbf16, #tpu.memory_space<vmem>>, %arg36: memref<6x32xbf16, #tpu.memory_space<vmem>>, %arg37: memref<1x32xf32, #tpu.memory_space<vmem>>, %arg38: memref<32x32xbf16, #tpu.memory_space<vmem>>, %arg39: memref<1x32xf32, #tpu.memory_space<vmem>>, %arg40: memref<32x8xbf16, #tpu.memory_space<vmem>>, %arg41: memref<1x8xf32, #tpu.memory_space<vmem>>, %arg42: memref<12x32xbf16, #tpu.memory_space<vmem>>, %arg43: memref<8x32xbf16, #tpu.memory_space<vmem>>, %arg44: memref<6x32xbf16, #tpu.memory_space<vmem>>, %arg45: memref<1x32xf32, #tpu.memory_space<vmem>>, %arg46: memref<32x32xbf16, #tpu.memory_space<vmem>>, %arg47: memref<1x32xf32, #tpu.memory_space<vmem>>, %arg48: memref<32x8xbf16, #tpu.memory_space<vmem>>, %arg49: memref<1x8xf32, #tpu.memory_space<vmem>>, %arg50: memref<8x32xbf16, #tpu.memory_space<vmem>>, %arg51: memref<8x32xbf16, #tpu.memory_space<vmem>>, %arg52: memref<6x32xbf16, #tpu.memory_space<vmem>>, %arg53: memref<1x32xf32, #tpu.memory_space<vmem>>, %arg54: memref<32x32xbf16, #tpu.memory_space<vmem>>, %arg55: memref<1x32xf32, #tpu.memory_space<vmem>>, %arg56: memref<32x4xbf16, #tpu.memory_space<vmem>>, %arg57: memref<1x4xf32, #tpu.memory_space<vmem>>, %arg58: memref<20x5xbf16, #tpu.memory_space<vmem>>, %arg59: memref<1x5xf32, #tpu.memory_space<vmem>>, %arg60: memref<32x5xf32, #tpu.memory_space<vmem>>) attributes {dimension_semantics = [], scalar_prefetch = 0 : i64, scratch_operands = 0 : i64, tpu.core_type = #tpu.core_type<tc>} {
    %c0 = arith.constant 0 : index
    %c0_0 = arith.constant 0 : index
    %0 = vector.load %arg0[%c0, %c0_0] : memref<32x4xf32, #tpu.memory_space<vmem>>, vector<32x4xf32>
    %c0_1 = arith.constant 0 : index
    %c0_2 = arith.constant 0 : index
    %1 = vector.load %arg1[%c0_1, %c0_2] : memref<64x3xf32, #tpu.memory_space<vmem>>, vector<64x3xf32>
    %c0_3 = arith.constant 0 : index
    %c0_4 = arith.constant 0 : index
    %2 = vector.load %arg2[%c0_3, %c0_4] : memref<64x32xbf16, #tpu.memory_space<vmem>>, vector<64x32xbf16>
    %c0_5 = arith.constant 0 : index
    %c0_6 = arith.constant 0 : index
    %3 = vector.load %arg3[%c0_5, %c0_6] : memref<64x32xbf16, #tpu.memory_space<vmem>>, vector<64x32xbf16>
    %c0_7 = arith.constant 0 : index
    %c0_8 = arith.constant 0 : index
    %4 = vector.load %arg4[%c0_7, %c0_8] : memref<64x8xbf16, #tpu.memory_space<vmem>>, vector<64x8xbf16>
    %c0_9 = arith.constant 0 : index
    %c0_10 = arith.constant 0 : index
    %5 = vector.load %arg5[%c0_9, %c0_10] : memref<32x64xbf16, #tpu.memory_space<vmem>>, vector<32x64xbf16>
    %c0_11 = arith.constant 0 : index
    %c0_12 = arith.constant 0 : index
    %6 = vector.load %arg6[%c0_11, %c0_12] : memref<32x8xbf16, #tpu.memory_space<vmem>>, vector<32x8xbf16>
    %c0_13 = arith.constant 0 : index
    %c0_14 = arith.constant 0 : index
    %7 = vector.load %arg7[%c0_13, %c0_14] : memref<8x32xbf16, #tpu.memory_space<vmem>>, vector<8x32xbf16>
    %c0_15 = arith.constant 0 : index
    %c0_16 = arith.constant 0 : index
    %8 = vector.load %arg58[%c0_15, %c0_16] : memref<20x5xbf16, #tpu.memory_space<vmem>>, vector<20x5xbf16>
    %c0_17 = arith.constant 0 : index
    %c0_18 = arith.constant 0 : index
    %9 = vector.load %arg59[%c0_17, %c0_18] : memref<1x5xf32, #tpu.memory_space<vmem>>, vector<1x5xf32>
    %cst = arith.constant 0.000000e+00 : f32
    %10 = vector.broadcast %cst : f32 to vector<8x2xf32>
    %c0_19 = arith.constant 0 : index
    %c0_20 = arith.constant 0 : index
    %11 = vector.load %arg8[%c0_19, %c0_20] : memref<4x32xbf16, #tpu.memory_space<vmem>>, vector<4x32xbf16>
    %c0_21 = arith.constant 0 : index
    %c0_22 = arith.constant 0 : index
    %12 = vector.load %arg9[%c0_21, %c0_22] : memref<4x32xbf16, #tpu.memory_space<vmem>>, vector<4x32xbf16>
    %c0_23 = arith.constant 0 : index
    %c0_24 = arith.constant 0 : index
    %13 = vector.load %arg10[%c0_23, %c0_24] : memref<3x32xbf16, #tpu.memory_space<vmem>>, vector<3x32xbf16>
    %c0_25 = arith.constant 0 : index
    %c0_26 = arith.constant 0 : index
    %14 = vector.load %arg11[%c0_25, %c0_26] : memref<2x32xbf16, #tpu.memory_space<vmem>>, vector<2x32xbf16>
    %c0_27 = arith.constant 0 : index
    %c0_28 = arith.constant 0 : index
    %15 = vector.load %arg12[%c0_27, %c0_28] : memref<1x32xf32, #tpu.memory_space<vmem>>, vector<1x32xf32>
    %c0_29 = arith.constant 0 : index
    %c0_30 = arith.constant 0 : index
    %16 = vector.load %arg13[%c0_29, %c0_30] : memref<32x32xbf16, #tpu.memory_space<vmem>>, vector<32x32xbf16>
    %c0_31 = arith.constant 0 : index
    %c0_32 = arith.constant 0 : index
    %17 = vector.load %arg14[%c0_31, %c0_32] : memref<1x32xf32, #tpu.memory_space<vmem>>, vector<1x32xf32>
    %c0_33 = arith.constant 0 : index
    %c0_34 = arith.constant 0 : index
    %18 = vector.load %arg15[%c0_33, %c0_34] : memref<32x8xbf16, #tpu.memory_space<vmem>>, vector<32x8xbf16>
    %c0_35 = arith.constant 0 : index
    %c0_36 = arith.constant 0 : index
    %19 = vector.load %arg16[%c0_35, %c0_36] : memref<1x8xf32, #tpu.memory_space<vmem>>, vector<1x8xf32>
    %c0_37 = arith.constant 0 : index
    %c0_38 = arith.constant 0 : index
    %20 = vector.load %arg17[%c0_37, %c0_38] : memref<4x32xbf16, #tpu.memory_space<vmem>>, vector<4x32xbf16>
    %c0_39 = arith.constant 0 : index
    %c0_40 = arith.constant 0 : index
    %21 = vector.load %arg18[%c0_39, %c0_40] : memref<8x32xbf16, #tpu.memory_space<vmem>>, vector<8x32xbf16>
    %c0_41 = arith.constant 0 : index
    %c0_42 = arith.constant 0 : index
    %22 = vector.load %arg19[%c0_41, %c0_42] : memref<2x32xbf16, #tpu.memory_space<vmem>>, vector<2x32xbf16>
    %c0_43 = arith.constant 0 : index
    %c0_44 = arith.constant 0 : index
    %23 = vector.load %arg20[%c0_43, %c0_44] : memref<1x32xf32, #tpu.memory_space<vmem>>, vector<1x32xf32>
    %c0_45 = arith.constant 0 : index
    %c0_46 = arith.constant 0 : index
    %24 = vector.load %arg21[%c0_45, %c0_46] : memref<32x32xbf16, #tpu.memory_space<vmem>>, vector<32x32xbf16>
    %c0_47 = arith.constant 0 : index
    %c0_48 = arith.constant 0 : index
    %25 = vector.load %arg22[%c0_47, %c0_48] : memref<1x32xf32, #tpu.memory_space<vmem>>, vector<1x32xf32>
    %c0_49 = arith.constant 0 : index
    %c0_50 = arith.constant 0 : index
    %26 = vector.load %arg23[%c0_49, %c0_50] : memref<32x8xbf16, #tpu.memory_space<vmem>>, vector<32x8xbf16>
    %c0_51 = arith.constant 0 : index
    %c0_52 = arith.constant 0 : index
    %27 = vector.load %arg24[%c0_51, %c0_52] : memref<1x8xf32, #tpu.memory_space<vmem>>, vector<1x8xf32>
    %c0_53 = arith.constant 0 : index
    %c0_54 = arith.constant 0 : index
    %28 = vector.load %arg25[%c0_53, %c0_54] : memref<8x32xbf16, #tpu.memory_space<vmem>>, vector<8x32xbf16>
    %c0_55 = arith.constant 0 : index
    %c0_56 = arith.constant 0 : index
    %29 = vector.load %arg26[%c0_55, %c0_56] : memref<8x32xbf16, #tpu.memory_space<vmem>>, vector<8x32xbf16>
    %c0_57 = arith.constant 0 : index
    %c0_58 = arith.constant 0 : index
    %30 = vector.load %arg27[%c0_57, %c0_58] : memref<2x32xbf16, #tpu.memory_space<vmem>>, vector<2x32xbf16>
    %c0_59 = arith.constant 0 : index
    %c0_60 = arith.constant 0 : index
    %31 = vector.load %arg28[%c0_59, %c0_60] : memref<1x32xf32, #tpu.memory_space<vmem>>, vector<1x32xf32>
    %c0_61 = arith.constant 0 : index
    %c0_62 = arith.constant 0 : index
    %32 = vector.load %arg29[%c0_61, %c0_62] : memref<32x32xbf16, #tpu.memory_space<vmem>>, vector<32x32xbf16>
    %c0_63 = arith.constant 0 : index
    %c0_64 = arith.constant 0 : index
    %33 = vector.load %arg30[%c0_63, %c0_64] : memref<1x32xf32, #tpu.memory_space<vmem>>, vector<1x32xf32>
    %c0_65 = arith.constant 0 : index
    %c0_66 = arith.constant 0 : index
    %34 = vector.load %arg31[%c0_65, %c0_66] : memref<32x4xbf16, #tpu.memory_space<vmem>>, vector<32x4xbf16>
    %c0_67 = arith.constant 0 : index
    %c0_68 = arith.constant 0 : index
    %35 = vector.load %arg32[%c0_67, %c0_68] : memref<1x4xf32, #tpu.memory_space<vmem>>, vector<1x4xf32>
    %36 = arith.truncf %0 : vector<32x4xf32> to vector<32x4xbf16>
    %cst_69 = arith.constant dense<0.000000e+00> : vector<64x4xf32>
    %37 = tpu.matmul %2, %36, %cst_69 {dimension_numbers = #tpu.dot_dimension_numbers<[1], [0], [0], [1], [0, 0, 1, 1], [], []>} : vector<64x32xbf16>, vector<32x4xbf16>, vector<64x4xf32> -> vector<64x4xf32>
    %38 = arith.truncf %0 : vector<32x4xf32> to vector<32x4xbf16>
    %cst_70 = arith.constant dense<0.000000e+00> : vector<64x4xf32>
    %39 = tpu.matmul %3, %38, %cst_70 {dimension_numbers = #tpu.dot_dimension_numbers<[1], [0], [0], [1], [0, 0, 1, 1], [], []>} : vector<64x32xbf16>, vector<32x4xbf16>, vector<64x4xf32> -> vector<64x4xf32>
    %40 = arith.truncf %10 : vector<8x2xf32> to vector<8x2xbf16>
    %cst_71 = arith.constant dense<0.000000e+00> : vector<64x2xf32>
    %41 = tpu.matmul %4, %40, %cst_71 {dimension_numbers = #tpu.dot_dimension_numbers<[1], [0], [0], [1], [0, 0, 1, 1], [], []>} : vector<64x8xbf16>, vector<8x2xbf16>, vector<64x2xf32> -> vector<64x2xf32>
    %42 = arith.truncf %37 : vector<64x4xf32> to vector<64x4xbf16>
    %cst_72 = arith.constant dense<0.000000e+00> : vector<64x32xf32>
    %43 = tpu.matmul %42, %11, %cst_72 {dimension_numbers = #tpu.dot_dimension_numbers<[1], [0], [0], [1], [0, 0, 1, 1], [], []>} : vector<64x4xbf16>, vector<4x32xbf16>, vector<64x32xf32> -> vector<64x32xf32>
    %44 = vector.broadcast %15 : vector<1x32xf32> to vector<64x32xf32>
    %45 = arith.addf %44, %43 : vector<64x32xf32>
    %46 = arith.truncf %39 : vector<64x4xf32> to vector<64x4xbf16>
    %cst_73 = arith.constant dense<0.000000e+00> : vector<64x32xf32>
    %47 = tpu.matmul %46, %12, %cst_73 {dimension_numbers = #tpu.dot_dimension_numbers<[1], [0], [0], [1], [0, 0, 1, 1], [], []>} : vector<64x4xbf16>, vector<4x32xbf16>, vector<64x32xf32> -> vector<64x32xf32>
    %48 = arith.addf %45, %47 : vector<64x32xf32>
    %49 = arith.truncf %1 : vector<64x3xf32> to vector<64x3xbf16>
    %cst_74 = arith.constant dense<0.000000e+00> : vector<64x32xf32>
    %50 = tpu.matmul %49, %13, %cst_74 {dimension_numbers = #tpu.dot_dimension_numbers<[1], [0], [0], [1], [0, 0, 1, 1], [], []>} : vector<64x3xbf16>, vector<3x32xbf16>, vector<64x32xf32> -> vector<64x32xf32>
    %51 = arith.addf %48, %50 : vector<64x32xf32>
    %52 = arith.truncf %41 : vector<64x2xf32> to vector<64x2xbf16>
    %cst_75 = arith.constant dense<0.000000e+00> : vector<64x32xf32>
    %53 = tpu.matmul %52, %14, %cst_75 {dimension_numbers = #tpu.dot_dimension_numbers<[1], [0], [0], [1], [0, 0, 1, 1], [], []>} : vector<64x2xbf16>, vector<2x32xbf16>, vector<64x32xf32> -> vector<64x32xf32>
    %54 = arith.addf %51, %53 : vector<64x32xf32>
    %cst_76 = arith.constant 0.000000e+00 : f32
    %55 = vector.broadcast %cst_76 : f32 to vector<64x32xf32>
    %56 = arith.maximumf %54, %55 : vector<64x32xf32>
    %57 = arith.truncf %56 : vector<64x32xf32> to vector<64x32xbf16>
    %cst_77 = arith.constant dense<0.000000e+00> : vector<64x32xf32>
    %58 = tpu.matmul %57, %16, %cst_77 {dimension_numbers = #tpu.dot_dimension_numbers<[1], [0], [0], [1], [0, 0, 1, 1], [], []>} : vector<64x32xbf16>, vector<32x32xbf16>, vector<64x32xf32> -> vector<64x32xf32>
    %59 = vector.broadcast %17 : vector<1x32xf32> to vector<64x32xf32>
    %60 = arith.addf %58, %59 : vector<64x32xf32>
    %cst_78 = arith.constant 0.000000e+00 : f32
    %61 = vector.broadcast %cst_78 : f32 to vector<64x32xf32>
    %62 = arith.maximumf %60, %61 : vector<64x32xf32>
    %63 = arith.truncf %62 : vector<64x32xf32> to vector<64x32xbf16>
    %cst_79 = arith.constant dense<0.000000e+00> : vector<64x8xf32>
    %64 = tpu.matmul %63, %18, %cst_79 {dimension_numbers = #tpu.dot_dimension_numbers<[1], [0], [0], [1], [0, 0, 1, 1], [], []>} : vector<64x32xbf16>, vector<32x8xbf16>, vector<64x8xf32> -> vector<64x8xf32>
    %65 = vector.broadcast %19 : vector<1x8xf32> to vector<64x8xf32>
    %66 = arith.addf %64, %65 : vector<64x8xf32>
    %67 = arith.truncf %66 : vector<64x8xf32> to vector<64x8xbf16>
    %cst_80 = arith.constant dense<0.000000e+00> : vector<32x8xf32>
    %68 = tpu.matmul %5, %67, %cst_80 {dimension_numbers = #tpu.dot_dimension_numbers<[1], [0], [0], [1], [0, 0, 1, 1], [], []>} : vector<32x64xbf16>, vector<64x8xbf16>, vector<32x8xf32> -> vector<32x8xf32>
    %69 = arith.truncf %10 : vector<8x2xf32> to vector<8x2xbf16>
    %cst_81 = arith.constant dense<0.000000e+00> : vector<32x2xf32>
    %70 = tpu.matmul %6, %69, %cst_81 {dimension_numbers = #tpu.dot_dimension_numbers<[1], [0], [0], [1], [0, 0, 1, 1], [], []>} : vector<32x8xbf16>, vector<8x2xbf16>, vector<32x2xf32> -> vector<32x2xf32>
    %71 = arith.truncf %0 : vector<32x4xf32> to vector<32x4xbf16>
    %cst_82 = arith.constant dense<0.000000e+00> : vector<32x32xf32>
    %72 = tpu.matmul %71, %20, %cst_82 {dimension_numbers = #tpu.dot_dimension_numbers<[1], [0], [0], [1], [0, 0, 1, 1], [], []>} : vector<32x4xbf16>, vector<4x32xbf16>, vector<32x32xf32> -> vector<32x32xf32>
    %73 = vector.broadcast %23 : vector<1x32xf32> to vector<32x32xf32>
    %74 = arith.addf %73, %72 : vector<32x32xf32>
    %75 = arith.truncf %68 : vector<32x8xf32> to vector<32x8xbf16>
    %cst_83 = arith.constant dense<0.000000e+00> : vector<32x32xf32>
    %76 = tpu.matmul %75, %21, %cst_83 {dimension_numbers = #tpu.dot_dimension_numbers<[1], [0], [0], [1], [0, 0, 1, 1], [], []>} : vector<32x8xbf16>, vector<8x32xbf16>, vector<32x32xf32> -> vector<32x32xf32>
    %77 = arith.addf %74, %76 : vector<32x32xf32>
    %78 = arith.truncf %70 : vector<32x2xf32> to vector<32x2xbf16>
    %cst_84 = arith.constant dense<0.000000e+00> : vector<32x32xf32>
    %79 = tpu.matmul %78, %22, %cst_84 {dimension_numbers = #tpu.dot_dimension_numbers<[1], [0], [0], [1], [0, 0, 1, 1], [], []>} : vector<32x2xbf16>, vector<2x32xbf16>, vector<32x32xf32> -> vector<32x32xf32>
    %80 = arith.addf %77, %79 : vector<32x32xf32>
    %cst_85 = arith.constant 0.000000e+00 : f32
    %81 = vector.broadcast %cst_85 : f32 to vector<32x32xf32>
    %82 = arith.maximumf %80, %81 : vector<32x32xf32>
    %83 = arith.truncf %82 : vector<32x32xf32> to vector<32x32xbf16>
    %cst_86 = arith.constant dense<0.000000e+00> : vector<32x32xf32>
    %84 = tpu.matmul %83, %24, %cst_86 {dimension_numbers = #tpu.dot_dimension_numbers<[1], [0], [0], [1], [0, 0, 1, 1], [], []>} : vector<32x32xbf16>, vector<32x32xbf16>, vector<32x32xf32> -> vector<32x32xf32>
    %85 = vector.broadcast %25 : vector<1x32xf32> to vector<32x32xf32>
    %86 = arith.addf %84, %85 : vector<32x32xf32>
    %cst_87 = arith.constant 0.000000e+00 : f32
    %87 = vector.broadcast %cst_87 : f32 to vector<32x32xf32>
    %88 = arith.maximumf %86, %87 : vector<32x32xf32>
    %89 = arith.truncf %88 : vector<32x32xf32> to vector<32x32xbf16>
    %cst_88 = arith.constant dense<0.000000e+00> : vector<32x8xf32>
    %90 = tpu.matmul %89, %26, %cst_88 {dimension_numbers = #tpu.dot_dimension_numbers<[1], [0], [0], [1], [0, 0, 1, 1], [], []>} : vector<32x32xbf16>, vector<32x8xbf16>, vector<32x8xf32> -> vector<32x8xf32>
    %91 = vector.broadcast %27 : vector<1x8xf32> to vector<32x8xf32>
    %92 = arith.addf %90, %91 : vector<32x8xf32>
    %93 = tpu.concatenate %92, %0 in 1 : vector<32x8xf32>, vector<32x4xf32> -> vector<32x12xf32>
    %94 = arith.truncf %92 : vector<32x8xf32> to vector<32x8xbf16>
    %cst_89 = arith.constant dense<0.000000e+00> : vector<8x8xf32>
    %95 = tpu.matmul %7, %94, %cst_89 {dimension_numbers = #tpu.dot_dimension_numbers<[1], [0], [0], [1], [0, 0, 1, 1], [], []>} : vector<8x32xbf16>, vector<32x8xbf16>, vector<8x8xf32> -> vector<8x8xf32>
    %96 = arith.truncf %68 : vector<32x8xf32> to vector<32x8xbf16>
    %cst_90 = arith.constant dense<0.000000e+00> : vector<8x8xf32>
    %97 = tpu.matmul %7, %96, %cst_90 {dimension_numbers = #tpu.dot_dimension_numbers<[1], [0], [0], [1], [0, 0, 1, 1], [], []>} : vector<8x32xbf16>, vector<32x8xbf16>, vector<8x8xf32> -> vector<8x8xf32>
    %98 = arith.truncf %95 : vector<8x8xf32> to vector<8x8xbf16>
    %cst_91 = arith.constant dense<0.000000e+00> : vector<8x32xf32>
    %99 = tpu.matmul %98, %28, %cst_91 {dimension_numbers = #tpu.dot_dimension_numbers<[1], [0], [0], [1], [0, 0, 1, 1], [], []>} : vector<8x8xbf16>, vector<8x32xbf16>, vector<8x32xf32> -> vector<8x32xf32>
    %100 = vector.broadcast %31 : vector<1x32xf32> to vector<8x32xf32>
    %101 = arith.addf %100, %99 : vector<8x32xf32>
    %102 = arith.truncf %97 : vector<8x8xf32> to vector<8x8xbf16>
    %cst_92 = arith.constant dense<0.000000e+00> : vector<8x32xf32>
    %103 = tpu.matmul %102, %29, %cst_92 {dimension_numbers = #tpu.dot_dimension_numbers<[1], [0], [0], [1], [0, 0, 1, 1], [], []>} : vector<8x8xbf16>, vector<8x32xbf16>, vector<8x32xf32> -> vector<8x32xf32>
    %104 = arith.addf %101, %103 : vector<8x32xf32>
    %105 = arith.truncf %10 : vector<8x2xf32> to vector<8x2xbf16>
    %cst_93 = arith.constant dense<0.000000e+00> : vector<8x32xf32>
    %106 = tpu.matmul %105, %30, %cst_93 {dimension_numbers = #tpu.dot_dimension_numbers<[1], [0], [0], [1], [0, 0, 1, 1], [], []>} : vector<8x2xbf16>, vector<2x32xbf16>, vector<8x32xf32> -> vector<8x32xf32>
    %107 = arith.addf %104, %106 : vector<8x32xf32>
    %cst_94 = arith.constant 0.000000e+00 : f32
    %108 = vector.broadcast %cst_94 : f32 to vector<8x32xf32>
    %109 = arith.maximumf %107, %108 : vector<8x32xf32>
    %110 = arith.truncf %109 : vector<8x32xf32> to vector<8x32xbf16>
    %cst_95 = arith.constant dense<0.000000e+00> : vector<8x32xf32>
    %111 = tpu.matmul %110, %32, %cst_95 {dimension_numbers = #tpu.dot_dimension_numbers<[1], [0], [0], [1], [0, 0, 1, 1], [], []>} : vector<8x32xbf16>, vector<32x32xbf16>, vector<8x32xf32> -> vector<8x32xf32>
    %112 = vector.broadcast %33 : vector<1x32xf32> to vector<8x32xf32>
    %113 = arith.addf %111, %112 : vector<8x32xf32>
    %cst_96 = arith.constant 0.000000e+00 : f32
    %114 = vector.broadcast %cst_96 : f32 to vector<8x32xf32>
    %115 = arith.maximumf %113, %114 : vector<8x32xf32>
    %116 = arith.truncf %115 : vector<8x32xf32> to vector<8x32xbf16>
    %cst_97 = arith.constant dense<0.000000e+00> : vector<8x4xf32>
    %117 = tpu.matmul %116, %34, %cst_97 {dimension_numbers = #tpu.dot_dimension_numbers<[1], [0], [0], [1], [0, 0, 1, 1], [], []>} : vector<8x32xbf16>, vector<32x4xbf16>, vector<8x4xf32> -> vector<8x4xf32>
    %118 = vector.broadcast %35 : vector<1x4xf32> to vector<8x4xf32>
    %119 = arith.addf %117, %118 : vector<8x4xf32>
    %120 = tpu.concatenate %119, %10 in 1 : vector<8x4xf32>, vector<8x2xf32> -> vector<8x6xf32>
    %121 = tpu.concatenate %66, %1 in 1 : vector<64x8xf32>, vector<64x3xf32> -> vector<64x11xf32>
    %c0_98 = arith.constant 0 : index
    %c0_99 = arith.constant 0 : index
    %122 = vector.load %arg33[%c0_98, %c0_99] : memref<12x32xbf16, #tpu.memory_space<vmem>>, vector<12x32xbf16>
    %c0_100 = arith.constant 0 : index
    %c0_101 = arith.constant 0 : index
    %123 = vector.load %arg34[%c0_100, %c0_101] : memref<12x32xbf16, #tpu.memory_space<vmem>>, vector<12x32xbf16>
    %c0_102 = arith.constant 0 : index
    %c0_103 = arith.constant 0 : index
    %124 = vector.load %arg35[%c0_102, %c0_103] : memref<11x32xbf16, #tpu.memory_space<vmem>>, vector<11x32xbf16>
    %c0_104 = arith.constant 0 : index
    %c0_105 = arith.constant 0 : index
    %125 = vector.load %arg36[%c0_104, %c0_105] : memref<6x32xbf16, #tpu.memory_space<vmem>>, vector<6x32xbf16>
    %c0_106 = arith.constant 0 : index
    %c0_107 = arith.constant 0 : index
    %126 = vector.load %arg37[%c0_106, %c0_107] : memref<1x32xf32, #tpu.memory_space<vmem>>, vector<1x32xf32>
    %c0_108 = arith.constant 0 : index
    %c0_109 = arith.constant 0 : index
    %127 = vector.load %arg38[%c0_108, %c0_109] : memref<32x32xbf16, #tpu.memory_space<vmem>>, vector<32x32xbf16>
    %c0_110 = arith.constant 0 : index
    %c0_111 = arith.constant 0 : index
    %128 = vector.load %arg39[%c0_110, %c0_111] : memref<1x32xf32, #tpu.memory_space<vmem>>, vector<1x32xf32>
    %c0_112 = arith.constant 0 : index
    %c0_113 = arith.constant 0 : index
    %129 = vector.load %arg40[%c0_112, %c0_113] : memref<32x8xbf16, #tpu.memory_space<vmem>>, vector<32x8xbf16>
    %c0_114 = arith.constant 0 : index
    %c0_115 = arith.constant 0 : index
    %130 = vector.load %arg41[%c0_114, %c0_115] : memref<1x8xf32, #tpu.memory_space<vmem>>, vector<1x8xf32>
    %c0_116 = arith.constant 0 : index
    %c0_117 = arith.constant 0 : index
    %131 = vector.load %arg42[%c0_116, %c0_117] : memref<12x32xbf16, #tpu.memory_space<vmem>>, vector<12x32xbf16>
    %c0_118 = arith.constant 0 : index
    %c0_119 = arith.constant 0 : index
    %132 = vector.load %arg43[%c0_118, %c0_119] : memref<8x32xbf16, #tpu.memory_space<vmem>>, vector<8x32xbf16>
    %c0_120 = arith.constant 0 : index
    %c0_121 = arith.constant 0 : index
    %133 = vector.load %arg44[%c0_120, %c0_121] : memref<6x32xbf16, #tpu.memory_space<vmem>>, vector<6x32xbf16>
    %c0_122 = arith.constant 0 : index
    %c0_123 = arith.constant 0 : index
    %134 = vector.load %arg45[%c0_122, %c0_123] : memref<1x32xf32, #tpu.memory_space<vmem>>, vector<1x32xf32>
    %c0_124 = arith.constant 0 : index
    %c0_125 = arith.constant 0 : index
    %135 = vector.load %arg46[%c0_124, %c0_125] : memref<32x32xbf16, #tpu.memory_space<vmem>>, vector<32x32xbf16>
    %c0_126 = arith.constant 0 : index
    %c0_127 = arith.constant 0 : index
    %136 = vector.load %arg47[%c0_126, %c0_127] : memref<1x32xf32, #tpu.memory_space<vmem>>, vector<1x32xf32>
    %c0_128 = arith.constant 0 : index
    %c0_129 = arith.constant 0 : index
    %137 = vector.load %arg48[%c0_128, %c0_129] : memref<32x8xbf16, #tpu.memory_space<vmem>>, vector<32x8xbf16>
    %c0_130 = arith.constant 0 : index
    %c0_131 = arith.constant 0 : index
    %138 = vector.load %arg49[%c0_130, %c0_131] : memref<1x8xf32, #tpu.memory_space<vmem>>, vector<1x8xf32>
    %139 = arith.truncf %93 : vector<32x12xf32> to vector<32x12xbf16>
    %cst_132 = arith.constant dense<0.000000e+00> : vector<64x12xf32>
    %140 = tpu.matmul %2, %139, %cst_132 {dimension_numbers = #tpu.dot_dimension_numbers<[1], [0], [0], [1], [0, 0, 1, 1], [], []>} : vector<64x32xbf16>, vector<32x12xbf16>, vector<64x12xf32> -> vector<64x12xf32>
    %141 = arith.truncf %93 : vector<32x12xf32> to vector<32x12xbf16>
    %cst_133 = arith.constant dense<0.000000e+00> : vector<64x12xf32>
    %142 = tpu.matmul %3, %141, %cst_133 {dimension_numbers = #tpu.dot_dimension_numbers<[1], [0], [0], [1], [0, 0, 1, 1], [], []>} : vector<64x32xbf16>, vector<32x12xbf16>, vector<64x12xf32> -> vector<64x12xf32>
    %143 = arith.truncf %120 : vector<8x6xf32> to vector<8x6xbf16>
    %cst_134 = arith.constant dense<0.000000e+00> : vector<64x6xf32>
    %144 = tpu.matmul %4, %143, %cst_134 {dimension_numbers = #tpu.dot_dimension_numbers<[1], [0], [0], [1], [0, 0, 1, 1], [], []>} : vector<64x8xbf16>, vector<8x6xbf16>, vector<64x6xf32> -> vector<64x6xf32>
    %145 = arith.truncf %140 : vector<64x12xf32> to vector<64x12xbf16>
    %cst_135 = arith.constant dense<0.000000e+00> : vector<64x32xf32>
    %146 = tpu.matmul %145, %122, %cst_135 {dimension_numbers = #tpu.dot_dimension_numbers<[1], [0], [0], [1], [0, 0, 1, 1], [], []>} : vector<64x12xbf16>, vector<12x32xbf16>, vector<64x32xf32> -> vector<64x32xf32>
    %147 = vector.broadcast %126 : vector<1x32xf32> to vector<64x32xf32>
    %148 = arith.addf %147, %146 : vector<64x32xf32>
    %149 = arith.truncf %142 : vector<64x12xf32> to vector<64x12xbf16>
    %cst_136 = arith.constant dense<0.000000e+00> : vector<64x32xf32>
    %150 = tpu.matmul %149, %123, %cst_136 {dimension_numbers = #tpu.dot_dimension_numbers<[1], [0], [0], [1], [0, 0, 1, 1], [], []>} : vector<64x12xbf16>, vector<12x32xbf16>, vector<64x32xf32> -> vector<64x32xf32>
    %151 = arith.addf %148, %150 : vector<64x32xf32>
    %152 = arith.truncf %121 : vector<64x11xf32> to vector<64x11xbf16>
    %cst_137 = arith.constant dense<0.000000e+00> : vector<64x32xf32>
    %153 = tpu.matmul %152, %124, %cst_137 {dimension_numbers = #tpu.dot_dimension_numbers<[1], [0], [0], [1], [0, 0, 1, 1], [], []>} : vector<64x11xbf16>, vector<11x32xbf16>, vector<64x32xf32> -> vector<64x32xf32>
    %154 = arith.addf %151, %153 : vector<64x32xf32>
    %155 = arith.truncf %144 : vector<64x6xf32> to vector<64x6xbf16>
    %cst_138 = arith.constant dense<0.000000e+00> : vector<64x32xf32>
    %156 = tpu.matmul %155, %125, %cst_138 {dimension_numbers = #tpu.dot_dimension_numbers<[1], [0], [0], [1], [0, 0, 1, 1], [], []>} : vector<64x6xbf16>, vector<6x32xbf16>, vector<64x32xf32> -> vector<64x32xf32>
    %157 = arith.addf %154, %156 : vector<64x32xf32>
    %cst_139 = arith.constant 0.000000e+00 : f32
    %158 = vector.broadcast %cst_139 : f32 to vector<64x32xf32>
    %159 = arith.maximumf %157, %158 : vector<64x32xf32>
    %160 = arith.truncf %159 : vector<64x32xf32> to vector<64x32xbf16>
    %cst_140 = arith.constant dense<0.000000e+00> : vector<64x32xf32>
    %161 = tpu.matmul %160, %127, %cst_140 {dimension_numbers = #tpu.dot_dimension_numbers<[1], [0], [0], [1], [0, 0, 1, 1], [], []>} : vector<64x32xbf16>, vector<32x32xbf16>, vector<64x32xf32> -> vector<64x32xf32>
    %162 = vector.broadcast %128 : vector<1x32xf32> to vector<64x32xf32>
    %163 = arith.addf %161, %162 : vector<64x32xf32>
    %cst_141 = arith.constant 0.000000e+00 : f32
    %164 = vector.broadcast %cst_141 : f32 to vector<64x32xf32>
    %165 = arith.maximumf %163, %164 : vector<64x32xf32>
    %166 = arith.truncf %165 : vector<64x32xf32> to vector<64x32xbf16>
    %cst_142 = arith.constant dense<0.000000e+00> : vector<64x8xf32>
    %167 = tpu.matmul %166, %129, %cst_142 {dimension_numbers = #tpu.dot_dimension_numbers<[1], [0], [0], [1], [0, 0, 1, 1], [], []>} : vector<64x32xbf16>, vector<32x8xbf16>, vector<64x8xf32> -> vector<64x8xf32>
    %168 = vector.broadcast %130 : vector<1x8xf32> to vector<64x8xf32>
    %169 = arith.addf %167, %168 : vector<64x8xf32>
    %170 = arith.truncf %169 : vector<64x8xf32> to vector<64x8xbf16>
    %cst_143 = arith.constant dense<0.000000e+00> : vector<32x8xf32>
    %171 = tpu.matmul %5, %170, %cst_143 {dimension_numbers = #tpu.dot_dimension_numbers<[1], [0], [0], [1], [0, 0, 1, 1], [], []>} : vector<32x64xbf16>, vector<64x8xbf16>, vector<32x8xf32> -> vector<32x8xf32>
    %172 = arith.truncf %120 : vector<8x6xf32> to vector<8x6xbf16>
    %cst_144 = arith.constant dense<0.000000e+00> : vector<32x6xf32>
    %173 = tpu.matmul %6, %172, %cst_144 {dimension_numbers = #tpu.dot_dimension_numbers<[1], [0], [0], [1], [0, 0, 1, 1], [], []>} : vector<32x8xbf16>, vector<8x6xbf16>, vector<32x6xf32> -> vector<32x6xf32>
    %174 = arith.truncf %93 : vector<32x12xf32> to vector<32x12xbf16>
    %cst_145 = arith.constant dense<0.000000e+00> : vector<32x32xf32>
    %175 = tpu.matmul %174, %131, %cst_145 {dimension_numbers = #tpu.dot_dimension_numbers<[1], [0], [0], [1], [0, 0, 1, 1], [], []>} : vector<32x12xbf16>, vector<12x32xbf16>, vector<32x32xf32> -> vector<32x32xf32>
    %176 = vector.broadcast %134 : vector<1x32xf32> to vector<32x32xf32>
    %177 = arith.addf %176, %175 : vector<32x32xf32>
    %178 = arith.truncf %171 : vector<32x8xf32> to vector<32x8xbf16>
    %cst_146 = arith.constant dense<0.000000e+00> : vector<32x32xf32>
    %179 = tpu.matmul %178, %132, %cst_146 {dimension_numbers = #tpu.dot_dimension_numbers<[1], [0], [0], [1], [0, 0, 1, 1], [], []>} : vector<32x8xbf16>, vector<8x32xbf16>, vector<32x32xf32> -> vector<32x32xf32>
    %180 = arith.addf %177, %179 : vector<32x32xf32>
    %181 = arith.truncf %173 : vector<32x6xf32> to vector<32x6xbf16>
    %cst_147 = arith.constant dense<0.000000e+00> : vector<32x32xf32>
    %182 = tpu.matmul %181, %133, %cst_147 {dimension_numbers = #tpu.dot_dimension_numbers<[1], [0], [0], [1], [0, 0, 1, 1], [], []>} : vector<32x6xbf16>, vector<6x32xbf16>, vector<32x32xf32> -> vector<32x32xf32>
    %183 = arith.addf %180, %182 : vector<32x32xf32>
    %cst_148 = arith.constant 0.000000e+00 : f32
    %184 = vector.broadcast %cst_148 : f32 to vector<32x32xf32>
    %185 = arith.maximumf %183, %184 : vector<32x32xf32>
    %186 = arith.truncf %185 : vector<32x32xf32> to vector<32x32xbf16>
    %cst_149 = arith.constant dense<0.000000e+00> : vector<32x32xf32>
    %187 = tpu.matmul %186, %135, %cst_149 {dimension_numbers = #tpu.dot_dimension_numbers<[1], [0], [0], [1], [0, 0, 1, 1], [], []>} : vector<32x32xbf16>, vector<32x32xbf16>, vector<32x32xf32> -> vector<32x32xf32>
    %188 = vector.broadcast %136 : vector<1x32xf32> to vector<32x32xf32>
    %189 = arith.addf %187, %188 : vector<32x32xf32>
    %cst_150 = arith.constant 0.000000e+00 : f32
    %190 = vector.broadcast %cst_150 : f32 to vector<32x32xf32>
    %191 = arith.maximumf %189, %190 : vector<32x32xf32>
    %192 = arith.truncf %191 : vector<32x32xf32> to vector<32x32xbf16>
    %cst_151 = arith.constant dense<0.000000e+00> : vector<32x8xf32>
    %193 = tpu.matmul %192, %137, %cst_151 {dimension_numbers = #tpu.dot_dimension_numbers<[1], [0], [0], [1], [0, 0, 1, 1], [], []>} : vector<32x32xbf16>, vector<32x8xbf16>, vector<32x8xf32> -> vector<32x8xf32>
    %194 = vector.broadcast %138 : vector<1x8xf32> to vector<32x8xf32>
    %195 = arith.addf %193, %194 : vector<32x8xf32>
    %196 = tpu.concatenate %195, %93 in 1 : vector<32x8xf32>, vector<32x12xf32> -> vector<32x20xf32>
    %197 = arith.truncf %196 : vector<32x20xf32> to vector<32x20xbf16>
    %cst_152 = arith.constant dense<0.000000e+00> : vector<32x5xf32>
    %198 = tpu.matmul %197, %8, %cst_152 {dimension_numbers = #tpu.dot_dimension_numbers<[1], [0], [0], [1], [0, 0, 1, 1], [], []>} : vector<32x20xbf16>, vector<20x5xbf16>, vector<32x5xf32> -> vector<32x5xf32>
    %199 = vector.broadcast %9 : vector<1x5xf32> to vector<32x5xf32>
    %200 = arith.addf %198, %199 : vector<32x5xf32>
    %c0_153 = arith.constant 0 : index
    %c0_154 = arith.constant 0 : index
    %201 = vector.load %arg60[%c0_153, %c0_154] : memref<32x5xf32, #tpu.memory_space<vmem>>, vector<32x5xf32>
    tpu.vector_store %arg60[%c0_153, %c0_154], %200 {strides = array<i32>} : memref<32x5xf32, #tpu.memory_space<vmem>>, vector<32x5xf32>,
    return
  }
}

</mosaic_0001>

<llo_original>
// kernel: tpu_custom_call.1
$region0: #{tpu_custom_call.1}
  #allocation0 [shape = 'u32[]', space=smem, size = 0x4, offset = 0x4, fixed_abs, tag = 'smem constant byte address 0x4 - core index']
  #allocation1 [shape = 'u32[144,128]{1,0:T(1,128)}', space=vmem, size = 0x12000, scoped, tag = 'internal scratch']
  %s0 = inlined_call_operand.smem [shape: u32[61], index: -1, kind: input, shape index: {}]
  %s1 = sld [smem:[%s0]]
  %s2 = scalar_lea.smem %s0, 1
  %s3 = sld [smem:[%s2]]
  %s4 = scalar_lea.smem %s0, 2
  %s5 = sld [smem:[%s4]]
  %s6 = scalar_lea.smem %s0, 3
  %s7 = sld [smem:[%s6]]
  %s8 = scalar_lea.smem %s0, 4
  %s9 = sld [smem:[%s8]]
  %s10 = scalar_lea.smem %s0, 5
  %s11 = sld [smem:[%s10]]
  %s12 = scalar_lea.smem %s0, 6
  %s13 = sld [smem:[%s12]]
  %s14 = scalar_lea.smem %s0, 7
  %s15 = sld [smem:[%s14]]
  %s16 = scalar_lea.smem %s0, 8
  %s17 = sld [smem:[%s16]]
  %s18 = scalar_lea.smem %s0, 9
  %s19 = sld [smem:[%s18]]
  %s20 = scalar_lea.smem %s0, 10
  %s21 = sld [smem:[%s20]]
  %s22 = scalar_lea.smem %s0, 11
  %s23 = sld [smem:[%s22]]
  %s24 = scalar_lea.smem %s0, 12
  %s25 = sld [smem:[%s24]]
  %s26 = scalar_lea.smem %s0, 13
  %s27 = sld [smem:[%s26]]
  %s28 = scalar_lea.smem %s0, 14
  %s29 = sld [smem:[%s28]]
  %s30 = scalar_lea.smem %s0, 15
  %s31 = sld [smem:[%s30]]
  %s32 = scalar_lea.smem %s0, 16
  %s33 = sld [smem:[%s32]]
  %s34 = scalar_lea.smem %s0, 17
  %s35 = sld [smem:[%s34]]
  %s36 = scalar_lea.smem %s0, 18
  %s37 = sld [smem:[%s36]]
  %s38 = scalar_lea.smem %s0, 19
  %s39 = sld [smem:[%s38]]
  %s40 = scalar_lea.smem %s0, 20
  %s41 = sld [smem:[%s40]]
  %s42 = scalar_lea.smem %s0, 21
  %s43 = sld [smem:[%s42]]
  %s44 = scalar_lea.smem %s0, 22
  %s45 = sld [smem:[%s44]]
  %s46 = scalar_lea.smem %s0, 23
  %s47 = sld [smem:[%s46]]
  %s48 = scalar_lea.smem %s0, 24
  %s49 = sld [smem:[%s48]]
  %s50 = scalar_lea.smem %s0, 25
  %s51 = sld [smem:[%s50]]
  %s52 = scalar_lea.smem %s0, 26
  %s53 = sld [smem:[%s52]]
  %s54 = scalar_lea.smem %s0, 27
  %s55 = sld [smem:[%s54]]
  %s56 = scalar_lea.smem %s0, 28
  %s57 = sld [smem:[%s56]]
  %s58 = scalar_lea.smem %s0, 29
  %s59 = sld [smem:[%s58]]
  %s60 = scalar_lea.smem %s0, 30
  %s61 = sld [smem:[%s60]]
  %s62 = scalar_lea.smem %s0, 31
  %s63 = sld [smem:[%s62]]
  %s64 = scalar_lea.smem %s0, 32
  %s65 = sld [smem:[%s64]]
  %s66 = scalar_lea.smem %s0, 33
  %s67 = sld [smem:[%s66]]
  %s68 = scalar_lea.smem %s0, 34
  %s69 = sld [smem:[%s68]]
  %s70 = scalar_lea.smem %s0, 35
  %s71 = sld [smem:[%s70]]
  %s72 = scalar_lea.smem %s0, 36
  %s73 = sld [smem:[%s72]]
  %s74 = scalar_lea.smem %s0, 37
  %s75 = sld [smem:[%s74]]
  %s76 = scalar_lea.smem %s0, 38
  %s77 = sld [smem:[%s76]]
  %s78 = scalar_lea.smem %s0, 39
  %s79 = sld [smem:[%s78]]
  %s80 = scalar_lea.smem %s0, 40
  %s81 = sld [smem:[%s80]]
  %s82 = scalar_lea.smem %s0, 41
  %s83 = sld [smem:[%s82]]
  %s84 = scalar_lea.smem %s0, 42
  %s85 = sld [smem:[%s84]]
  %s86 = scalar_lea.smem %s0, 43
  %s87 = sld [smem:[%s86]]
  %s88 = scalar_lea.smem %s0, 44
  %s89 = sld [smem:[%s88]]
  %s90 = scalar_lea.smem %s0, 45
  %s91 = sld [smem:[%s90]]
  %s92 = scalar_lea.smem %s0, 46
  %s93 = sld [smem:[%s92]]
  %s94 = scalar_lea.smem %s0, 47
  %s95 = sld [smem:[%s94]]
  %s96 = scalar_lea.smem %s0, 48
  %s97 = sld [smem:[%s96]]
  %s98 = scalar_lea.smem %s0, 49
  %s99 = sld [smem:[%s98]]
  %s100 = scalar_lea.smem %s0, 50
  %s101 = sld [smem:[%s100]]
  %s102 = scalar_lea.smem %s0, 51
  %s103 = sld [smem:[%s102]]
  %s104 = scalar_lea.smem %s0, 52
  %s105 = sld [smem:[%s104]]
  %s106 = scalar_lea.smem %s0, 53
  %s107 = sld [smem:[%s106]]
  %s108 = scalar_lea.smem %s0, 54
  %s109 = sld [smem:[%s108]]
  %s110 = scalar_lea.smem %s0, 55
  %s111 = sld [smem:[%s110]]
  %s112 = scalar_lea.smem %s0, 56
  %s113 = sld [smem:[%s112]]
  %s114 = scalar_lea.smem %s0, 57
  %s115 = sld [smem:[%s114]]
  %s116 = scalar_lea.smem %s0, 58
  %s117 = sld [smem:[%s116]]
  %s118 = scalar_lea.smem %s0, 59
  %s119 = sld [smem:[%s118]]
  %s120 = scalar_lea.smem %s0, 60
  %s121 = sld [smem:[%s120]]
  %s122 = sld [smem:[#allocation0]]
  $region306: #{tpu_custom_call.1} parent=0
    _
  %s124 = ssub.s32 1, %s122
  %s125 = scalar_select 0, %s124, %s122
  $region1: #{tpu_custom_call.1} parent=0
    #allocation2 [shape = 'u8[512]{0}', space=vmem, size = 0x400, scoped, tag = 'input window, operand 27, single buffered']
    #allocation3 [shape = 's32[1]{0}', space=sflag, size = 0x4, scoped, tag = 'scoped memory for tpu_custom_call.1']
    #allocation4 [shape = 'u8[512]{0}', space=vmem, size = 0x400, scoped, tag = 'input window, operand 28, single buffered']
    #allocation5 [shape = 's32[1]{0}', space=sflag, size = 0x4, scoped, tag = 'scoped memory for tpu_custom_call.1']
    #allocation6 [shape = 'u8[512]{0}', space=vmem, size = 0x400, scoped, tag = 'input window, operand 30, single buffered']
    #allocation7 [shape = 'u8[512]{0}', space=vmem, size = 0x400, scoped, tag = 'input window, operand 32, single buffered']
    #allocation8 [shape = 's32[1]{0}', space=sflag, size = 0x4, scoped, tag = 'scoped memory for tpu_custom_call.1']
    #allocation9 [shape = 'u8[512]{0}', space=vmem, size = 0x400, scoped, tag = 'input window, operand 37, single buffered']
    #allocation10 [shape = 'u8[512]{0}', space=vmem, size = 0x400, scoped, tag = 'input window, operand 39, single buffered']
    #allocation11 [shape = 's32[1]{0}', space=sflag, size = 0x4, scoped, tag = 'scoped memory for tpu_custom_call.1']
    #allocation12 [shape = 'u8[512]{0}', space=vmem, size = 0x400, scoped, tag = 'input window, operand 41, single buffered']
    #allocation13 [shape = 'u8[512]{0}', space=vmem, size = 0x400, scoped, tag = 'input window, operand 45, single buffered']
    #allocation14 [shape = 's32[1]{0}', space=sflag, size = 0x4, scoped, tag = 'scoped memory for tpu_custom_call.1']
    #allocation15 [shape = 'u8[512]{0}', space=vmem, size = 0x400, scoped, tag = 'input window, operand 47, single buffered']
    #allocation16 [shape = 'u8[512]{0}', space=vmem, size = 0x400, scoped, tag = 'input window, operand 49, single buffered']
    #allocation17 [shape = 's32[1]{0}', space=sflag, size = 0x4, scoped, tag = 'scoped memory for tpu_custom_call.1']
    #allocation18 [shape = 'u8[512]{0}', space=vmem, size = 0x400, scoped, tag = 'input window, operand 53, single buffered']
    #allocation19 [shape = 'u8[512]{0}', space=vmem, size = 0x400, scoped, tag = 'input window, operand 55, single buffered']
    #allocation20 [shape = 's32[1]{0}', space=sflag, size = 0x4, scoped, tag = 'scoped memory for tpu_custom_call.1']
    #allocation21 [shape = 'u8[512]{0}', space=vmem, size = 0x400, scoped, tag = 'input window, operand 57, single buffered']
    #allocation22 [shape = 'u8[512]{0}', space=vmem, size = 0x400, scoped, tag = 'input window, operand 59, single buffered']
    #allocation23 [shape = 's32[1]{0}', space=sflag, size = 0x4, scoped, tag = 'scoped memory for tpu_custom_call.1']
    %126 = vsyncpa [#allocation3], 0
    %127 = vsyncpa [#allocation5], 0
    %128 = vsyncpa [#allocation8], 0
    %129 = vsyncpa [#allocation11], 0
    %130 = vsyncpa [#allocation14], 0
    %131 = vsyncpa [#allocation17], 0
    %132 = vsyncpa [#allocation20], 0
    %133 = vsyncpa [#allocation23], 0
    // Predicated region
    $region2: #{tpu_custom_call.1} parent=1 // pred_check
      _
    $region3: #{tpu_custom_call.1} parent=1 // pred_check_branch
      %135 = sbr.rel (0) target = $region5
    $region4: #{tpu_custom_call.1} parent=1 // pred_region
      _
    $region5: #{tpu_custom_call.1} parent=1 // pred_fallthru
      _
    // Predicated region
    $region6: #{tpu_custom_call.1} parent=1 // pred_check
      _
    $region7: #{tpu_custom_call.1} parent=1 // pred_check_branch
      %137 = sbr.rel (0) target = $region9
    $region8: #{tpu_custom_call.1} parent=1 // pred_region
      _
    $region9: #{tpu_custom_call.1} parent=1 // pred_fallthru
      _
    // Predicated region
    $region10: #{tpu_custom_call.1} parent=1 // pred_check
      _
    $region11: #{tpu_custom_call.1} parent=1 // pred_check_branch
      %139 = sbr.rel (0) target = $region13
    $region12: #{tpu_custom_call.1} parent=1 // pred_region
      _
    $region13: #{tpu_custom_call.1} parent=1 // pred_fallthru
      _
    // Predicated region
    $region14: #{tpu_custom_call.1} parent=1 // pred_check
      _
    $region15: #{tpu_custom_call.1} parent=1 // pred_check_branch
      %141 = sbr.rel (0) target = $region17
    $region16: #{tpu_custom_call.1} parent=1 // pred_region
      _
    $region17: #{tpu_custom_call.1} parent=1 // pred_fallthru
      _
    // Predicated region
    $region18: #{tpu_custom_call.1} parent=1 // pred_check
      _
    $region19: #{tpu_custom_call.1} parent=1 // pred_check_branch
      %143 = sbr.rel (0) target = $region21
    $region20: #{tpu_custom_call.1} parent=1 // pred_region
      _
    $region21: #{tpu_custom_call.1} parent=1 // pred_fallthru
      _
    // Predicated region
    $region22: #{tpu_custom_call.1} parent=1 // pred_check
      _
    $region23: #{tpu_custom_call.1} parent=1 // pred_check_branch
      %145 = sbr.rel (0) target = $region25
    $region24: #{tpu_custom_call.1} parent=1 // pred_region
      _
    $region25: #{tpu_custom_call.1} parent=1 // pred_fallthru
      _
    // Predicated region
    $region26: #{tpu_custom_call.1} parent=1 // pred_check
      _
    $region27: #{tpu_custom_call.1} parent=1 // pred_check_branch
      %147 = sbr.rel (0) target = $region29
    $region28: #{tpu_custom_call.1} parent=1 // pred_region
      _
    $region29: #{tpu_custom_call.1} parent=1 // pred_fallthru
      _
    // Predicated region
    $region30: #{tpu_custom_call.1} parent=1 // pred_check
      _
    $region31: #{tpu_custom_call.1} parent=1 // pred_check_branch
      %149 = sbr.rel (0) target = $region33
    $region32: #{tpu_custom_call.1} parent=1 // pred_region
      _
    $region33: #{tpu_custom_call.1} parent=1 // pred_fallthru
      _
    // Predicated region
    $region34: #{tpu_custom_call.1} parent=1 // pred_check
      _
    $region35: #{tpu_custom_call.1} parent=1 // pred_check_branch
      %151 = sbr.rel (0) target = $region37
    $region36: #{tpu_custom_call.1} parent=1 // pred_region
      _
    $region37: #{tpu_custom_call.1} parent=1 // pred_fallthru
      _
    // Predicated region
    $region38: #{tpu_custom_call.1} parent=1 // pred_check
      _
    $region39: #{tpu_custom_call.1} parent=1 // pred_check_branch
      %153 = sbr.rel (0) target = $region41
    $region40: #{tpu_custom_call.1} parent=1 // pred_region
      _
    $region41: #{tpu_custom_call.1} parent=1 // pred_fallthru
      _
    // Predicated region
    $region42: #{tpu_custom_call.1} parent=1 // pred_check
      _
    $region43: #{tpu_custom_call.1} parent=1 // pred_check_branch
      %155 = sbr.rel (0) target = $region45
    $region44: #{tpu_custom_call.1} parent=1 // pred_region
      _
    $region45: #{tpu_custom_call.1} parent=1 // pred_fallthru
      _
    // Predicated region
    $region46: #{tpu_custom_call.1} parent=1 // pred_check
      _
    $region47: #{tpu_custom_call.1} parent=1 // pred_check_branch
      %157 = sbr.rel (0) target = $region49
    $region48: #{tpu_custom_call.1} parent=1 // pred_region
      _
    $region49: #{tpu_custom_call.1} parent=1 // pred_fallthru
      _
    // Predicated region
    $region50: #{tpu_custom_call.1} parent=1 // pred_check
      _
    $region51: #{tpu_custom_call.1} parent=1 // pred_check_branch
      %159 = sbr.rel (0) target = $region53
    $region52: #{tpu_custom_call.1} parent=1 // pred_region
      _
    $region53: #{tpu_custom_call.1} parent=1 // pred_fallthru
      _
    // Predicated region
    $region54: #{tpu_custom_call.1} parent=1 // pred_check
      _
    $region55: #{tpu_custom_call.1} parent=1 // pred_check_branch
      %161 = sbr.rel (0) target = $region57
    $region56: #{tpu_custom_call.1} parent=1 // pred_region
      _
    $region57: #{tpu_custom_call.1} parent=1 // pred_fallthru
      _
    // Predicated region
    $region58: #{tpu_custom_call.1} parent=1 // pred_check
      _
    $region59: #{tpu_custom_call.1} parent=1 // pred_check_branch
      %163 = sbr.rel (0) target = $region61
    $region60: #{tpu_custom_call.1} parent=1 // pred_region
      _
    $region61: #{tpu_custom_call.1} parent=1 // pred_fallthru
      _
    // Predicated region
    $region62: #{tpu_custom_call.1} parent=1 // pred_check
      _
    $region63: #{tpu_custom_call.1} parent=1 // pred_check_branch
      %165 = sbr.rel (0) target = $region65
    $region64: #{tpu_custom_call.1} parent=1 // pred_region
      _
    $region65: #{tpu_custom_call.1} parent=1 // pred_fallthru
      _
    // Predicated region
    $region66: #{tpu_custom_call.1} parent=1 // pred_check
      _
    $region67: #{tpu_custom_call.1} parent=1 // pred_check_branch
      %167 = sbr.rel (0) target = $region69
    $region68: #{tpu_custom_call.1} parent=1 // pred_region
      _
    $region69: #{tpu_custom_call.1} parent=1 // pred_fallthru
      _
    // Predicated region
    $region70: #{tpu_custom_call.1} parent=1 // pred_check
      _
    $region71: #{tpu_custom_call.1} parent=1 // pred_check_branch
      %169 = sbr.rel (0) target = $region73
    $region72: #{tpu_custom_call.1} parent=1 // pred_region
      _
    $region73: #{tpu_custom_call.1} parent=1 // pred_fallthru
      _
    // Predicated region
    $region74: #{tpu_custom_call.1} parent=1 // pred_check
      _
    $region75: #{tpu_custom_call.1} parent=1 // pred_check_branch
      %171 = sbr.rel (0) target = $region77
    $region76: #{tpu_custom_call.1} parent=1 // pred_region
      _
    $region77: #{tpu_custom_call.1} parent=1 // pred_fallthru
      _
    // Predicated region
    $region78: #{tpu_custom_call.1} parent=1 // pred_check
      _
    $region79: #{tpu_custom_call.1} parent=1 // pred_check_branch
      %173 = sbr.rel (0) target = $region81
    $region80: #{tpu_custom_call.1} parent=1 // pred_region
      _
    $region81: #{tpu_custom_call.1} parent=1 // pred_fallthru
      _
    // Predicated region
    $region82: #{tpu_custom_call.1} parent=1 // pred_check
      _
    $region83: #{tpu_custom_call.1} parent=1 // pred_check_branch
      %175 = sbr.rel (0) target = $region85
    $region84: #{tpu_custom_call.1} parent=1 // pred_region
      _
    $region85: #{tpu_custom_call.1} parent=1 // pred_fallthru
      _
    // Predicated region
    $region86: #{tpu_custom_call.1} parent=1 // pred_check
      _
    $region87: #{tpu_custom_call.1} parent=1 // pred_check_branch
      %177 = sbr.rel (0) target = $region89
    $region88: #{tpu_custom_call.1} parent=1 // pred_region
      _
    $region89: #{tpu_custom_call.1} parent=1 // pred_fallthru
      _
    // Predicated region
    $region90: #{tpu_custom_call.1} parent=1 // pred_check
      _
    $region91: #{tpu_custom_call.1} parent=1 // pred_check_branch
      %179 = sbr.rel (0) target = $region93
    $region92: #{tpu_custom_call.1} parent=1 // pred_region
      _
    $region93: #{tpu_custom_call.1} parent=1 // pred_fallthru
      _
    // Predicated region
    $region94: #{tpu_custom_call.1} parent=1 // pred_check
      _
    $region95: #{tpu_custom_call.1} parent=1 // pred_check_branch
      %181 = sbr.rel (0) target = $region97
    $region96: #{tpu_custom_call.1} parent=1 // pred_region
      _
    $region97: #{tpu_custom_call.1} parent=1 // pred_fallthru
      _
    // Predicated region
    $region98: #{tpu_custom_call.1} parent=1 // pred_check
      _
    $region99: #{tpu_custom_call.1} parent=1 // pred_check_branch
      %183 = sbr.rel (0) target = $region101
    $region100: #{tpu_custom_call.1} parent=1 // pred_region
      _
    $region101: #{tpu_custom_call.1} parent=1 // pred_fallthru
      _
    // Predicated region
    $region102: #{tpu_custom_call.1} parent=1 // pred_check
      _
    $region103: #{tpu_custom_call.1} parent=1 // pred_check_branch
      %185 = sbr.rel (0) target = $region105
    $region104: #{tpu_custom_call.1} parent=1 // pred_region
      _
    $region105: #{tpu_custom_call.1} parent=1 // pred_fallthru
      _
    // Predicated region
    $region106: #{tpu_custom_call.1} parent=1 // pred_check
      _
    $region107: #{tpu_custom_call.1} parent=1 // pred_check_branch
      %187 = sbr.rel (0) target = $region109
    $region108: #{tpu_custom_call.1} parent=1 // pred_region
      _
    $region109: #{tpu_custom_call.1} parent=1 // pred_fallthru
      _
    // Predicated region
    $region110: #{tpu_custom_call.1} parent=1 // pred_check
      _
    $region111: #{tpu_custom_call.1} parent=1 // pred_check_branch
      %189 = sbr.rel (0) target = $region113
    $region112: #{tpu_custom_call.1} parent=1 // pred_region
      %s191 = ssub.s32 16, 16
      %192 = vsyncadd [#allocation3], %s191
      %s194 = sshll.u32 [#allocation2], 4
      %s195 = int_to_ptr.vmem [resolvable:$true] %s194
      %197 = dma.hbm_to_vmem [thread:$0]  %s55, 16, %s195, [#allocation3]
    $region113: #{tpu_custom_call.1} parent=1 // pred_fallthru
      _
    // Predicated region
    $region114: #{tpu_custom_call.1} parent=1 // pred_check
      _
    $region115: #{tpu_custom_call.1} parent=1 // pred_check_branch
      %199 = sbr.rel (0) target = $region117
    $region116: #{tpu_custom_call.1} parent=1 // pred_region
      %s201 = ssub.s32 16, 16
      %202 = vsyncadd [#allocation5], %s201
      %s204 = sshll.u32 [#allocation4], 4
      %s205 = int_to_ptr.vmem [resolvable:$true] %s204
      %207 = dma.hbm_to_vmem [thread:$0]  %s57, 16, %s205, [#allocation5]
    $region117: #{tpu_custom_call.1} parent=1 // pred_fallthru
      _
    // Predicated region
    $region118: #{tpu_custom_call.1} parent=1 // pred_check
      _
    $region119: #{tpu_custom_call.1} parent=1 // pred_check_branch
      %209 = sbr.rel (0) target = $region121
    $region120: #{tpu_custom_call.1} parent=1 // pred_region
      _
    $region121: #{tpu_custom_call.1} parent=1 // pred_fallthru
      _
    // Predicated region
    $region122: #{tpu_custom_call.1} parent=1 // pred_check
      _
    $region123: #{tpu_custom_call.1} parent=1 // pred_check_branch
      %211 = sbr.rel (0) target = $region125
    $region124: #{tpu_custom_call.1} parent=1 // pred_region
      %s213 = ssub.s32 16, 16
      %214 = vsyncadd [#allocation5], %s213
      %s216 = sshll.u32 [#allocation6], 4
      %s217 = int_to_ptr.vmem [resolvable:$true] %s216
      %219 = dma.hbm_to_vmem [thread:$0]  %s61, 16, %s217, [#allocation5]
    $region125: #{tpu_custom_call.1} parent=1 // pred_fallthru
      _
    // Predicated region
    $region126: #{tpu_custom_call.1} parent=1 // pred_check
      _
    $region127: #{tpu_custom_call.1} parent=1 // pred_check_branch
      %221 = sbr.rel (0) target = $region129
    $region128: #{tpu_custom_call.1} parent=1 // pred_region
      _
    $region129: #{tpu_custom_call.1} parent=1 // pred_fallthru
      _
    // Predicated region
    $region130: #{tpu_custom_call.1} parent=1 // pred_check
      _
    $region131: #{tpu_custom_call.1} parent=1 // pred_check_branch
      %223 = sbr.rel (0) target = $region133
    $region132: #{tpu_custom_call.1} parent=1 // pred_region
      %s225 = ssub.s32 16, 16
      %226 = vsyncadd [#allocation8], %s225
      %s228 = sshll.u32 [#allocation7], 4
      %s229 = int_to_ptr.vmem [resolvable:$true] %s228
      %231 = dma.hbm_to_vmem [thread:$0]  %s65, 16, %s229, [#allocation8]
    $region133: #{tpu_custom_call.1} parent=1 // pred_fallthru
      _
    // Predicated region
    $region134: #{tpu_custom_call.1} parent=1 // pred_check
      _
    $region135: #{tpu_custom_call.1} parent=1 // pred_check_branch
      %233 = sbr.rel (0) target = $region137
    $region136: #{tpu_custom_call.1} parent=1 // pred_region
      _
    $region137: #{tpu_custom_call.1} parent=1 // pred_fallthru
      _
    // Predicated region
    $region138: #{tpu_custom_call.1} parent=1 // pred_check
      _
    $region139: #{tpu_custom_call.1} parent=1 // pred_check_branch
      %235 = sbr.rel (0) target = $region141
    $region140: #{tpu_custom_call.1} parent=1 // pred_region
      _
    $region141: #{tpu_custom_call.1} parent=1 // pred_fallthru
      _
    // Predicated region
    $region142: #{tpu_custom_call.1} parent=1 // pred_check
      _
    $region143: #{tpu_custom_call.1} parent=1 // pred_check_branch
      %237 = sbr.rel (0) target = $region145
    $region144: #{tpu_custom_call.1} parent=1 // pred_region
      _
    $region145: #{tpu_custom_call.1} parent=1 // pred_fallthru
      _
    // Predicated region
    $region146: #{tpu_custom_call.1} parent=1 // pred_check
      _
    $region147: #{tpu_custom_call.1} parent=1 // pred_check_branch
      %239 = sbr.rel (0) target = $region149
    $region148: #{tpu_custom_call.1} parent=1 // pred_region
      _
    $region149: #{tpu_custom_call.1} parent=1 // pred_fallthru
      _
    // Predicated region
    $region150: #{tpu_custom_call.1} parent=1 // pred_check
      _
    $region151: #{tpu_custom_call.1} parent=1 // pred_check_branch
      %241 = sbr.rel (0) target = $region153
    $region152: #{tpu_custom_call.1} parent=1 // pred_region
      %s243 = ssub.s32 16, 16
      %244 = vsyncadd [#allocation8], %s243
      %s246 = sshll.u32 [#allocation9], 4
      %s247 = int_to_ptr.vmem [resolvable:$true] %s246
      %249 = dma.hbm_to_vmem [thread:$0]  %s75, 16, %s247, [#allocation8]
    $region153: #{tpu_custom_call.1} parent=1 // pred_fallthru
      _
    // Predicated region
    $region154: #{tpu_custom_call.1} parent=1 // pred_check
      _
    $region155: #{tpu_custom_call.1} parent=1 // pred_check_branch
      %251 = sbr.rel (0) target = $region157
    $region156: #{tpu_custom_call.1} parent=1 // pred_region
      _
    $region157: #{tpu_custom_call.1} parent=1 // pred_fallthru
      _
    // Predicated region
    $region158: #{tpu_custom_call.1} parent=1 // pred_check
      _
    $region159: #{tpu_custom_call.1} parent=1 // pred_check_branch
      %253 = sbr.rel (0) target = $region161
    $region160: #{tpu_custom_call.1} parent=1 // pred_region
      %s255 = ssub.s32 16, 16
      %256 = vsyncadd [#allocation11], %s255
      %s258 = sshll.u32 [#allocation10], 4
      %s259 = int_to_ptr.vmem [resolvable:$true] %s258
      %261 = dma.hbm_to_vmem [thread:$0]  %s79, 16, %s259, [#allocation11]
    $region161: #{tpu_custom_call.1} parent=1 // pred_fallthru
      _
    // Predicated region
    $region162: #{tpu_custom_call.1} parent=1 // pred_check
      _
    $region163: #{tpu_custom_call.1} parent=1 // pred_check_branch
      %263 = sbr.rel (0) target = $region165
    $region164: #{tpu_custom_call.1} parent=1 // pred_region
      _
    $region165: #{tpu_custom_call.1} parent=1 // pred_fallthru
      _
    // Predicated region
    $region166: #{tpu_custom_call.1} parent=1 // pred_check
      _
    $region167: #{tpu_custom_call.1} parent=1 // pred_check_branch
      %265 = sbr.rel (0) target = $region169
    $region168: #{tpu_custom_call.1} parent=1 // pred_region
      %s267 = ssub.s32 16, 16
      %268 = vsyncadd [#allocation11], %s267
      %s270 = sshll.u32 [#allocation12], 4
      %s271 = int_to_ptr.vmem [resolvable:$true] %s270
      %273 = dma.hbm_to_vmem [thread:$0]  %s83, 16, %s271, [#allocation11]
    $region169: #{tpu_custom_call.1} parent=1 // pred_fallthru
      _
    // Predicated region
    $region170: #{tpu_custom_call.1} parent=1 // pred_check
      _
    $region171: #{tpu_custom_call.1} parent=1 // pred_check_branch
      %275 = sbr.rel (0) target = $region173
    $region172: #{tpu_custom_call.1} parent=1 // pred_region
      _
    $region173: #{tpu_custom_call.1} parent=1 // pred_fallthru
      _
    // Predicated region
    $region174: #{tpu_custom_call.1} parent=1 // pred_check
      _
    $region175: #{tpu_custom_call.1} parent=1 // pred_check_branch
      %277 = sbr.rel (0) target = $region177
    $region176: #{tpu_custom_call.1} parent=1 // pred_region
      _
    $region177: #{tpu_custom_call.1} parent=1 // pred_fallthru
      _
    // Predicated region
    $region178: #{tpu_custom_call.1} parent=1 // pred_check
      _
    $region179: #{tpu_custom_call.1} parent=1 // pred_check_branch
      %279 = sbr.rel (0) target = $region181
    $region180: #{tpu_custom_call.1} parent=1 // pred_region
      _
    $region181: #{tpu_custom_call.1} parent=1 // pred_fallthru
      _
    // Predicated region
    $region182: #{tpu_custom_call.1} parent=1 // pred_check
      _
    $region183: #{tpu_custom_call.1} parent=1 // pred_check_branch
      %281 = sbr.rel (0) target = $region185
    $region184: #{tpu_custom_call.1} parent=1 // pred_region
      %s283 = ssub.s32 16, 16
      %284 = vsyncadd [#allocation14], %s283
      %s286 = sshll.u32 [#allocation13], 4
      %s287 = int_to_ptr.vmem [resolvable:$true] %s286
      %289 = dma.hbm_to_vmem [thread:$0]  %s91, 16, %s287, [#allocation14]
    $region185: #{tpu_custom_call.1} parent=1 // pred_fallthru
      _
    // Predicated region
    $region186: #{tpu_custom_call.1} parent=1 // pred_check
      _
    $region187: #{tpu_custom_call.1} parent=1 // pred_check_branch
      %291 = sbr.rel (0) target = $region189
    $region188: #{tpu_custom_call.1} parent=1 // pred_region
      _
    $region189: #{tpu_custom_call.1} parent=1 // pred_fallthru
      _
    // Predicated region
    $region190: #{tpu_custom_call.1} parent=1 // pred_check
      _
    $region191: #{tpu_custom_call.1} parent=1 // pred_check_branch
      %293 = sbr.rel (0) target = $region193
    $region192: #{tpu_custom_call.1} parent=1 // pred_region
      %s295 = ssub.s32 16, 16
      %296 = vsyncadd [#allocation14], %s295
      %s298 = sshll.u32 [#allocation15], 4
      %s299 = int_to_ptr.vmem [resolvable:$true] %s298
      %301 = dma.hbm_to_vmem [thread:$0]  %s95, 16, %s299, [#allocation14]
    $region193: #{tpu_custom_call.1} parent=1 // pred_fallthru
      _
    // Predicated region
    $region194: #{tpu_custom_call.1} parent=1 // pred_check
      _
    $region195: #{tpu_custom_call.1} parent=1 // pred_check_branch
      %303 = sbr.rel (0) target = $region197
    $region196: #{tpu_custom_call.1} parent=1 // pred_region
      _
    $region197: #{tpu_custom_call.1} parent=1 // pred_fallthru
      _
    // Predicated region
    $region198: #{tpu_custom_call.1} parent=1 // pred_check
      _
    $region199: #{tpu_custom_call.1} parent=1 // pred_check_branch
      %305 = sbr.rel (0) target = $region201
    $region200: #{tpu_custom_call.1} parent=1 // pred_region
      %s307 = ssub.s32 16, 16
      %308 = vsyncadd [#allocation17], %s307
      %s310 = sshll.u32 [#allocation16], 4
      %s311 = int_to_ptr.vmem [resolvable:$true] %s310
      %313 = dma.hbm_to_vmem [thread:$0]  %s99, 16, %s311, [#allocation17]
    $region201: #{tpu_custom_call.1} parent=1 // pred_fallthru
      _
    // Predicated region
    $region202: #{tpu_custom_call.1} parent=1 // pred_check
      _
    $region203: #{tpu_custom_call.1} parent=1 // pred_check_branch
      %315 = sbr.rel (0) target = $region205
    $region204: #{tpu_custom_call.1} parent=1 // pred_region
      _
    $region205: #{tpu_custom_call.1} parent=1 // pred_fallthru
      _
    // Predicated region
    $region206: #{tpu_custom_call.1} parent=1 // pred_check
      _
    $region207: #{tpu_custom_call.1} parent=1 // pred_check_branch
      %317 = sbr.rel (0) target = $region209
    $region208: #{tpu_custom_call.1} parent=1 // pred_region
      _
    $region209: #{tpu_custom_call.1} parent=1 // pred_fallthru
      _
    // Predicated region
    $region210: #{tpu_custom_call.1} parent=1 // pred_check
      _
    $region211: #{tpu_custom_call.1} parent=1 // pred_check_branch
      %319 = sbr.rel (0) target = $region213
    $region212: #{tpu_custom_call.1} parent=1 // pred_region
      _
    $region213: #{tpu_custom_call.1} parent=1 // pred_fallthru
      _
    // Predicated region
    $region214: #{tpu_custom_call.1} parent=1 // pred_check
      _
    $region215: #{tpu_custom_call.1} parent=1 // pred_check_branch
      %321 = sbr.rel (0) target = $region217
    $region216: #{tpu_custom_call.1} parent=1 // pred_region
      %s323 = ssub.s32 16, 16
      %324 = vsyncadd [#allocation17], %s323
      %s326 = sshll.u32 [#allocation18], 4
      %s327 = int_to_ptr.vmem [resolvable:$true] %s326
      %329 = dma.hbm_to_vmem [thread:$0]  %s107, 16, %s327, [#allocation17]
    $region217: #{tpu_custom_call.1} parent=1 // pred_fallthru
      _
    // Predicated region
    $region218: #{tpu_custom_call.1} parent=1 // pred_check
      _
    $region219: #{tpu_custom_call.1} parent=1 // pred_check_branch
      %331 = sbr.rel (0) target = $region221
    $region220: #{tpu_custom_call.1} parent=1 // pred_region
      _
    $region221: #{tpu_custom_call.1} parent=1 // pred_fallthru
      _
    // Predicated region
    $region222: #{tpu_custom_call.1} parent=1 // pred_check
      _
    $region223: #{tpu_custom_call.1} parent=1 // pred_check_branch
      %333 = sbr.rel (0) target = $region225
    $region224: #{tpu_custom_call.1} parent=1 // pred_region
      %s335 = ssub.s32 16, 16
      %336 = vsyncadd [#allocation20], %s335
      %s338 = sshll.u32 [#allocation19], 4
      %s339 = int_to_ptr.vmem [resolvable:$true] %s338
      %341 = dma.hbm_to_vmem [thread:$0]  %s111, 16, %s339, [#allocation20]
    $region225: #{tpu_custom_call.1} parent=1 // pred_fallthru
      _
    // Predicated region
    $region226: #{tpu_custom_call.1} parent=1 // pred_check
      _
    $region227: #{tpu_custom_call.1} parent=1 // pred_check_branch
      %343 = sbr.rel (0) target = $region229
    $region228: #{tpu_custom_call.1} parent=1 // pred_region
      _
    $region229: #{tpu_custom_call.1} parent=1 // pred_fallthru
      _
    // Predicated region
    $region230: #{tpu_custom_call.1} parent=1 // pred_check
      _
    $region231: #{tpu_custom_call.1} parent=1 // pred_check_branch
      %345 = sbr.rel (0) target = $region233
    $region232: #{tpu_custom_call.1} parent=1 // pred_region
      %s347 = ssub.s32 16, 16
      %348 = vsyncadd [#allocation20], %s347
      %s350 = sshll.u32 [#allocation21], 4
      %s351 = int_to_ptr.vmem [resolvable:$true] %s350
      %353 = dma.hbm_to_vmem [thread:$0]  %s115, 16, %s351, [#allocation20]
    $region233: #{tpu_custom_call.1} parent=1 // pred_fallthru
      _
    // Predicated region
    $region234: #{tpu_custom_call.1} parent=1 // pred_check
      _
    $region235: #{tpu_custom_call.1} parent=1 // pred_check_branch
      %355 = sbr.rel (0) target = $region237
    $region236: #{tpu_custom_call.1} parent=1 // pred_region
      _
    $region237: #{tpu_custom_call.1} parent=1 // pred_fallthru
      _
    // Predicated region
    $region238: #{tpu_custom_call.1} parent=1 // pred_check
      _
    $region239: #{tpu_custom_call.1} parent=1 // pred_check_branch
      %357 = sbr.rel (0) target = $region241
    $region240: #{tpu_custom_call.1} parent=1 // pred_region
      %s359 = ssub.s32 16, 16
      %360 = vsyncadd [#allocation23], %s359
      %s362 = sshll.u32 [#allocation22], 4
      %s363 = int_to_ptr.vmem [resolvable:$true] %s362
      %365 = dma.hbm_to_vmem [thread:$0]  %s119, 16, %s363, [#allocation23]
    $region241: #{tpu_custom_call.1} parent=1 // pred_fallthru
      _
    // Predicated region
    $region242: #{tpu_custom_call.1} parent=1 // pred_check
      _
    $region243: #{tpu_custom_call.1} parent=1 // pred_check_branch
      %367 = sbr.rel (0) target = $region245
    $region244: #{tpu_custom_call.1} parent=1 // pred_region
      %368 = dma.done [#allocation3], 16
    $region245: #{tpu_custom_call.1} parent=1 // pred_fallthru
      _
    // Predicated region
    $region246: #{tpu_custom_call.1} parent=1 // pred_check
      _
    $region247: #{tpu_custom_call.1} parent=1 // pred_check_branch
      %370 = sbr.rel (0) target = $region249
    $region248: #{tpu_custom_call.1} parent=1 // pred_region
      %371 = dma.done [#allocation5], 16
    $region249: #{tpu_custom_call.1} parent=1 // pred_fallthru
      _
    // Predicated region
    $region250: #{tpu_custom_call.1} parent=1 // pred_check
      _
    $region251: #{tpu_custom_call.1} parent=1 // pred_check_branch
      %373 = sbr.rel (0) target = $region253
    $region252: #{tpu_custom_call.1} parent=1 // pred_region
      %374 = dma.done [#allocation5], 16
    $region253: #{tpu_custom_call.1} parent=1 // pred_fallthru
      _
    // Predicated region
    $region254: #{tpu_custom_call.1} parent=1 // pred_check
      _
    $region255: #{tpu_custom_call.1} parent=1 // pred_check_branch
      %376 = sbr.rel (0) target = $region257
    $region256: #{tpu_custom_call.1} parent=1 // pred_region
      %377 = dma.done [#allocation8], 16
    $region257: #{tpu_custom_call.1} parent=1 // pred_fallthru
      _
    // Predicated region
    $region258: #{tpu_custom_call.1} parent=1 // pred_check
      _
    $region259: #{tpu_custom_call.1} parent=1 // pred_check_branch
      %379 = sbr.rel (0) target = $region261
    $region260: #{tpu_custom_call.1} parent=1 // pred_region
      %380 = dma.done [#allocation8], 16
    $region261: #{tpu_custom_call.1} parent=1 // pred_fallthru
      _
    // Predicated region
    $region262: #{tpu_custom_call.1} parent=1 // pred_check
      _
    $region263: #{tpu_custom_call.1} parent=1 // pred_check_branch
      %382 = sbr.rel (0) target = $region265
    $region264: #{tpu_custom_call.1} parent=1 // pred_region
      %383 = dma.done [#allocation11], 16
    $region265: #{tpu_custom_call.1} parent=1 // pred_fallthru
      _
    // Predicated region
    $region266: #{tpu_custom_call.1} parent=1 // pred_check
      _
    $region267: #{tpu_custom_call.1} parent=1 // pred_check_branch
      %385 = sbr.rel (0) target = $region269
    $region268: #{tpu_custom_call.1} parent=1 // pred_region
      %386 = dma.done [#allocation11], 16
    $region269: #{tpu_custom_call.1} parent=1 // pred_fallthru
      _
    // Predicated region
    $region270: #{tpu_custom_call.1} parent=1 // pred_check
      _
    $region271: #{tpu_custom_call.1} parent=1 // pred_check_branch
      %388 = sbr.rel (0) target = $region273
    $region272: #{tpu_custom_call.1} parent=1 // pred_region
      %389 = dma.done [#allocation14], 16
    $region273: #{tpu_custom_call.1} parent=1 // pred_fallthru
      _
    // Predicated region
    $region274: #{tpu_custom_call.1} parent=1 // pred_check
      _
    $region275: #{tpu_custom_call.1} parent=1 // pred_check_branch
      %391 = sbr.rel (0) target = $region277
    $region276: #{tpu_custom_call.1} parent=1 // pred_region
      %392 = dma.done [#allocation14], 16
    $region277: #{tpu_custom_call.1} parent=1 // pred_fallthru
      _
    // Predicated region
    $region278: #{tpu_custom_call.1} parent=1 // pred_check
      _
    $region279: #{tpu_custom_call.1} parent=1 // pred_check_branch
      %394 = sbr.rel (0) target = $region281
    $region280: #{tpu_custom_call.1} parent=1 // pred_region
      %395 = dma.done [#allocation17], 16
    $region281: #{tpu_custom_call.1} parent=1 // pred_fallthru
      _
    // Predicated region
    $region282: #{tpu_custom_call.1} parent=1 // pred_check
      _
    $region283: #{tpu_custom_call.1} parent=1 // pred_check_branch
      %397 = sbr.rel (0) target = $region285
    $region284: #{tpu_custom_call.1} parent=1 // pred_region
      %398 = dma.done [#allocation17], 16
    $region285: #{tpu_custom_call.1} parent=1 // pred_fallthru
      _
    // Predicated region
    $region286: #{tpu_custom_call.1} parent=1 // pred_check
      _
    $region287: #{tpu_custom_call.1} parent=1 // pred_check_branch
      %400 = sbr.rel (0) target = $region289
    $region288: #{tpu_custom_call.1} parent=1 // pred_region
      %401 = dma.done [#allocation20], 16
    $region289: #{tpu_custom_call.1} parent=1 // pred_fallthru
      _
    // Predicated region
    $region290: #{tpu_custom_call.1} parent=1 // pred_check
      _
    $region291: #{tpu_custom_call.1} parent=1 // pred_check_branch
      %403 = sbr.rel (0) target = $region293
    $region292: #{tpu_custom_call.1} parent=1 // pred_region
      %404 = dma.done [#allocation20], 16
    $region293: #{tpu_custom_call.1} parent=1 // pred_fallthru
      _
    // Predicated region
    $region294: #{tpu_custom_call.1} parent=1 // pred_check
      _
    $region295: #{tpu_custom_call.1} parent=1 // pred_check_branch
      %406 = sbr.rel (0) target = $region297
    $region296: #{tpu_custom_call.1} parent=1 // pred_region
      %407 = dma.done [#allocation23], 16
    $region297: #{tpu_custom_call.1} parent=1 // pred_fallthru
      _
    %v409 = vld [vmem:[%s1] sm:$0xff]
    %v410 = vld [vmem:[%s1 + $0x8] sm:$0xff]
    %v411 = vld [vmem:[%s1 + $0x10] sm:$0xff]
    %v412 = vld [vmem:[%s1 + $0x18] sm:$0xff]
    %v413 = vld [vmem:[%s3] sm:$0xff]
    %v414 = vld [vmem:[%s3 + $0x8] sm:$0xff]
    %v415 = vld [vmem:[%s3 + $0x10] sm:$0xff]
    %v416 = vld [vmem:[%s3 + $0x18] sm:$0xff]
    %v417 = vld [vmem:[%s3 + $0x20] sm:$0xff]
    %v418 = vld [vmem:[%s3 + $0x28] sm:$0xff]
    %v419 = vld [vmem:[%s3 + $0x30] sm:$0xff]
    %v420 = vld [vmem:[%s3 + $0x38] sm:$0xff]
    %v421 = vld [vmem:[%s5] sm:$0xf]
    %v422 = vld [vmem:[%s5 + $0x4] sm:$0xf]
    %v423 = vld [vmem:[%s5 + $0x8] sm:$0xf]
    %v424 = vld [vmem:[%s5 + $0xc] sm:$0xf]
    %v425 = vld [vmem:[%s5 + $0x10] sm:$0xf]
    %v426 = vld [vmem:[%s5 + $0x14] sm:$0xf]
    %v427 = vld [vmem:[%s5 + $0x18] sm:$0xf]
    %v428 = vld [vmem:[%s5 + $0x1c] sm:$0xf]
    %v429 = vld [vmem:[%s7] sm:$0xf]
    %v430 = vld [vmem:[%s7 + $0x4] sm:$0xf]
    %v431 = vld [vmem:[%s7 + $0x8] sm:$0xf]
    %v432 = vld [vmem:[%s7 + $0xc] sm:$0xf]
    %v433 = vld [vmem:[%s7 + $0x10] sm:$0xf]
    %v434 = vld [vmem:[%s7 + $0x14] sm:$0xf]
    %v435 = vld [vmem:[%s7 + $0x18] sm:$0xf]
    %v436 = vld [vmem:[%s7 + $0x1c] sm:$0xf]
    %v437 = vld [vmem:[%s9] sm:$0xf]
    %v438 = vld [vmem:[%s9 + $0x4] sm:$0xf]
    %v439 = vld [vmem:[%s9 + $0x8] sm:$0xf]
    %v440 = vld [vmem:[%s9 + $0xc] sm:$0xf]
    %v441 = vld [vmem:[%s9 + $0x10] sm:$0xf]
    %v442 = vld [vmem:[%s9 + $0x14] sm:$0xf]
    %v443 = vld [vmem:[%s9 + $0x18] sm:$0xf]
    %v444 = vld [vmem:[%s9 + $0x1c] sm:$0xf]
    %v445 = vld [vmem:[%s11] sm:$0xf]
    %v446 = vld [vmem:[%s11 + $0x4] sm:$0xf]
    %v447 = vld [vmem:[%s11 + $0x8] sm:$0xf]
    %v448 = vld [vmem:[%s11 + $0xc] sm:$0xf]
    %v449 = vld [vmem:[%s13] sm:$0xf]
    %v450 = vld [vmem:[%s13 + $0x4] sm:$0xf]
    %v451 = vld [vmem:[%s13 + $0x8] sm:$0xf]
    %v452 = vld [vmem:[%s13 + $0xc] sm:$0xf]
    %v453 = vld [vmem:[%s15] sm:$0xf]
    %v454 = vld [vmem:[%s117] sm:$0xf]
    %v455 = vld [vmem:[%s117 + $0x4] sm:$0xf]
    %v456 = vld [vmem:[%s117 + $0x8] sm:$0x3]
    %v457 = vld [vmem:[#allocation22] sm:$0x1]
    %v458 = vld [vmem:[%s17] sm:$0x3]
    %v459 = vld [vmem:[%s19] sm:$0x3]
    %v460 = vld [vmem:[%s21] sm:$0x3]
    %v461 = vld [vmem:[%s23] sm:$0x1]
    %v462 = vld [vmem:[%s25] sm:$0x1]
    %v463 = vld [vmem:[%s27] sm:$0xf]
    %v464 = vld [vmem:[%s27 + $0x4] sm:$0xf]
    %v465 = vld [vmem:[%s27 + $0x8] sm:$0xf]
    %v466 = vld [vmem:[%s27 + $0xc] sm:$0xf]
    %v467 = vld [vmem:[%s29] sm:$0x1]
    %v468 = vld [vmem:[%s31] sm:$0xf]
    %v469 = vld [vmem:[%s31 + $0x4] sm:$0xf]
    %v470 = vld [vmem:[%s31 + $0x8] sm:$0xf]
    %v471 = vld [vmem:[%s31 + $0xc] sm:$0xf]
    %v472 = vld [vmem:[%s33] sm:$0x1]
    %v473 = vld [vmem:[%s35] sm:$0x3]
    %v474 = vld [vmem:[%s37] sm:$0xf]
    %v475 = vld [vmem:[%s39] sm:$0x1]
    %v476 = vld [vmem:[%s41] sm:$0x1]
    %v477 = vld [vmem:[%s43] sm:$0xf]
    %v478 = vld [vmem:[%s43 + $0x4] sm:$0xf]
    %v479 = vld [vmem:[%s43 + $0x8] sm:$0xf]
    %v480 = vld [vmem:[%s43 + $0xc] sm:$0xf]
    %v481 = vld [vmem:[%s45] sm:$0x1]
    %v482 = vld [vmem:[%s47] sm:$0xf]
    %v483 = vld [vmem:[%s47 + $0x4] sm:$0xf]
    %v484 = vld [vmem:[%s47 + $0x8] sm:$0xf]
    %v485 = vld [vmem:[%s47 + $0xc] sm:$0xf]
    %v486 = vld [vmem:[%s49] sm:$0x1]
    %v487 = vld [vmem:[%s51] sm:$0xf]
    %v488 = vld [vmem:[%s53] sm:$0xf]
    %v489 = vld [vmem:[#allocation2] sm:$0x1]
    %v490 = vld [vmem:[#allocation4] sm:$0x1]
    %v491 = vld [vmem:[%s59] sm:$0xf]
    %v492 = vld [vmem:[%s59 + $0x4] sm:$0xf]
    %v493 = vld [vmem:[%s59 + $0x8] sm:$0xf]
    %v494 = vld [vmem:[%s59 + $0xc] sm:$0xf]
    %v495 = vld [vmem:[#allocation6] sm:$0x1]
    %v496 = vld [vmem:[%s63] sm:$0xf]
    %v497 = vld [vmem:[%s63 + $0x4] sm:$0xf]
    %v498 = vld [vmem:[%s63 + $0x8] sm:$0xf]
    %v499 = vld [vmem:[%s63 + $0xc] sm:$0xf]
    %v500 = vld [vmem:[#allocation7] sm:$0x1]
    %v501 = vpack.c.bf16 %v410, %v409
    %v502 = vpack.c.bf16 %v412, %v411
    %v511 = vunpack.c.l.b16 %v421
    %v512 = vunpack.c.l.b16 %v422
    %v513 = vunpack.c.l.b16 %v423
    %v514 = vunpack.c.l.b16 %v424
    %v515 = vunpack.c.l.b16 %v425
    %v516 = vunpack.c.l.b16 %v426
    %v517 = vunpack.c.l.b16 %v427
    %v518 = vunpack.c.l.b16 %v428
    %v519 = vpack.c.b16 %v512, %v511
    %v520 = vpack.c.b16 %v514, %v513
    %v521 = vpack.c.b16 %v516, %v515
    %v522 = vpack.c.b16 %v518, %v517
    %vm523 = vcmask 261120
    %v525 = vsel %vm523, %v519, 0
    %v528 = vsel %vm523, %v520, 0
    %v531 = vsel %vm523, %v521, 0
    %v534 = vsel %vm523, %v522, 0
    %536 = vmatprep.subr.bf16.mxu0 0
    %537 = vmatpush1.bf16.msra.mxu0 %v501
    %538 = vmatprep.subr.bf16.mxu0 0
    %539 = vmatpush1.bf16.msra.mxu0 %v502
    %540 = vmatprep.subr.bf16.mxu0 0
    %541 = vmatpush1.bf16.msra.mxu0 0
    %542 = vmatprep.subr.bf16.mxu0 0
    %543 = vmatpush1.bf16.msra.mxu0 0
    %544 = vmatprep.subr.bf16.mxu0 0
    %545 = vmatpush1.bf16.msra.mxu0 0
    %546 = vmatprep.subr.bf16.mxu0 0
    %547 = vmatpush1.bf16.msra.mxu0 0
    %548 = vmatprep.subr.bf16.mxu0 0
    %549 = vmatpush1.bf16.msra.mxu0 0
    %550 = vmatprep.subr.bf16.mxu0 0
    %551 = vmatpush1.bf16.msra.mxu0 0
    %552 = vmatprep.subr.bf16.mxu0 0
    %553 = vmatpush1.bf16.msra.mxu0 0
    %554 = vmatprep.subr.bf16.mxu0 0
    %555 = vmatpush1.bf16.msra.mxu0 0
    %556 = vmatprep.subr.bf16.mxu0 0
    %557 = vmatpush1.bf16.msra.mxu0 0
    %558 = vmatprep.subr.bf16.mxu0 0
    %559 = vmatpush1.bf16.msra.mxu0 0
    %560 = vmatprep.subr.bf16.mxu0 0
    %561 = vmatpush1.bf16.msra.mxu0 0
    %562 = vmatprep.subr.bf16.mxu0 0
    %563 = vmatpush1.bf16.msra.mxu0 0
    %564 = vmatprep.subr.bf16.mxu0 0
    %565 = vmatpush1.bf16.msra.mxu0 0
    %566 = vmatprep.subr.bf16.mxu0 0
    %567 = vmatpush1.bf16.msra.mxu0 0
    %568 = vmatprep.mubr.bf16.mxu0 0
    %569 = vmatmul.mubr.bf16.gmra.mrb[0].mxu0 %v525
    %v570 = vpop.f32.mrb[0].mxu0
    %v571 = vadd.f32 0.0, %v570
    %v572 = vpop.f32.mrb[0].mxu0
    %v573 = vpop.f32.mrb[0].mxu0
    %v574 = vadd.f32 0.0, %v573
    %v575 = vpop.f32.mrb[0].mxu0
    %576 = vmatprep.mubr.bf16.mxu0 0
    %577 = vmatmul.mubr.bf16.gmra.mrb[0].mxu0 %v528
    %v578 = vpop.f32.mrb[0].mxu0
    %v579 = vadd.f32 0.0, %v578
    %v580 = vpop.f32.mrb[0].mxu0
    %v581 = vpop.f32.mrb[0].mxu0
    %v582 = vadd.f32 0.0, %v581
    %v583 = vpop.f32.mrb[0].mxu0
    %584 = vmatprep.mubr.bf16.mxu0 0
    %585 = vmatmul.mubr.bf16.gmra.mrb[0].mxu0 %v531
    %v586 = vpop.f32.mrb[0].mxu0
    %v587 = vadd.f32 0.0, %v586
    %v588 = vpop.f32.mrb[0].mxu0
    %v589 = vpop.f32.mrb[0].mxu0
    %v590 = vadd.f32 0.0, %v589
    %v591 = vpop.f32.mrb[0].mxu0
    %592 = vmatprep.mubr.bf16.mxu0 0
    %593 = vmatmul.mubr.bf16.gmra.mrb[0].mxu0 %v534
    %v594 = vpop.f32.mrb[0].mxu0
    %v595 = vadd.f32 0.0, %v594
    %v596 = vpop.f32.mrb[0].mxu0
    %v597 = vpop.f32.mrb[0].mxu0
    %v598 = vadd.f32 0.0, %v597
    %v599 = vpop.f32.mrb[0].mxu0
    %600 = vdwg.mxu0
    %v609 = vunpack.c.l.b16 %v429
    %v610 = vunpack.c.l.b16 %v430
    %v611 = vunpack.c.l.b16 %v431
    %v612 = vunpack.c.l.b16 %v432
    %v613 = vunpack.c.l.b16 %v433
    %v614 = vunpack.c.l.b16 %v434
    %v615 = vunpack.c.l.b16 %v435
    %v616 = vunpack.c.l.b16 %v436
    %v617 = vpack.c.b16 %v610, %v609
    %v618 = vpack.c.b16 %v612, %v611
    %v619 = vpack.c.b16 %v614, %v613
    %v620 = vpack.c.b16 %v616, %v615
    %v622 = vsel %vm523, %v617, 0
    %v625 = vsel %vm523, %v618, 0
    %v628 = vsel %vm523, %v619, 0
    %v631 = vsel %vm523, %v620, 0
    %633 = vmatprep.subr.bf16.mxu0 0
    %634 = vmatpush1.bf16.msra.mxu0 %v501
    %635 = vmatprep.subr.bf16.mxu0 0
    %636 = vmatpush1.bf16.msra.mxu0 %v502
    %637 = vmatprep.subr.bf16.mxu0 0
    %638 = vmatpush1.bf16.msra.mxu0 0
    %639 = vmatprep.subr.bf16.mxu0 0
    %640 = vmatpush1.bf16.msra.mxu0 0
    %641 = vmatprep.subr.bf16.mxu0 0
    %642 = vmatpush1.bf16.msra.mxu0 0
    %643 = vmatprep.subr.bf16.mxu0 0
    %644 = vmatpush1.bf16.msra.mxu0 0
    %645 = vmatprep.subr.bf16.mxu0 0
    %646 = vmatpush1.bf16.msra.mxu0 0
    %647 = vmatprep.subr.bf16.mxu0 0
    %648 = vmatpush1.bf16.msra.mxu0 0
    %649 = vmatprep.subr.bf16.mxu0 0
    %650 = vmatpush1.bf16.msra.mxu0 0
    %651 = vmatprep.subr.bf16.mxu0 0
    %652 = vmatpush1.bf16.msra.mxu0 0
    %653 = vmatprep.subr.bf16.mxu0 0
    %654 = vmatpush1.bf16.msra.mxu0 0
    %655 = vmatprep.subr.bf16.mxu0 0
    %656 = vmatpush1.bf16.msra.mxu0 0
    %657 = vmatprep.subr.bf16.mxu0 0
    %658 = vmatpush1.bf16.msra.mxu0 0
    %659 = vmatprep.subr.bf16.mxu0 0
    %660 = vmatpush1.bf16.msra.mxu0 0
    %661 = vmatprep.subr.bf16.mxu0 0
    %662 = vmatpush1.bf16.msra.mxu0 0
    %663 = vmatprep.subr.bf16.mxu0 0
    %664 = vmatpush1.bf16.msra.mxu0 0
    %665 = vmatprep.mubr.bf16.mxu0 0
    %666 = vmatmul.mubr.bf16.gmra.mrb[0].mxu0 %v622
    %v667 = vpop.f32.mrb[0].mxu0
    %v668 = vadd.f32 0.0, %v667
    %v669 = vpop.f32.mrb[0].mxu0
    %v670 = vpop.f32.mrb[0].mxu0
    %v671 = vadd.f32 0.0, %v670
    %v672 = vpop.f32.mrb[0].mxu0
    %673 = vmatprep.mubr.bf16.mxu0 0
    %674 = vmatmul.mubr.bf16.gmra.mrb[0].mxu0 %v625
    %v675 = vpop.f32.mrb[0].mxu0
    %v676 = vadd.f32 0.0, %v675
    %v677 = vpop.f32.mrb[0].mxu0
    %v678 = vpop.f32.mrb[0].mxu0
    %v679 = vadd.f32 0.0, %v678
    %v680 = vpop.f32.mrb[0].mxu0
    %681 = vmatprep.mubr.bf16.mxu0 0
    %682 = vmatmul.mubr.bf16.gmra.mrb[0].mxu0 %v628
    %v683 = vpop.f32.mrb[0].mxu0
    %v684 = vadd.f32 0.0, %v683
    %v685 = vpop.f32.mrb[0].mxu0
    %v686 = vpop.f32.mrb[0].mxu0
    %v687 = vadd.f32 0.0, %v686
    %v688 = vpop.f32.mrb[0].mxu0
    %689 = vmatprep.mubr.bf16.mxu0 0
    %690 = vmatmul.mubr.bf16.gmra.mrb[0].mxu0 %v631
    %v691 = vpop.f32.mrb[0].mxu0
    %v692 = vadd.f32 0.0, %v691
    %v693 = vpop.f32.mrb[0].mxu0
    %v694 = vpop.f32.mrb[0].mxu0
    %v695 = vadd.f32 0.0, %v694
    %v696 = vpop.f32.mrb[0].mxu0
    %697 = vdwg.mxu0
    %v706 = vunpack.c.l.b16 %v437
    %v707 = vunpack.c.l.b16 %v438
    %v708 = vunpack.c.l.b16 %v439
    %v709 = vunpack.c.l.b16 %v440
    %v710 = vunpack.c.l.b16 %v441
    %v711 = vunpack.c.l.b16 %v442
    %v712 = vunpack.c.l.b16 %v443
    %v713 = vunpack.c.l.b16 %v444
    %v714 = vpack.c.b16 %v707, %v706
    %v715 = vpack.c.b16 %v709, %v708
    %v716 = vpack.c.b16 %v711, %v710
    %v717 = vpack.c.b16 %v713, %v712
    %vm718 = vcmask 64512
    %v720 = vsel %vm718, %v714, 0
    %v723 = vsel %vm718, %v715, 0
    %v726 = vsel %vm718, %v716, 0
    %v729 = vsel %vm718, %v717, 0
    %vm731 = vcmask 1043456
    %v733 = vsel %vm731, 0, 0
    %735 = vmatprep.subr.bf16.mxu0 0
    %736 = vmatpush1.bf16.msra.mxu0 %v733
    %737 = vmatprep.subr.bf16.mxu0 0
    %738 = vmatpush1.bf16.msra.mxu0 0
    %739 = vmatprep.subr.bf16.mxu0 0
    %740 = vmatpush1.bf16.msra.mxu0 0
    %741 = vmatprep.subr.bf16.mxu0 0
    %742 = vmatpush1.bf16.msra.mxu0 0
    %743 = vmatprep.subr.bf16.mxu0 0
    %744 = vmatpush1.bf16.msra.mxu0 0
    %745 = vmatprep.subr.bf16.mxu0 0
    %746 = vmatpush1.bf16.msra.mxu0 0
    %747 = vmatprep.subr.bf16.mxu0 0
    %748 = vmatpush1.bf16.msra.mxu0 0
    %749 = vmatprep.subr.bf16.mxu0 0
    %750 = vmatpush1.bf16.msra.mxu0 0
    %751 = vmatprep.subr.bf16.mxu0 0
    %752 = vmatpush1.bf16.msra.mxu0 0
    %753 = vmatprep.subr.bf16.mxu0 0
    %754 = vmatpush1.bf16.msra.mxu0 0
    %755 = vmatprep.subr.bf16.mxu0 0
    %756 = vmatpush1.bf16.msra.mxu0 0
    %757 = vmatprep.subr.bf16.mxu0 0
    %758 = vmatpush1.bf16.msra.mxu0 0
    %759 = vmatprep.subr.bf16.mxu0 0
    %760 = vmatpush1.bf16.msra.mxu0 0
    %761 = vmatprep.subr.bf16.mxu0 0
    %762 = vmatpush1.bf16.msra.mxu0 0
    %763 = vmatprep.subr.bf16.mxu0 0
    %764 = vmatpush1.bf16.msra.mxu0 0
    %765 = vmatprep.subr.bf16.mxu0 0
    %766 = vmatpush1.bf16.msra.mxu0 0
    %767 = vmatprep.mubr.bf16.mxu0 0
    %768 = vmatmul.mubr.bf16.gmra.mrb[0].mxu0 %v720
    %v769 = vpop.f32.mrb[0].mxu0
    %v770 = vadd.f32 0.0, %v769
    %v771 = vpop.f32.mrb[0].mxu0
    %v772 = vpop.f32.mrb[0].mxu0
    %v773 = vadd.f32 0.0, %v772
    %v774 = vpop.f32.mrb[0].mxu0
    %775 = vmatprep.mubr.bf16.mxu0 0
    %776 = vmatmul.mubr.bf16.gmra.mrb[0].mxu0 %v723
    %v777 = vpop.f32.mrb[0].mxu0
    %v778 = vadd.f32 0.0, %v777
    %v779 = vpop.f32.mrb[0].mxu0
    %v780 = vpop.f32.mrb[0].mxu0
    %v781 = vadd.f32 0.0, %v780
    %v782 = vpop.f32.mrb[0].mxu0
    %783 = vmatprep.mubr.bf16.mxu0 0
    %784 = vmatmul.mubr.bf16.gmra.mrb[0].mxu0 %v726
    %v785 = vpop.f32.mrb[0].mxu0
    %v786 = vadd.f32 0.0, %v785
    %v787 = vpop.f32.mrb[0].mxu0
    %v788 = vpop.f32.mrb[0].mxu0
    %v789 = vadd.f32 0.0, %v788
    %v790 = vpop.f32.mrb[0].mxu0
    %791 = vmatprep.mubr.bf16.mxu0 0
    %792 = vmatmul.mubr.bf16.gmra.mrb[0].mxu0 %v729
    %v793 = vpop.f32.mrb[0].mxu0
    %v794 = vadd.f32 0.0, %v793
    %v795 = vpop.f32.mrb[0].mxu0
    %v796 = vpop.f32.mrb[0].mxu0
    %v797 = vadd.f32 0.0, %v796
    %v798 = vpop.f32.mrb[0].mxu0
    %799 = vdwg.mxu0
    %v800 = vpack.c.bf16 %v574, %v571
    %v801 = vpack.c.bf16 %v582, %v579
    %v802 = vpack.c.bf16 %v590, %v587
    %v803 = vpack.c.bf16 %v598, %v595
    %vm804 = vcmask 31744
    %v806 = vsel %vm804, %v800, 0
    %v809 = vsel %vm804, %v801, 0
    %v812 = vsel %vm804, %v802, 0
    %v815 = vsel %vm804, %v803, 0
    %vm817 = vcmask 1041408
    %v819 = vsel %vm817, %v458, 0
    %821 = vmatprep.subr.bf16.mxu0 0
    %822 = vmatpush1.bf16.msra.mxu0 %v819
    %823 = vmatprep.subr.bf16.mxu0 0
    %824 = vmatpush1.bf16.msra.mxu0 0
    %825 = vmatprep.subr.bf16.mxu0 0
    %826 = vmatpush1.bf16.msra.mxu0 0
    %827 = vmatprep.subr.bf16.mxu0 0
    %828 = vmatpush1.bf16.msra.mxu0 0
    %829 = vmatprep.subr.bf16.mxu0 0
    %830 = vmatpush1.bf16.msra.mxu0 0
    %831 = vmatprep.subr.bf16.mxu0 0
    %832 = vmatpush1.bf16.msra.mxu0 0
    %833 = vmatprep.subr.bf16.mxu0 0
    %834 = vmatpush1.bf16.msra.mxu0 0
    %835 = vmatprep.subr.bf16.mxu0 0
    %836 = vmatpush1.bf16.msra.mxu0 0
    %837 = vmatprep.subr.bf16.mxu0 0
    %838 = vmatpush1.bf16.msra.mxu0 0
    %839 = vmatprep.subr.bf16.mxu0 0
    %840 = vmatpush1.bf16.msra.mxu0 0
    %841 = vmatprep.subr.bf16.mxu0 0
    %842 = vmatpush1.bf16.msra.mxu0 0
    %843 = vmatprep.subr.bf16.mxu0 0
    %844 = vmatpush1.bf16.msra.mxu0 0
    %845 = vmatprep.subr.bf16.mxu0 0
    %846 = vmatpush1.bf16.msra.mxu0 0
    %847 = vmatprep.subr.bf16.mxu0 0
    %848 = vmatpush1.bf16.msra.mxu0 0
    %849 = vmatprep.subr.bf16.mxu0 0
    %850 = vmatpush1.bf16.msra.mxu0 0
    %851 = vmatprep.subr.bf16.mxu0 0
    %852 = vmatpush1.bf16.msra.mxu0 0
    %853 = vmatprep.mubr.bf16.mxu0 0
    %854 = vmatmul.mubr.bf16.gmra.mrb[0].mxu0 %v806
    %v855 = vpop.f32.mrb[0].mxu0
    %v856 = vadd.f32 0.0, %v855
    %v857 = vpop.f32.mrb[0].mxu0
    %v858 = vpop.f32.mrb[0].mxu0
    %v859 = vadd.f32 0.0, %v858
    %v860 = vpop.f32.mrb[0].mxu0
    %861 = vmatprep.mubr.bf16.mxu0 0
    %862 = vmatmul.mubr.bf16.gmra.mrb[0].mxu0 %v809
    %v863 = vpop.f32.mrb[0].mxu0
    %v864 = vadd.f32 0.0, %v863
    %v865 = vpop.f32.mrb[0].mxu0
    %v866 = vpop.f32.mrb[0].mxu0
    %v867 = vadd.f32 0.0, %v866
    %v868 = vpop.f32.mrb[0].mxu0
    %869 = vmatprep.mubr.bf16.mxu0 0
    %870 = vmatmul.mubr.bf16.gmra.mrb[0].mxu0 %v812
    %v871 = vpop.f32.mrb[0].mxu0
    %v872 = vadd.f32 0.0, %v871
    %v873 = vpop.f32.mrb[0].mxu0
    %v874 = vpop.f32.mrb[0].mxu0
    %v875 = vadd.f32 0.0, %v874
    %v876 = vpop.f32.mrb[0].mxu0
    %877 = vmatprep.mubr.bf16.mxu0 0
    %878 = vmatmul.mubr.bf16.gmra.mrb[0].mxu0 %v815
    %v879 = vpop.f32.mrb[0].mxu0
    %v880 = vadd.f32 0.0, %v879
    %v881 = vpop.f32.mrb[0].mxu0
    %v882 = vpop.f32.mrb[0].mxu0
    %v883 = vadd.f32 0.0, %v882
    %v884 = vpop.f32.mrb[0].mxu0
    %885 = vdwg.mxu0
    %v887 = vlaneseq
    %v888 = vshrl.u32 %v887, 7
    %v889 = vsub.s32 0, %v888
    %v890 = vrot.slane %v462, %v889
    %v892 = vadd.f32 %v890, %v856
    %v893 = vadd.f32 %v890, %v859
    %v894 = vadd.f32 %v890, %v864
    %v895 = vadd.f32 %v890, %v867
    %v896 = vadd.f32 %v890, %v872
    %v897 = vadd.f32 %v890, %v875
    %v898 = vadd.f32 %v890, %v880
    %v899 = vadd.f32 %v890, %v883
    %v900 = vpack.c.bf16 %v671, %v668
    %v901 = vpack.c.bf16 %v679, %v676
    %v902 = vpack.c.bf16 %v687, %v684
    %v903 = vpack.c.bf16 %v695, %v692
    %v905 = vsel %vm804, %v900, 0
    %v908 = vsel %vm804, %v901, 0
    %v911 = vsel %vm804, %v902, 0
    %v914 = vsel %vm804, %v903, 0
    %v917 = vsel %vm817, %v459, 0
    %919 = vmatprep.subr.bf16.mxu0 0
    %920 = vmatpush1.bf16.msra.mxu0 %v917
    %921 = vmatprep.subr.bf16.mxu0 0
    %922 = vmatpush1.bf16.msra.mxu0 0
    %923 = vmatprep.subr.bf16.mxu0 0
    %924 = vmatpush1.bf16.msra.mxu0 0
    %925 = vmatprep.subr.bf16.mxu0 0
    %926 = vmatpush1.bf16.msra.mxu0 0
    %927 = vmatprep.subr.bf16.mxu0 0
    %928 = vmatpush1.bf16.msra.mxu0 0
    %929 = vmatprep.subr.bf16.mxu0 0
    %930 = vmatpush1.bf16.msra.mxu0 0
    %931 = vmatprep.subr.bf16.mxu0 0
    %932 = vmatpush1.bf16.msra.mxu0 0
    %933 = vmatprep.subr.bf16.mxu0 0
    %934 = vmatpush1.bf16.msra.mxu0 0
    %935 = vmatprep.subr.bf16.mxu0 0
    %936 = vmatpush1.bf16.msra.mxu0 0
    %937 = vmatprep.subr.bf16.mxu0 0
    %938 = vmatpush1.bf16.msra.mxu0 0
    %939 = vmatprep.subr.bf16.mxu0 0
    %940 = vmatpush1.bf16.msra.mxu0 0
    %941 = vmatprep.subr.bf16.mxu0 0
    %942 = vmatpush1.bf16.msra.mxu0 0
    %943 = vmatprep.subr.bf16.mxu0 0
    %944 = vmatpush1.bf16.msra.mxu0 0
    %945 = vmatprep.subr.bf16.mxu0 0
    %946 = vmatpush1.bf16.msra.mxu0 0
    %947 = vmatprep.subr.bf16.mxu0 0
    %948 = vmatpush1.bf16.msra.mxu0 0
    %949 = vmatprep.subr.bf16.mxu0 0
    %950 = vmatpush1.bf16.msra.mxu0 0
    %951 = vmatprep.mubr.bf16.mxu0 0
    %952 = vmatmul.mubr.bf16.gmra.mrb[0].mxu0 %v905
    %v953 = vpop.f32.mrb[0].mxu0
    %v954 = vadd.f32 0.0, %v953
    %v955 = vpop.f32.mrb[0].mxu0
    %v956 = vpop.f32.mrb[0].mxu0
    %v957 = vadd.f32 0.0, %v956
    %v958 = vpop.f32.mrb[0].mxu0
    %959 = vmatprep.mubr.bf16.mxu0 0
    %960 = vmatmul.mubr.bf16.gmra.mrb[0].mxu0 %v908
    %v961 = vpop.f32.mrb[0].mxu0
    %v962 = vadd.f32 0.0, %v961
    %v963 = vpop.f32.mrb[0].mxu0
    %v964 = vpop.f32.mrb[0].mxu0
    %v965 = vadd.f32 0.0, %v964
    %v966 = vpop.f32.mrb[0].mxu0
    %967 = vmatprep.mubr.bf16.mxu0 0
    %968 = vmatmul.mubr.bf16.gmra.mrb[0].mxu0 %v911
    %v969 = vpop.f32.mrb[0].mxu0
    %v970 = vadd.f32 0.0, %v969
    %v971 = vpop.f32.mrb[0].mxu0
    %v972 = vpop.f32.mrb[0].mxu0
    %v973 = vadd.f32 0.0, %v972
    %v974 = vpop.f32.mrb[0].mxu0
    %975 = vmatprep.mubr.bf16.mxu0 0
    %976 = vmatmul.mubr.bf16.gmra.mrb[0].mxu0 %v914
    %v977 = vpop.f32.mrb[0].mxu0
    %v978 = vadd.f32 0.0, %v977
    %v979 = vpop.f32.mrb[0].mxu0
    %v980 = vpop.f32.mrb[0].mxu0
    %v981 = vadd.f32 0.0, %v980
    %v982 = vpop.f32.mrb[0].mxu0
    %983 = vdwg.mxu0
    %v984 = vadd.f32 %v892, %v954
    %v985 = vadd.f32 %v893, %v957
    %v986 = vadd.f32 %v894, %v962
    %v987 = vadd.f32 %v895, %v965
    %v988 = vadd.f32 %v896, %v970
    %v989 = vadd.f32 %v897, %v973
    %v990 = vadd.f32 %v898, %v978
    %v991 = vadd.f32 %v899, %v981
    %v992 = vpack.c.bf16 %v414, %v413
    %v993 = vpack.c.bf16 %v416, %v415
    %v994 = vpack.c.bf16 %v418, %v417
    %v995 = vpack.c.bf16 %v420, %v419
    %vm996 = vcmask 23552
    %v998 = vsel %vm996, %v992, 0
    %v1001 = vsel %vm996, %v993, 0
    %v1004 = vsel %vm996, %v994, 0
    %v1007 = vsel %vm996, %v995, 0
    %vm1009 = vcmask 1040384
    %v1010 = vsel %vm1009, 4294967295, 65535
    %v1011 = vsel %vm817, %v1010, 0
    %v1013 = vand.u32 %v460, %v1011
    %1015 = vmatprep.subr.bf16.mxu0 0
    %1016 = vmatpush1.bf16.msra.mxu0 %v1013
    %1017 = vmatprep.subr.bf16.mxu0 0
    %1018 = vmatpush1.bf16.msra.mxu0 0
    %1019 = vmatprep.subr.bf16.mxu0 0
    %1020 = vmatpush1.bf16.msra.mxu0 0
    %1021 = vmatprep.subr.bf16.mxu0 0
    %1022 = vmatpush1.bf16.msra.mxu0 0
    %1023 = vmatprep.subr.bf16.mxu0 0
    %1024 = vmatpush1.bf16.msra.mxu0 0
    %1025 = vmatprep.subr.bf16.mxu0 0
    %1026 = vmatpush1.bf16.msra.mxu0 0
    %1027 = vmatprep.subr.bf16.mxu0 0
    %1028 = vmatpush1.bf16.msra.mxu0 0
    %1029 = vmatprep.subr.bf16.mxu0 0
    %1030 = vmatpush1.bf16.msra.mxu0 0
    %1031 = vmatprep.subr.bf16.mxu0 0
    %1032 = vmatpush1.bf16.msra.mxu0 0
    %1033 = vmatprep.subr.bf16.mxu0 0
    %1034 = vmatpush1.bf16.msra.mxu0 0
    %1035 = vmatprep.subr.bf16.mxu0 0
    %1036 = vmatpush1.bf16.msra.mxu0 0
    %1037 = vmatprep.subr.bf16.mxu0 0
    %1038 = vmatpush1.bf16.msra.mxu0 0
    %1039 = vmatprep.subr.bf16.mxu0 0
    %1040 = vmatpush1.bf16.msra.mxu0 0
    %1041 = vmatprep.subr.bf16.mxu0 0
    %1042 = vmatpush1.bf16.msra.mxu0 0
    %1043 = vmatprep.subr.bf16.mxu0 0
    %1044 = vmatpush1.bf16.msra.mxu0 0
    %1045 = vmatprep.subr.bf16.mxu0 0
    %1046 = vmatpush1.bf16.msra.mxu0 0
    %1047 = vmatprep.mubr.bf16.mxu0 0
    %1048 = vmatmul.mubr.bf16.gmra.mrb[0].mxu0 %v998
    %v1049 = vpop.f32.mrb[0].mxu0
    %v1050 = vadd.f32 0.0, %v1049
    %v1051 = vpop.f32.mrb[0].mxu0
    %v1052 = vpop.f32.mrb[0].mxu0
    %v1053 = vadd.f32 0.0, %v1052
    %v1054 = vpop.f32.mrb[0].mxu0
    %1055 = vmatprep.mubr.bf16.mxu0 0
    %1056 = vmatmul.mubr.bf16.gmra.mrb[0].mxu0 %v1001
    %v1057 = vpop.f32.mrb[0].mxu0
    %v1058 = vadd.f32 0.0, %v1057
    %v1059 = vpop.f32.mrb[0].mxu0
    %v1060 = vpop.f32.mrb[0].mxu0
    %v1061 = vadd.f32 0.0, %v1060
    %v1062 = vpop.f32.mrb[0].mxu0
    %1063 = vmatprep.mubr.bf16.mxu0 0
    %1064 = vmatmul.mubr.bf16.gmra.mrb[0].mxu0 %v1004
    %v1065 = vpop.f32.mrb[0].mxu0
    %v1066 = vadd.f32 0.0, %v1065
    %v1067 = vpop.f32.mrb[0].mxu0
    %v1068 = vpop.f32.mrb[0].mxu0
    %v1069 = vadd.f32 0.0, %v1068
    %v1070 = vpop.f32.mrb[0].mxu0
    %1071 = vmatprep.mubr.bf16.mxu0 0
    %1072 = vmatmul.mubr.bf16.gmra.mrb[0].mxu0 %v1007
    %v1073 = vpop.f32.mrb[0].mxu0
    %v1074 = vadd.f32 0.0, %v1073
    %v1075 = vpop.f32.mrb[0].mxu0
    %v1076 = vpop.f32.mrb[0].mxu0
    %v1077 = vadd.f32 0.0, %v1076
    %v1078 = vpop.f32.mrb[0].mxu0
    %1079 = vdwg.mxu0
    %v1080 = vadd.f32 %v984, %v1050
    %v1081 = vadd.f32 %v985, %v1053
    %v1082 = vadd.f32 %v986, %v1058
    %v1083 = vadd.f32 %v987, %v1061
    %v1084 = vadd.f32 %v988, %v1066
    %v1085 = vadd.f32 %v989, %v1069
    %v1086 = vadd.f32 %v990, %v1074
    %v1087 = vadd.f32 %v991, %v1077
    %v1088 = vpack.c.bf16 %v773, %v770
    %v1089 = vpack.c.bf16 %v781, %v778
    %v1090 = vpack.c.bf16 %v789, %v786
    %v1091 = vpack.c.bf16 %v797, %v794
    %vm1092 = vcmask 15360
    %v1094 = vsel %vm1092, %v1088, 0
    %v1097 = vsel %vm1092, %v1089, 0
    %v1100 = vsel %vm1092, %v1090, 0
    %v1103 = vsel %vm1092, %v1091, 0
    %v1106 = vsel %vm1009, %v461, 0
    %1108 = vmatprep.subr.bf16.mxu0 0
    %1109 = vmatpush1.bf16.msra.mxu0 %v1106
    %1110 = vmatprep.subr.bf16.mxu0 0
    %1111 = vmatpush1.bf16.msra.mxu0 0
    %1112 = vmatprep.subr.bf16.mxu0 0
    %1113 = vmatpush1.bf16.msra.mxu0 0
    %1114 = vmatprep.subr.bf16.mxu0 0
    %1115 = vmatpush1.bf16.msra.mxu0 0
    %1116 = vmatprep.subr.bf16.mxu0 0
    %1117 = vmatpush1.bf16.msra.mxu0 0
    %1118 = vmatprep.subr.bf16.mxu0 0
    %1119 = vmatpush1.bf16.msra.mxu0 0
    %1120 = vmatprep.subr.bf16.mxu0 0
    %1121 = vmatpush1.bf16.msra.mxu0 0
    %1122 = vmatprep.subr.bf16.mxu0 0
    %1123 = vmatpush1.bf16.msra.mxu0 0
    %1124 = vmatprep.subr.bf16.mxu0 0
    %1125 = vmatpush1.bf16.msra.mxu0 0
    %1126 = vmatprep.subr.bf16.mxu0 0
    %1127 = vmatpush1.bf16.msra.mxu0 0
    %1128 = vmatprep.subr.bf16.mxu0 0
    %1129 = vmatpush1.bf16.msra.mxu0 0
    %1130 = vmatprep.subr.bf16.mxu0 0
    %1131 = vmatpush1.bf16.msra.mxu0 0
    %1132 = vmatprep.subr.bf16.mxu0 0
    %1133 = vmatpush1.bf16.msra.mxu0 0
    %1134 = vmatprep.subr.bf16.mxu0 0
    %1135 = vmatpush1.bf16.msra.mxu0 0
    %1136 = vmatprep.subr.bf16.mxu0 0
    %1137 = vmatpush1.bf16.msra.mxu0 0
    %1138 = vmatprep.subr.bf16.mxu0 0
    %1139 = vmatpush1.bf16.msra.mxu0 0
    %1140 = vmatprep.mubr.bf16.mxu0 0
    %1141 = vmatmul.mubr.bf16.gmra.mrb[0].mxu0 %v1094
    %v1142 = vpop.f32.mrb[0].mxu0
    %v1143 = vadd.f32 0.0, %v1142
    %v1144 = vpop.f32.mrb[0].mxu0
    %v1145 = vpop.f32.mrb[0].mxu0
    %v1146 = vadd.f32 0.0, %v1145
    %v1147 = vpop.f32.mrb[0].mxu0
    %1148 = vmatprep.mubr.bf16.mxu0 0
    %1149 = vmatmul.mubr.bf16.gmra.mrb[0].mxu0 %v1097
    %v1150 = vpop.f32.mrb[0].mxu0
    %v1151 = vadd.f32 0.0, %v1150
    %v1152 = vpop.f32.mrb[0].mxu0
    %v1153 = vpop.f32.mrb[0].mxu0
    %v1154 = vadd.f32 0.0, %v1153
    %v1155 = vpop.f32.mrb[0].mxu0
    %1156 = vmatprep.mubr.bf16.mxu0 0
    %1157 = vmatmul.mubr.bf16.gmra.mrb[0].mxu0 %v1100
    %v1158 = vpop.f32.mrb[0].mxu0
    %v1159 = vadd.f32 0.0, %v1158
    %v1160 = vpop.f32.mrb[0].mxu0
    %v1161 = vpop.f32.mrb[0].mxu0
    %v1162 = vadd.f32 0.0, %v1161
    %v1163 = vpop.f32.mrb[0].mxu0
    %1164 = vmatprep.mubr.bf16.mxu0 0
    %1165 = vmatmul.mubr.bf16.gmra.mrb[0].mxu0 %v1103
    %v1166 = vpop.f32.mrb[0].mxu0
    %v1167 = vadd.f32 0.0, %v1166
    %v1168 = vpop.f32.mrb[0].mxu0
    %v1169 = vpop.f32.mrb[0].mxu0
    %v1170 = vadd.f32 0.0, %v1169
    %v1171 = vpop.f32.mrb[0].mxu0
    %1172 = vdwg.mxu0
    %v1173 = vadd.f32 %v1080, %v1143
    %v1174 = vadd.f32 %v1081, %v1146
    %v1175 = vadd.f32 %v1082, %v1151
    %v1176 = vadd.f32 %v1083, %v1154
    %v1177 = vadd.f32 %v1084, %v1159
    %v1178 = vadd.f32 %v1085, %v1162
    %v1179 = vadd.f32 %v1086, %v1167
    %v1180 = vadd.f32 %v1087, %v1170
    %v1181 = vmax.f32 %v1173, 0.0
    %v1182 = vmax.f32 %v1174, 0.0
    %v1183 = vmax.f32 %v1175, 0.0
    %v1184 = vmax.f32 %v1176, 0.0
    %v1185 = vmax.f32 %v1177, 0.0
    %v1186 = vmax.f32 %v1178, 0.0
    %v1187 = vmax.f32 %v1179, 0.0
    %v1188 = vmax.f32 %v1180, 0.0
    %v1189 = vpack.c.bf16 %v1182, %v1181
    %v1190 = vpack.c.bf16 %v1184, %v1183
    %v1191 = vpack.c.bf16 %v1186, %v1185
    %v1192 = vpack.c.bf16 %v1188, %v1187
    %v1194 = vlaneseq
    %v1195 = vshrl.u32 %v1194, 7
    %v1196 = vsub.s32 0, %v1195
    %v1197 = vrot.slane %v467, %v1196
    %v1203 = vunpack.c.l.b16 %v463
    %v1204 = vunpack.c.l.b16 %v464
    %v1205 = vunpack.c.l.b16 %v465
    %v1206 = vunpack.c.l.b16 %v466
    %v1207 = vpack.c.b16 %v1204, %v1203
    %v1208 = vpack.c.b16 %v1206, %v1205
    %v1212 = vsel %vm523, %v1189, 0
    %v1215 = vsel %vm523, %v1190, 0
    %v1218 = vsel %vm523, %v1191, 0
    %v1221 = vsel %vm523, %v1192, 0
    %1223 = vmatprep.subr.bf16.mxu0 0
    %1224 = vmatpush1.bf16.msra.mxu0 %v1207
    %1225 = vmatprep.subr.bf16.mxu0 0
    %1226 = vmatpush1.bf16.msra.mxu0 %v1208
    %1227 = vmatprep.subr.bf16.mxu0 0
    %1228 = vmatpush1.bf16.msra.mxu0 0
    %1229 = vmatprep.subr.bf16.mxu0 0
    %1230 = vmatpush1.bf16.msra.mxu0 0
    %1231 = vmatprep.subr.bf16.mxu0 0
    %1232 = vmatpush1.bf16.msra.mxu0 0
    %1233 = vmatprep.subr.bf16.mxu0 0
    %1234 = vmatpush1.bf16.msra.mxu0 0
    %1235 = vmatprep.subr.bf16.mxu0 0
    %1236 = vmatpush1.bf16.msra.mxu0 0
    %1237 = vmatprep.subr.bf16.mxu0 0
    %1238 = vmatpush1.bf16.msra.mxu0 0
    %1239 = vmatprep.subr.bf16.mxu0 0
    %1240 = vmatpush1.bf16.msra.mxu0 0
    %1241 = vmatprep.subr.bf16.mxu0 0
    %1242 = vmatpush1.bf16.msra.mxu0 0
    %1243 = vmatprep.subr.bf16.mxu0 0
    %1244 = vmatpush1.bf16.msra.mxu0 0
    %1245 = vmatprep.subr.bf16.mxu0 0
    %1246 = vmatpush1.bf16.msra.mxu0 0
    %1247 = vmatprep.subr.bf16.mxu0 0
    %1248 = vmatpush1.bf16.msra.mxu0 0
    %1249 = vmatprep.subr.bf16.mxu0 0
    %1250 = vmatpush1.bf16.msra.mxu0 0
    %1251 = vmatprep.subr.bf16.mxu0 0
    %1252 = vmatpush1.bf16.msra.mxu0 0
    %1253 = vmatprep.subr.bf16.mxu0 0
    %1254 = vmatpush1.bf16.msra.mxu0 0
    %1255 = vmatprep.mubr.bf16.mxu0 0
    %1256 = vmatmul.mubr.bf16.gmra.mrb[0].mxu0 %v1212
    %v1257 = vpop.f32.mrb[0].mxu0
    %v1258 = vadd.f32 %v1197, %v1257
    %v1259 = vpop.f32.mrb[0].mxu0
    %v1260 = vpop.f32.mrb[0].mxu0
    %v1261 = vadd.f32 %v1197, %v1260
    %v1262 = vpop.f32.mrb[0].mxu0
    %1263 = vmatprep.mubr.bf16.mxu0 0
    %1264 = vmatmul.mubr.bf16.gmra.mrb[0].mxu0 %v1215
    %v1265 = vpop.f32.mrb[0].mxu0
    %v1266 = vadd.f32 %v1197, %v1265
    %v1267 = vpop.f32.mrb[0].mxu0
    %v1268 = vpop.f32.mrb[0].mxu0
    %v1269 = vadd.f32 %v1197, %v1268
    %v1270 = vpop.f32.mrb[0].mxu0
    %1271 = vmatprep.mubr.bf16.mxu0 0
    %1272 = vmatmul.mubr.bf16.gmra.mrb[0].mxu0 %v1218
    %v1273 = vpop.f32.mrb[0].mxu0
    %v1274 = vadd.f32 %v1197, %v1273
    %v1275 = vpop.f32.mrb[0].mxu0
    %v1276 = vpop.f32.mrb[0].mxu0
    %v1277 = vadd.f32 %v1197, %v1276
    %v1278 = vpop.f32.mrb[0].mxu0
    %1279 = vmatprep.mubr.bf16.mxu0 0
    %1280 = vmatmul.mubr.bf16.gmra.mrb[0].mxu0 %v1221
    %v1281 = vpop.f32.mrb[0].mxu0
    %v1282 = vadd.f32 %v1197, %v1281
    %v1283 = vpop.f32.mrb[0].mxu0
    %v1284 = vpop.f32.mrb[0].mxu0
    %v1285 = vadd.f32 %v1197, %v1284
    %v1286 = vpop.f32.mrb[0].mxu0
    %1287 = vdwg.mxu0
    %v1288 = vmax.f32 %v1258, 0.0
    %v1289 = vmax.f32 %v1261, 0.0
    %v1290 = vmax.f32 %v1266, 0.0
    %v1291 = vmax.f32 %v1269, 0.0
    %v1292 = vmax.f32 %v1274, 0.0
    %v1293 = vmax.f32 %v1277, 0.0
    %v1294 = vmax.f32 %v1282, 0.0
    %v1295 = vmax.f32 %v1285, 0.0
    %v1296 = vpack.c.bf16 %v1289, %v1288
    %v1297 = vpack.c.bf16 %v1291, %v1290
    %v1298 = vpack.c.bf16 %v1293, %v1292
    %v1299 = vpack.c.bf16 %v1295, %v1294
    %v1301 = vlaneseq
    %v1302 = vshrl.u32 %v1301, 7
    %v1303 = vsub.s32 0, %v1302
    %v1304 = vrot.slane %v472, %v1303
    %v1310 = vunpack.c.l.b16 %v468
    %v1311 = vunpack.c.l.b16 %v469
    %v1312 = vunpack.c.l.b16 %v470
    %v1313 = vunpack.c.l.b16 %v471
    %v1314 = vpack.c.b16 %v1311, %v1310
    %v1315 = vpack.c.b16 %v1313, %v1312
    %v1319 = vsel %vm523, %v1296, 0
    %v1322 = vsel %vm523, %v1297, 0
    %v1325 = vsel %vm523, %v1298, 0
    %v1328 = vsel %vm523, %v1299, 0
    %1330 = vmatprep.subr.bf16.mxu0 0
    %1331 = vmatpush1.bf16.msra.mxu0 %v1314
    %1332 = vmatprep.subr.bf16.mxu0 0
    %1333 = vmatpush1.bf16.msra.mxu0 %v1315
    %1334 = vmatprep.subr.bf16.mxu0 0
    %1335 = vmatpush1.bf16.msra.mxu0 0
    %1336 = vmatprep.subr.bf16.mxu0 0
    %1337 = vmatpush1.bf16.msra.mxu0 0
    %1338 = vmatprep.subr.bf16.mxu0 0
    %1339 = vmatpush1.bf16.msra.mxu0 0
    %1340 = vmatprep.subr.bf16.mxu0 0
    %1341 = vmatpush1.bf16.msra.mxu0 0
    %1342 = vmatprep.subr.bf16.mxu0 0
    %1343 = vmatpush1.bf16.msra.mxu0 0
    %1344 = vmatprep.subr.bf16.mxu0 0
    %1345 = vmatpush1.bf16.msra.mxu0 0
    %1346 = vmatprep.subr.bf16.mxu0 0
    %1347 = vmatpush1.bf16.msra.mxu0 0
    %1348 = vmatprep.subr.bf16.mxu0 0
    %1349 = vmatpush1.bf16.msra.mxu0 0
    %1350 = vmatprep.subr.bf16.mxu0 0
    %1351 = vmatpush1.bf16.msra.mxu0 0
    %1352 = vmatprep.subr.bf16.mxu0 0
    %1353 = vmatpush1.bf16.msra.mxu0 0
    %1354 = vmatprep.subr.bf16.mxu0 0
    %1355 = vmatpush1.bf16.msra.mxu0 0
    %1356 = vmatprep.subr.bf16.mxu0 0
    %1357 = vmatpush1.bf16.msra.mxu0 0
    %1358 = vmatprep.subr.bf16.mxu0 0
    %1359 = vmatpush1.bf16.msra.mxu0 0
    %1360 = vmatprep.subr.bf16.mxu0 0
    %1361 = vmatpush1.bf16.msra.mxu0 0
    %1362 = vmatprep.mubr.bf16.mxu0 0
    %1363 = vmatmul.mubr.bf16.gmra.mrb[0].mxu0 %v1319
    %v1364 = vpop.f32.mrb[0].mxu0
    %v1365 = vadd.f32 %v1304, %v1364
    %v1366 = vpop.f32.mrb[0].mxu0
    %v1367 = vpop.f32.mrb[0].mxu0
    %v1368 = vadd.f32 %v1304, %v1367
    %v1369 = vpop.f32.mrb[0].mxu0
    %1370 = vmatprep.mubr.bf16.mxu0 0
    %1371 = vmatmul.mubr.bf16.gmra.mrb[0].mxu0 %v1322
    %v1372 = vpop.f32.mrb[0].mxu0
    %v1373 = vadd.f32 %v1304, %v1372
    %v1374 = vpop.f32.mrb[0].mxu0
    %v1375 = vpop.f32.mrb[0].mxu0
    %v1376 = vadd.f32 %v1304, %v1375
    %v1377 = vpop.f32.mrb[0].mxu0
    %1378 = vmatprep.mubr.bf16.mxu0 0
    %1379 = vmatmul.mubr.bf16.gmra.mrb[0].mxu0 %v1325
    %v1380 = vpop.f32.mrb[0].mxu0
    %v1381 = vadd.f32 %v1304, %v1380
    %v1382 = vpop.f32.mrb[0].mxu0
    %v1383 = vpop.f32.mrb[0].mxu0
    %v1384 = vadd.f32 %v1304, %v1383
    %v1385 = vpop.f32.mrb[0].mxu0
    %1386 = vmatprep.mubr.bf16.mxu0 0
    %1387 = vmatmul.mubr.bf16.gmra.mrb[0].mxu0 %v1328
    %v1388 = vpop.f32.mrb[0].mxu0
    %v1389 = vadd.f32 %v1304, %v1388
    %v1390 = vpop.f32.mrb[0].mxu0
    %v1391 = vpop.f32.mrb[0].mxu0
    %v1392 = vadd.f32 %v1304, %v1391
    %v1393 = vpop.f32.mrb[0].mxu0
    %1394 = vdwg.mxu0
    %v1395 = vpack.c.bf16 %v1368, %v1365
    %v1396 = vpack.c.bf16 %v1376, %v1373
    %v1397 = vpack.c.bf16 %v1384, %v1381
    %v1398 = vpack.c.bf16 %v1392, %v1389
    %v1403 = vunpack.c.l.b16 %v445
    %v1404 = vunpack.c.l.b16 %v446
    %v1405 = vunpack.c.l.b16 %v447
    %v1406 = vunpack.c.l.b16 %v448
    %v1407 = vpack.c.b16 %v1404, %v1403
    %v1408 = vpack.c.b16 %v1406, %v1405
    %vm1409 = vcmask 523264
    %v1411 = vsel %vm1409, %v1407, 0
    %v1414 = vsel %vm1409, %v1408, 0
    %1416 = vmatprep.subr.bf16.mxu0 0
    %1417 = vmatpush1.bf16.msra.mxu0 %v1395
    %1418 = vmatprep.subr.bf16.mxu0 0
    %1419 = vmatpush1.bf16.msra.mxu0 %v1396
    %1420 = vmatprep.subr.bf16.mxu0 0
    %1421 = vmatpush1.bf16.msra.mxu0 %v1397
    %1422 = vmatprep.subr.bf16.mxu0 0
    %1423 = vmatpush1.bf16.msra.mxu0 %v1398
    %1424 = vmatprep.subr.bf16.mxu0 0
    %1425 = vmatpush1.bf16.msra.mxu0 0
    %1426 = vmatprep.subr.bf16.mxu0 0
    %1427 = vmatpush1.bf16.msra.mxu0 0
    %1428 = vmatprep.subr.bf16.mxu0 0
    %1429 = vmatpush1.bf16.msra.mxu0 0
    %1430 = vmatprep.subr.bf16.mxu0 0
    %1431 = vmatpush1.bf16.msra.mxu0 0
    %1432 = vmatprep.subr.bf16.mxu0 0
    %1433 = vmatpush1.bf16.msra.mxu0 0
    %1434 = vmatprep.subr.bf16.mxu0 0
    %1435 = vmatpush1.bf16.msra.mxu0 0
    %1436 = vmatprep.subr.bf16.mxu0 0
    %1437 = vmatpush1.bf16.msra.mxu0 0
    %1438 = vmatprep.subr.bf16.mxu0 0
    %1439 = vmatpush1.bf16.msra.mxu0 0
    %1440 = vmatprep.subr.bf16.mxu0 0
    %1441 = vmatpush1.bf16.msra.mxu0 0
    %1442 = vmatprep.subr.bf16.mxu0 0
    %1443 = vmatpush1.bf16.msra.mxu0 0
    %1444 = vmatprep.subr.bf16.mxu0 0
    %1445 = vmatpush1.bf16.msra.mxu0 0
    %1446 = vmatprep.subr.bf16.mxu0 0
    %1447 = vmatpush1.bf16.msra.mxu0 0
    %1448 = vmatprep.mubr.bf16.mxu0 0
    %1449 = vmatmul.mubr.bf16.gmra.mrb[0].mxu0 %v1411
    %v1450 = vpop.f32.mrb[0].mxu0
    %v1451 = vadd.f32 0.0, %v1450
    %v1452 = vpop.f32.mrb[0].mxu0
    %v1453 = vpop.f32.mrb[0].mxu0
    %v1454 = vadd.f32 0.0, %v1453
    %v1455 = vpop.f32.mrb[0].mxu0
    %1456 = vmatprep.mubr.bf16.mxu0 0
    %1457 = vmatmul.mubr.bf16.gmra.mrb[0].mxu0 %v1414
    %v1458 = vpop.f32.mrb[0].mxu0
    %v1459 = vadd.f32 0.0, %v1458
    %v1460 = vpop.f32.mrb[0].mxu0
    %v1461 = vpop.f32.mrb[0].mxu0
    %v1462 = vadd.f32 0.0, %v1461
    %v1463 = vpop.f32.mrb[0].mxu0
    %1464 = vdwg.mxu0
    %v1469 = vunpack.c.l.b16 %v449
    %v1470 = vunpack.c.l.b16 %v450
    %v1471 = vunpack.c.l.b16 %v451
    %v1472 = vunpack.c.l.b16 %v452
    %v1473 = vpack.c.b16 %v1470, %v1469
    %v1474 = vpack.c.b16 %v1472, %v1471
    %v1476 = vsel %vm718, %v1473, 0
    %v1479 = vsel %vm718, %v1474, 0
    %1481 = vmatprep.subr.bf16.mxu0 0
    %1482 = vmatpush1.bf16.msra.mxu0 %v733
    %1483 = vmatprep.subr.bf16.mxu0 0
    %1484 = vmatpush1.bf16.msra.mxu0 0
    %1485 = vmatprep.subr.bf16.mxu0 0
    %1486 = vmatpush1.bf16.msra.mxu0 0
    %1487 = vmatprep.subr.bf16.mxu0 0
    %1488 = vmatpush1.bf16.msra.mxu0 0
    %1489 = vmatprep.subr.bf16.mxu0 0
    %1490 = vmatpush1.bf16.msra.mxu0 0
    %1491 = vmatprep.subr.bf16.mxu0 0
    %1492 = vmatpush1.bf16.msra.mxu0 0
    %1493 = vmatprep.subr.bf16.mxu0 0
    %1494 = vmatpush1.bf16.msra.mxu0 0
    %1495 = vmatprep.subr.bf16.mxu0 0
    %1496 = vmatpush1.bf16.msra.mxu0 0
    %1497 = vmatprep.subr.bf16.mxu0 0
    %1498 = vmatpush1.bf16.msra.mxu0 0
    %1499 = vmatprep.subr.bf16.mxu0 0
    %1500 = vmatpush1.bf16.msra.mxu0 0
    %1501 = vmatprep.subr.bf16.mxu0 0
    %1502 = vmatpush1.bf16.msra.mxu0 0
    %1503 = vmatprep.subr.bf16.mxu0 0
    %1504 = vmatpush1.bf16.msra.mxu0 0
    %1505 = vmatprep.subr.bf16.mxu0 0
    %1506 = vmatpush1.bf16.msra.mxu0 0
    %1507 = vmatprep.subr.bf16.mxu0 0
    %1508 = vmatpush1.bf16.msra.mxu0 0
    %1509 = vmatprep.subr.bf16.mxu0 0
    %1510 = vmatpush1.bf16.msra.mxu0 0
    %1511 = vmatprep.subr.bf16.mxu0 0
    %1512 = vmatpush1.bf16.msra.mxu0 0
    %1513 = vmatprep.mubr.bf16.mxu0 0
    %1514 = vmatmul.mubr.bf16.gmra.mrb[0].mxu0 %v1476
    %v1515 = vpop.f32.mrb[0].mxu0
    %v1516 = vadd.f32 0.0, %v1515
    %v1517 = vpop.f32.mrb[0].mxu0
    %v1518 = vpop.f32.mrb[0].mxu0
    %v1519 = vadd.f32 0.0, %v1518
    %v1520 = vpop.f32.mrb[0].mxu0
    %1521 = vmatprep.mubr.bf16.mxu0 0
    %1522 = vmatmul.mubr.bf16.gmra.mrb[0].mxu0 %v1479
    %v1523 = vpop.f32.mrb[0].mxu0
    %v1524 = vadd.f32 0.0, %v1523
    %v1525 = vpop.f32.mrb[0].mxu0
    %v1526 = vpop.f32.mrb[0].mxu0
    %v1527 = vadd.f32 0.0, %v1526
    %v1528 = vpop.f32.mrb[0].mxu0
    %1529 = vdwg.mxu0
    %v1531 = vsel %vm804, %v501, 0
    %v1534 = vsel %vm804, %v502, 0
    %v1537 = vsel %vm817, %v473, 0
    %1539 = vmatprep.subr.bf16.mxu0 0
    %1540 = vmatpush1.bf16.msra.mxu0 %v1537
    %1541 = vmatprep.subr.bf16.mxu0 0
    %1542 = vmatpush1.bf16.msra.mxu0 0
    %1543 = vmatprep.subr.bf16.mxu0 0
    %1544 = vmatpush1.bf16.msra.mxu0 0
    %1545 = vmatprep.subr.bf16.mxu0 0
    %1546 = vmatpush1.bf16.msra.mxu0 0
    %1547 = vmatprep.subr.bf16.mxu0 0
    %1548 = vmatpush1.bf16.msra.mxu0 0
    %1549 = vmatprep.subr.bf16.mxu0 0
    %1550 = vmatpush1.bf16.msra.mxu0 0
    %1551 = vmatprep.subr.bf16.mxu0 0
    %1552 = vmatpush1.bf16.msra.mxu0 0
    %1553 = vmatprep.subr.bf16.mxu0 0
    %1554 = vmatpush1.bf16.msra.mxu0 0
    %1555 = vmatprep.subr.bf16.mxu0 0
    %1556 = vmatpush1.bf16.msra.mxu0 0
    %1557 = vmatprep.subr.bf16.mxu0 0
    %1558 = vmatpush1.bf16.msra.mxu0 0
    %1559 = vmatprep.subr.bf16.mxu0 0
    %1560 = vmatpush1.bf16.msra.mxu0 0
    %1561 = vmatprep.subr.bf16.mxu0 0
    %1562 = vmatpush1.bf16.msra.mxu0 0
    %1563 = vmatprep.subr.bf16.mxu0 0
    %1564 = vmatpush1.bf16.msra.mxu0 0
    %1565 = vmatprep.subr.bf16.mxu0 0
    %1566 = vmatpush1.bf16.msra.mxu0 0
    %1567 = vmatprep.subr.bf16.mxu0 0
    %1568 = vmatpush1.bf16.msra.mxu0 0
    %1569 = vmatprep.subr.bf16.mxu0 0
    %1570 = vmatpush1.bf16.msra.mxu0 0
    %1571 = vmatprep.mubr.bf16.mxu0 0
    %1572 = vmatmul.mubr.bf16.gmra.mrb[0].mxu0 %v1531
    %v1573 = vpop.f32.mrb[0].mxu0
    %v1574 = vadd.f32 0.0, %v1573
    %v1575 = vpop.f32.mrb[0].mxu0
    %v1576 = vpop.f32.mrb[0].mxu0
    %v1577 = vadd.f32 0.0, %v1576
    %v1578 = vpop.f32.mrb[0].mxu0
    %1579 = vmatprep.mubr.bf16.mxu0 0
    %1580 = vmatmul.mubr.bf16.gmra.mrb[0].mxu0 %v1534
    %v1581 = vpop.f32.mrb[0].mxu0
    %v1582 = vadd.f32 0.0, %v1581
    %v1583 = vpop.f32.mrb[0].mxu0
    %v1584 = vpop.f32.mrb[0].mxu0
    %v1585 = vadd.f32 0.0, %v1584
    %v1586 = vpop.f32.mrb[0].mxu0
    %1587 = vdwg.mxu0
    %v1589 = vlaneseq
    %v1590 = vshrl.u32 %v1589, 7
    %v1591 = vsub.s32 0, %v1590
    %v1592 = vrot.slane %v476, %v1591
    %v1594 = vadd.f32 %v1592, %v1574
    %v1595 = vadd.f32 %v1592, %v1577
    %v1596 = vadd.f32 %v1592, %v1582
    %v1597 = vadd.f32 %v1592, %v1585
    %v1598 = vpack.c.bf16 %v1454, %v1451
    %v1599 = vpack.c.bf16 %v1462, %v1459
    %v1601 = vsel %vm718, %v1598, 0
    %v1604 = vsel %vm718, %v1599, 0
    %v1607 = vsel %vm731, %v474, 0
    %1609 = vmatprep.subr.bf16.mxu0 0
    %1610 = vmatpush1.bf16.msra.mxu0 %v1607
    %1611 = vmatprep.subr.bf16.mxu0 0
    %1612 = vmatpush1.bf16.msra.mxu0 0
    %1613 = vmatprep.subr.bf16.mxu0 0
    %1614 = vmatpush1.bf16.msra.mxu0 0
    %1615 = vmatprep.subr.bf16.mxu0 0
    %1616 = vmatpush1.bf16.msra.mxu0 0
    %1617 = vmatprep.subr.bf16.mxu0 0
    %1618 = vmatpush1.bf16.msra.mxu0 0
    %1619 = vmatprep.subr.bf16.mxu0 0
    %1620 = vmatpush1.bf16.msra.mxu0 0
    %1621 = vmatprep.subr.bf16.mxu0 0
    %1622 = vmatpush1.bf16.msra.mxu0 0
    %1623 = vmatprep.subr.bf16.mxu0 0
    %1624 = vmatpush1.bf16.msra.mxu0 0
    %1625 = vmatprep.subr.bf16.mxu0 0
    %1626 = vmatpush1.bf16.msra.mxu0 0
    %1627 = vmatprep.subr.bf16.mxu0 0
    %1628 = vmatpush1.bf16.msra.mxu0 0
    %1629 = vmatprep.subr.bf16.mxu0 0
    %1630 = vmatpush1.bf16.msra.mxu0 0
    %1631 = vmatprep.subr.bf16.mxu0 0
    %1632 = vmatpush1.bf16.msra.mxu0 0
    %1633 = vmatprep.subr.bf16.mxu0 0
    %1634 = vmatpush1.bf16.msra.mxu0 0
    %1635 = vmatprep.subr.bf16.mxu0 0
    %1636 = vmatpush1.bf16.msra.mxu0 0
    %1637 = vmatprep.subr.bf16.mxu0 0
    %1638 = vmatpush1.bf16.msra.mxu0 0
    %1639 = vmatprep.subr.bf16.mxu0 0
    %1640 = vmatpush1.bf16.msra.mxu0 0
    %1641 = vmatprep.mubr.bf16.mxu0 0
    %1642 = vmatmul.mubr.bf16.gmra.mrb[0].mxu0 %v1601
    %v1643 = vpop.f32.mrb[0].mxu0
    %v1644 = vadd.f32 0.0, %v1643
    %v1645 = vpop.f32.mrb[0].mxu0
    %v1646 = vpop.f32.mrb[0].mxu0
    %v1647 = vadd.f32 0.0, %v1646
    %v1648 = vpop.f32.mrb[0].mxu0
    %1649 = vmatprep.mubr.bf16.mxu0 0
    %1650 = vmatmul.mubr.bf16.gmra.mrb[0].mxu0 %v1604
    %v1651 = vpop.f32.mrb[0].mxu0
    %v1652 = vadd.f32 0.0, %v1651
    %v1653 = vpop.f32.mrb[0].mxu0
    %v1654 = vpop.f32.mrb[0].mxu0
    %v1655 = vadd.f32 0.0, %v1654
    %v1656 = vpop.f32.mrb[0].mxu0
    %1657 = vdwg.mxu0
    %v1658 = vadd.f32 %v1594, %v1644
    %v1659 = vadd.f32 %v1595, %v1647
    %v1660 = vadd.f32 %v1596, %v1652
    %v1661 = vadd.f32 %v1597, %v1655
    %v1662 = vpack.c.bf16 %v1519, %v1516
    %v1663 = vpack.c.bf16 %v1527, %v1524
    %v1665 = vsel %vm1092, %v1662, 0
    %v1668 = vsel %vm1092, %v1663, 0
    %v1671 = vsel %vm1009, %v475, 0
    %1673 = vmatprep.subr.bf16.mxu0 0
    %1674 = vmatpush1.bf16.msra.mxu0 %v1671
    %1675 = vmatprep.subr.bf16.mxu0 0
    %1676 = vmatpush1.bf16.msra.mxu0 0
    %1677 = vmatprep.subr.bf16.mxu0 0
    %1678 = vmatpush1.bf16.msra.mxu0 0
    %1679 = vmatprep.subr.bf16.mxu0 0
    %1680 = vmatpush1.bf16.msra.mxu0 0
    %1681 = vmatprep.subr.bf16.mxu0 0
    %1682 = vmatpush1.bf16.msra.mxu0 0
    %1683 = vmatprep.subr.bf16.mxu0 0
    %1684 = vmatpush1.bf16.msra.mxu0 0
    %1685 = vmatprep.subr.bf16.mxu0 0
    %1686 = vmatpush1.bf16.msra.mxu0 0
    %1687 = vmatprep.subr.bf16.mxu0 0
    %1688 = vmatpush1.bf16.msra.mxu0 0
    %1689 = vmatprep.subr.bf16.mxu0 0
    %1690 = vmatpush1.bf16.msra.mxu0 0
    %1691 = vmatprep.subr.bf16.mxu0 0
    %1692 = vmatpush1.bf16.msra.mxu0 0
    %1693 = vmatprep.subr.bf16.mxu0 0
    %1694 = vmatpush1.bf16.msra.mxu0 0
    %1695 = vmatprep.subr.bf16.mxu0 0
    %1696 = vmatpush1.bf16.msra.mxu0 0
    %1697 = vmatprep.subr.bf16.mxu0 0
    %1698 = vmatpush1.bf16.msra.mxu0 0
    %1699 = vmatprep.subr.bf16.mxu0 0
    %1700 = vmatpush1.bf16.msra.mxu0 0
    %1701 = vmatprep.subr.bf16.mxu0 0
    %1702 = vmatpush1.bf16.msra.mxu0 0
    %1703 = vmatprep.subr.bf16.mxu0 0
    %1704 = vmatpush1.bf16.msra.mxu0 0
    %1705 = vmatprep.mubr.bf16.mxu0 0
    %1706 = vmatmul.mubr.bf16.gmra.mrb[0].mxu0 %v1665
    %v1707 = vpop.f32.mrb[0].mxu0
    %v1708 = vadd.f32 0.0, %v1707
    %v1709 = vpop.f32.mrb[0].mxu0
    %v1710 = vpop.f32.mrb[0].mxu0
    %v1711 = vadd.f32 0.0, %v1710
    %v1712 = vpop.f32.mrb[0].mxu0
    %1713 = vmatprep.mubr.bf16.mxu0 0
    %1714 = vmatmul.mubr.bf16.gmra.mrb[0].mxu0 %v1668
    %v1715 = vpop.f32.mrb[0].mxu0
    %v1716 = vadd.f32 0.0, %v1715
    %v1717 = vpop.f32.mrb[0].mxu0
    %v1718 = vpop.f32.mrb[0].mxu0
    %v1719 = vadd.f32 0.0, %v1718
    %v1720 = vpop.f32.mrb[0].mxu0
    %1721 = vdwg.mxu0
    %v1722 = vadd.f32 %v1658, %v1708
    %v1723 = vadd.f32 %v1659, %v1711
    %v1724 = vadd.f32 %v1660, %v1716
    %v1725 = vadd.f32 %v1661, %v1719
    %v1726 = vmax.f32 %v1722, 0.0
    %v1727 = vmax.f32 %v1723, 0.0
    %v1728 = vmax.f32 %v1724, 0.0
    %v1729 = vmax.f32 %v1725, 0.0
    %v1730 = vpack.c.bf16 %v1727, %v1726
    %v1731 = vpack.c.bf16 %v1729, %v1728
    %v1733 = vlaneseq
    %v1734 = vshrl.u32 %v1733, 7
    %v1735 = vsub.s32 0, %v1734
    %v1736 = vrot.slane %v481, %v1735
    %v1742 = vunpack.c.l.b16 %v477
    %v1743 = vunpack.c.l.b16 %v478
    %v1744 = vunpack.c.l.b16 %v479
    %v1745 = vunpack.c.l.b16 %v480
    %v1746 = vpack.c.b16 %v1743, %v1742
    %v1747 = vpack.c.b16 %v1745, %v1744
    %v1751 = vsel %vm523, %v1730, 0
    %v1754 = vsel %vm523, %v1731, 0
    %1756 = vmatprep.subr.bf16.mxu0 0
    %1757 = vmatpush1.bf16.msra.mxu0 %v1746
    %1758 = vmatprep.subr.bf16.mxu0 0
    %1759 = vmatpush1.bf16.msra.mxu0 %v1747
    %1760 = vmatprep.subr.bf16.mxu0 0
    %1761 = vmatpush1.bf16.msra.mxu0 0
    %1762 = vmatprep.subr.bf16.mxu0 0
    %1763 = vmatpush1.bf16.msra.mxu0 0
    %1764 = vmatprep.subr.bf16.mxu0 0
    %1765 = vmatpush1.bf16.msra.mxu0 0
    %1766 = vmatprep.subr.bf16.mxu0 0
    %1767 = vmatpush1.bf16.msra.mxu0 0
    %1768 = vmatprep.subr.bf16.mxu0 0
    %1769 = vmatpush1.bf16.msra.mxu0 0
    %1770 = vmatprep.subr.bf16.mxu0 0
    %1771 = vmatpush1.bf16.msra.mxu0 0
    %1772 = vmatprep.subr.bf16.mxu0 0
    %1773 = vmatpush1.bf16.msra.mxu0 0
    %1774 = vmatprep.subr.bf16.mxu0 0
    %1775 = vmatpush1.bf16.msra.mxu0 0
    %1776 = vmatprep.subr.bf16.mxu0 0
    %1777 = vmatpush1.bf16.msra.mxu0 0
    %1778 = vmatprep.subr.bf16.mxu0 0
    %1779 = vmatpush1.bf16.msra.mxu0 0
    %1780 = vmatprep.subr.bf16.mxu0 0
    %1781 = vmatpush1.bf16.msra.mxu0 0
    %1782 = vmatprep.subr.bf16.mxu0 0
    %1783 = vmatpush1.bf16.msra.mxu0 0
    %1784 = vmatprep.subr.bf16.mxu0 0
    %1785 = vmatpush1.bf16.msra.mxu0 0
    %1786 = vmatprep.subr.bf16.mxu0 0
    %1787 = vmatpush1.bf16.msra.mxu0 0
    %1788 = vmatprep.mubr.bf16.mxu0 0
    %1789 = vmatmul.mubr.bf16.gmra.mrb[0].mxu0 %v1751
    %v1790 = vpop.f32.mrb[0].mxu0
    %v1791 = vadd.f32 %v1736, %v1790
    %v1792 = vpop.f32.mrb[0].mxu0
    %v1793 = vpop.f32.mrb[0].mxu0
    %v1794 = vadd.f32 %v1736, %v1793
    %v1795 = vpop.f32.mrb[0].mxu0
    %1796 = vmatprep.mubr.bf16.mxu0 0
    %1797 = vmatmul.mubr.bf16.gmra.mrb[0].mxu0 %v1754
    %v1798 = vpop.f32.mrb[0].mxu0
    %v1799 = vadd.f32 %v1736, %v1798
    %v1800 = vpop.f32.mrb[0].mxu0
    %v1801 = vpop.f32.mrb[0].mxu0
    %v1802 = vadd.f32 %v1736, %v1801
    %v1803 = vpop.f32.mrb[0].mxu0
    %1804 = vdwg.mxu0
    %v1805 = vmax.f32 %v1791, 0.0
    %v1806 = vmax.f32 %v1794, 0.0
    %v1807 = vmax.f32 %v1799, 0.0
    %v1808 = vmax.f32 %v1802, 0.0
    %v1809 = vpack.c.bf16 %v1806, %v1805
    %v1810 = vpack.c.bf16 %v1808, %v1807
    %v1812 = vlaneseq
    %v1813 = vshrl.u32 %v1812, 7
    %v1814 = vsub.s32 0, %v1813
    %v1815 = vrot.slane %v486, %v1814
    %v1821 = vunpack.c.l.b16 %v482
    %v1822 = vunpack.c.l.b16 %v483
    %v1823 = vunpack.c.l.b16 %v484
    %v1824 = vunpack.c.l.b16 %v485
    %v1825 = vpack.c.b16 %v1822, %v1821
    %v1826 = vpack.c.b16 %v1824, %v1823
    %v1830 = vsel %vm523, %v1809, 0
    %v1833 = vsel %vm523, %v1810, 0
    %1835 = vmatprep.subr.bf16.mxu0 0
    %1836 = vmatpush1.bf16.msra.mxu0 %v1825
    %1837 = vmatprep.subr.bf16.mxu0 0
    %1838 = vmatpush1.bf16.msra.mxu0 %v1826
    %1839 = vmatprep.subr.bf16.mxu0 0
    %1840 = vmatpush1.bf16.msra.mxu0 0
    %1841 = vmatprep.subr.bf16.mxu0 0
    %1842 = vmatpush1.bf16.msra.mxu0 0
    %1843 = vmatprep.subr.bf16.mxu0 0
    %1844 = vmatpush1.bf16.msra.mxu0 0
    %1845 = vmatprep.subr.bf16.mxu0 0
    %1846 = vmatpush1.bf16.msra.mxu0 0
    %1847 = vmatprep.subr.bf16.mxu0 0
    %1848 = vmatpush1.bf16.msra.mxu0 0
    %1849 = vmatprep.subr.bf16.mxu0 0
    %1850 = vmatpush1.bf16.msra.mxu0 0
    %1851 = vmatprep.subr.bf16.mxu0 0
    %1852 = vmatpush1.bf16.msra.mxu0 0
    %1853 = vmatprep.subr.bf16.mxu0 0
    %1854 = vmatpush1.bf16.msra.mxu0 0
    %1855 = vmatprep.subr.bf16.mxu0 0
    %1856 = vmatpush1.bf16.msra.mxu0 0
    %1857 = vmatprep.subr.bf16.mxu0 0
    %1858 = vmatpush1.bf16.msra.mxu0 0
    %1859 = vmatprep.subr.bf16.mxu0 0
    %1860 = vmatpush1.bf16.msra.mxu0 0
    %1861 = vmatprep.subr.bf16.mxu0 0
    %1862 = vmatpush1.bf16.msra.mxu0 0
    %1863 = vmatprep.subr.bf16.mxu0 0
    %1864 = vmatpush1.bf16.msra.mxu0 0
    %1865 = vmatprep.subr.bf16.mxu0 0
    %1866 = vmatpush1.bf16.msra.mxu0 0
    %1867 = vmatprep.mubr.bf16.mxu0 0
    %1868 = vmatmul.mubr.bf16.gmra.mrb[0].mxu0 %v1830
    %v1869 = vpop.f32.mrb[0].mxu0
    %v1870 = vadd.f32 %v1815, %v1869
    %v1871 = vpop.f32.mrb[0].mxu0
    %v1872 = vpop.f32.mrb[0].mxu0
    %v1873 = vadd.f32 %v1815, %v1872
    %v1874 = vpop.f32.mrb[0].mxu0
    %1875 = vmatprep.mubr.bf16.mxu0 0
    %1876 = vmatmul.mubr.bf16.gmra.mrb[0].mxu0 %v1833
    %v1877 = vpop.f32.mrb[0].mxu0
    %v1878 = vadd.f32 %v1815, %v1877
    %v1879 = vpop.f32.mrb[0].mxu0
    %v1880 = vpop.f32.mrb[0].mxu0
    %v1881 = vadd.f32 %v1815, %v1880
    %v1882 = vpop.f32.mrb[0].mxu0
    %1883 = vdwg.mxu0
    %1888 = vrot.lane.b32.xlu0 %v409, 8
    %v1889 = vpop.permute.xlu0 %1888
    %1890 = vrot.lane.b32.xlu0 %v410, 8
    %v1891 = vpop.permute.xlu0 %1890
    %1892 = vrot.lane.b32.xlu0 %v411, 8
    %v1893 = vpop.permute.xlu0 %1892
    %1894 = vrot.lane.b32.xlu0 %v412, 8
    %v1895 = vpop.permute.xlu0 %1894
    %v1900 = vsel %vm718, %v1870, %v1889
    %v1901 = vsel %vm718, %v1873, %v1891
    %v1902 = vsel %vm718, %v1878, %v1893
    %v1903 = vsel %vm718, %v1881, %v1895
    %v1904 = vpack.c.bf16 %v1873, %v1870
    %v1905 = vpack.c.bf16 %v1881, %v1878
    %v1907 = vsel %vm523, %v453, 0
    %1909 = vmatprep.subr.bf16.mxu0 0
    %1910 = vmatpush1.bf16.msra.mxu0 %v1904
    %1911 = vmatprep.subr.bf16.mxu0 0
    %1912 = vmatpush1.bf16.msra.mxu0 %v1905
    %1913 = vmatprep.subr.bf16.mxu0 0
    %1914 = vmatpush1.bf16.msra.mxu0 0
    %1915 = vmatprep.subr.bf16.mxu0 0
    %1916 = vmatpush1.bf16.msra.mxu0 0
    %1917 = vmatprep.subr.bf16.mxu0 0
    %1918 = vmatpush1.bf16.msra.mxu0 0
    %1919 = vmatprep.subr.bf16.mxu0 0
    %1920 = vmatpush1.bf16.msra.mxu0 0
    %1921 = vmatprep.subr.bf16.mxu0 0
    %1922 = vmatpush1.bf16.msra.mxu0 0
    %1923 = vmatprep.subr.bf16.mxu0 0
    %1924 = vmatpush1.bf16.msra.mxu0 0
    %1925 = vmatprep.subr.bf16.mxu0 0
    %1926 = vmatpush1.bf16.msra.mxu0 0
    %1927 = vmatprep.subr.bf16.mxu0 0
    %1928 = vmatpush1.bf16.msra.mxu0 0
    %1929 = vmatprep.subr.bf16.mxu0 0
    %1930 = vmatpush1.bf16.msra.mxu0 0
    %1931 = vmatprep.subr.bf16.mxu0 0
    %1932 = vmatpush1.bf16.msra.mxu0 0
    %1933 = vmatprep.subr.bf16.mxu0 0
    %1934 = vmatpush1.bf16.msra.mxu0 0
    %1935 = vmatprep.subr.bf16.mxu0 0
    %1936 = vmatpush1.bf16.msra.mxu0 0
    %1937 = vmatprep.subr.bf16.mxu0 0
    %1938 = vmatpush1.bf16.msra.mxu0 0
    %1939 = vmatprep.subr.bf16.mxu0 0
    %1940 = vmatpush1.bf16.msra.mxu0 0
    %1941 = vmatprep.mubr.bf16.mxu0 0
    %1942 = vmatmul.mubr.bf16.gmra.mrb[0].mxu0 %v1907
    %v1943 = vpop.f32.mrb[0].mxu0
    %v1944 = vadd.f32 0.0, %v1943
    %v1945 = vpop.f32.mrb[0].mxu0
    %v1946 = vpop.f32.mrb[0].mxu0
    %v1947 = vpop.f32.mrb[0].mxu0
    %1948 = vdwg.mxu0
    %1949 = vmatprep.subr.bf16.mxu0 0
    %1950 = vmatpush1.bf16.msra.mxu0 %v1598
    %1951 = vmatprep.subr.bf16.mxu0 0
    %1952 = vmatpush1.bf16.msra.mxu0 %v1599
    %1953 = vmatprep.subr.bf16.mxu0 0
    %1954 = vmatpush1.bf16.msra.mxu0 0
    %1955 = vmatprep.subr.bf16.mxu0 0
    %1956 = vmatpush1.bf16.msra.mxu0 0
    %1957 = vmatprep.subr.bf16.mxu0 0
    %1958 = vmatpush1.bf16.msra.mxu0 0
    %1959 = vmatprep.subr.bf16.mxu0 0
    %1960 = vmatpush1.bf16.msra.mxu0 0
    %1961 = vmatprep.subr.bf16.mxu0 0
    %1962 = vmatpush1.bf16.msra.mxu0 0
    %1963 = vmatprep.subr.bf16.mxu0 0
    %1964 = vmatpush1.bf16.msra.mxu0 0
    %1965 = vmatprep.subr.bf16.mxu0 0
    %1966 = vmatpush1.bf16.msra.mxu0 0
    %1967 = vmatprep.subr.bf16.mxu0 0
    %1968 = vmatpush1.bf16.msra.mxu0 0
    %1969 = vmatprep.subr.bf16.mxu0 0
    %1970 = vmatpush1.bf16.msra.mxu0 0
    %1971 = vmatprep.subr.bf16.mxu0 0
    %1972 = vmatpush1.bf16.msra.mxu0 0
    %1973 = vmatprep.subr.bf16.mxu0 0
    %1974 = vmatpush1.bf16.msra.mxu0 0
    %1975 = vmatprep.subr.bf16.mxu0 0
    %1976 = vmatpush1.bf16.msra.mxu0 0
    %1977 = vmatprep.subr.bf16.mxu0 0
    %1978 = vmatpush1.bf16.msra.mxu0 0
    %1979 = vmatprep.subr.bf16.mxu0 0
    %1980 = vmatpush1.bf16.msra.mxu0 0
    %1981 = vmatprep.mubr.bf16.mxu0 0
    %1982 = vmatmul.mubr.bf16.gmra.mrb[0].mxu0 %v1907
    %v1983 = vpop.f32.mrb[0].mxu0
    %v1984 = vadd.f32 0.0, %v1983
    %v1985 = vpop.f32.mrb[0].mxu0
    %v1986 = vpop.f32.mrb[0].mxu0
    %v1987 = vpop.f32.mrb[0].mxu0
    %1988 = vdwg.mxu0
    %v1989 = vpack.c.bf16 %v1944, %v1944
    %v1991 = vsel %vm718, %v1989, 0
    %v1994 = vsel %vm731, %v487, 0
    %1996 = vmatprep.subr.bf16.mxu0 0
    %1997 = vmatpush1.bf16.msra.mxu0 %v1994
    %1998 = vmatprep.subr.bf16.mxu0 0
    %1999 = vmatpush1.bf16.msra.mxu0 0
    %2000 = vmatprep.subr.bf16.mxu0 0
    %2001 = vmatpush1.bf16.msra.mxu0 0
    %2002 = vmatprep.subr.bf16.mxu0 0
    %2003 = vmatpush1.bf16.msra.mxu0 0
    %2004 = vmatprep.subr.bf16.mxu0 0
    %2005 = vmatpush1.bf16.msra.mxu0 0
    %2006 = vmatprep.subr.bf16.mxu0 0
    %2007 = vmatpush1.bf16.msra.mxu0 0
    %2008 = vmatprep.subr.bf16.mxu0 0
    %2009 = vmatpush1.bf16.msra.mxu0 0
    %2010 = vmatprep.subr.bf16.mxu0 0
    %2011 = vmatpush1.bf16.msra.mxu0 0
    %2012 = vmatprep.subr.bf16.mxu0 0
    %2013 = vmatpush1.bf16.msra.mxu0 0
    %2014 = vmatprep.subr.bf16.mxu0 0
    %2015 = vmatpush1.bf16.msra.mxu0 0
    %2016 = vmatprep.subr.bf16.mxu0 0
    %2017 = vmatpush1.bf16.msra.mxu0 0
    %2018 = vmatprep.subr.bf16.mxu0 0
    %2019 = vmatpush1.bf16.msra.mxu0 0
    %2020 = vmatprep.subr.bf16.mxu0 0
    %2021 = vmatpush1.bf16.msra.mxu0 0
    %2022 = vmatprep.subr.bf16.mxu0 0
    %2023 = vmatpush1.bf16.msra.mxu0 0
    %2024 = vmatprep.subr.bf16.mxu0 0
    %2025 = vmatpush1.bf16.msra.mxu0 0
    %2026 = vmatprep.subr.bf16.mxu0 0
    %2027 = vmatpush1.bf16.msra.mxu0 0
    %2028 = vmatprep.mubr.bf16.mxu0 0
    %2029 = vmatmul.mubr.bf16.gmra.mrb[0].mxu0 %v1991
    %v2030 = vpop.f32.mrb[0].mxu0
    %v2031 = vadd.f32 0.0, %v2030
    %v2032 = vpop.f32.mrb[0].mxu0
    %v2033 = vpop.f32.mrb[0].mxu0
    %v2034 = vpop.f32.mrb[0].mxu0
    %2035 = vdwg.mxu0
    %v2037 = vlaneseq
    %v2038 = vshrl.u32 %v2037, 7
    %v2039 = vsub.s32 0, %v2038
    %v2040 = vrot.slane %v490, %v2039
    %v2042 = vadd.f32 %v2040, %v2031
    %v2043 = vpack.c.bf16 %v1984, %v1984
    %v2045 = vsel %vm718, %v2043, 0
    %v2048 = vsel %vm731, %v488, 0
    %2050 = vmatprep.subr.bf16.mxu0 0
    %2051 = vmatpush1.bf16.msra.mxu0 %v2048
    %2052 = vmatprep.subr.bf16.mxu0 0
    %2053 = vmatpush1.bf16.msra.mxu0 0
    %2054 = vmatprep.subr.bf16.mxu0 0
    %2055 = vmatpush1.bf16.msra.mxu0 0
    %2056 = vmatprep.subr.bf16.mxu0 0
    %2057 = vmatpush1.bf16.msra.mxu0 0
    %2058 = vmatprep.subr.bf16.mxu0 0
    %2059 = vmatpush1.bf16.msra.mxu0 0
    %2060 = vmatprep.subr.bf16.mxu0 0
    %2061 = vmatpush1.bf16.msra.mxu0 0
    %2062 = vmatprep.subr.bf16.mxu0 0
    %2063 = vmatpush1.bf16.msra.mxu0 0
    %2064 = vmatprep.subr.bf16.mxu0 0
    %2065 = vmatpush1.bf16.msra.mxu0 0
    %2066 = vmatprep.subr.bf16.mxu0 0
    %2067 = vmatpush1.bf16.msra.mxu0 0
    %2068 = vmatprep.subr.bf16.mxu0 0
    %2069 = vmatpush1.bf16.msra.mxu0 0
    %2070 = vmatprep.subr.bf16.mxu0 0
    %2071 = vmatpush1.bf16.msra.mxu0 0
    %2072 = vmatprep.subr.bf16.mxu0 0
    %2073 = vmatpush1.bf16.msra.mxu0 0
    %2074 = vmatprep.subr.bf16.mxu0 0
    %2075 = vmatpush1.bf16.msra.mxu0 0
    %2076 = vmatprep.subr.bf16.mxu0 0
    %2077 = vmatpush1.bf16.msra.mxu0 0
    %2078 = vmatprep.subr.bf16.mxu0 0
    %2079 = vmatpush1.bf16.msra.mxu0 0
    %2080 = vmatprep.subr.bf16.mxu0 0
    %2081 = vmatpush1.bf16.msra.mxu0 0
    %2082 = vmatprep.mubr.bf16.mxu0 0
    %2083 = vmatmul.mubr.bf16.gmra.mrb[0].mxu0 %v2045
    %v2084 = vpop.f32.mrb[0].mxu0
    %v2085 = vadd.f32 0.0, %v2084
    %v2086 = vpop.f32.mrb[0].mxu0
    %v2087 = vpop.f32.mrb[0].mxu0
    %v2088 = vpop.f32.mrb[0].mxu0
    %2089 = vdwg.mxu0
    %v2090 = vadd.f32 %v2042, %v2085
    %v2091 = vsel %vm1092, 0, 0
    %v2094 = vsel %vm1009, %v489, 0
    %2096 = vmatprep.subr.bf16.mxu0 0
    %2097 = vmatpush1.bf16.msra.mxu0 %v2094
    %2098 = vmatprep.subr.bf16.mxu0 0
    %2099 = vmatpush1.bf16.msra.mxu0 0
    %2100 = vmatprep.subr.bf16.mxu0 0
    %2101 = vmatpush1.bf16.msra.mxu0 0
    %2102 = vmatprep.subr.bf16.mxu0 0
    %2103 = vmatpush1.bf16.msra.mxu0 0
    %2104 = vmatprep.subr.bf16.mxu0 0
    %2105 = vmatpush1.bf16.msra.mxu0 0
    %2106 = vmatprep.subr.bf16.mxu0 0
    %2107 = vmatpush1.bf16.msra.mxu0 0
    %2108 = vmatprep.subr.bf16.mxu0 0
    %2109 = vmatpush1.bf16.msra.mxu0 0
    %2110 = vmatprep.subr.bf16.mxu0 0
    %2111 = vmatpush1.bf16.msra.mxu0 0
    %2112 = vmatprep.subr.bf16.mxu0 0
    %2113 = vmatpush1.bf16.msra.mxu0 0
    %2114 = vmatprep.subr.bf16.mxu0 0
    %2115 = vmatpush1.bf16.msra.mxu0 0
    %2116 = vmatprep.subr.bf16.mxu0 0
    %2117 = vmatpush1.bf16.msra.mxu0 0
    %2118 = vmatprep.subr.bf16.mxu0 0
    %2119 = vmatpush1.bf16.msra.mxu0 0
    %2120 = vmatprep.subr.bf16.mxu0 0
    %2121 = vmatpush1.bf16.msra.mxu0 0
    %2122 = vmatprep.subr.bf16.mxu0 0
    %2123 = vmatpush1.bf16.msra.mxu0 0
    %2124 = vmatprep.subr.bf16.mxu0 0
    %2125 = vmatpush1.bf16.msra.mxu0 0
    %2126 = vmatprep.subr.bf16.mxu0 0
    %2127 = vmatpush1.bf16.msra.mxu0 0
    %2128 = vmatprep.mubr.bf16.mxu0 0
    %2129 = vmatmul.mubr.bf16.gmra.mrb[0].mxu0 %v2091
    %v2130 = vpop.f32.mrb[0].mxu0
    %v2131 = vadd.f32 0.0, %v2130
    %v2132 = vpop.f32.mrb[0].mxu0
    %v2133 = vpop.f32.mrb[0].mxu0
    %v2134 = vpop.f32.mrb[0].mxu0
    %2135 = vdwg.mxu0
    %v2136 = vadd.f32 %v2090, %v2131
    %v2137 = vmax.f32 %v2136, 0.0
    %v2138 = vpack.c.bf16 %v2137, %v2137
    %v2140 = vlaneseq
    %v2141 = vshrl.u32 %v2140, 7
    %v2142 = vsub.s32 0, %v2141
    %v2143 = vrot.slane %v495, %v2142
    %v2149 = vunpack.c.l.b16 %v491
    %v2150 = vunpack.c.l.b16 %v492
    %v2151 = vunpack.c.l.b16 %v493
    %v2152 = vunpack.c.l.b16 %v494
    %v2153 = vpack.c.b16 %v2150, %v2149
    %v2154 = vpack.c.b16 %v2152, %v2151
    %v2158 = vsel %vm523, %v2138, 0
    %2160 = vmatprep.subr.bf16.mxu0 0
    %2161 = vmatpush1.bf16.msra.mxu0 %v2153
    %2162 = vmatprep.subr.bf16.mxu0 0
    %2163 = vmatpush1.bf16.msra.mxu0 %v2154
    %2164 = vmatprep.subr.bf16.mxu0 0
    %2165 = vmatpush1.bf16.msra.mxu0 0
    %2166 = vmatprep.subr.bf16.mxu0 0
    %2167 = vmatpush1.bf16.msra.mxu0 0
    %2168 = vmatprep.subr.bf16.mxu0 0
    %2169 = vmatpush1.bf16.msra.mxu0 0
    %2170 = vmatprep.subr.bf16.mxu0 0
    %2171 = vmatpush1.bf16.msra.mxu0 0
    %2172 = vmatprep.subr.bf16.mxu0 0
    %2173 = vmatpush1.bf16.msra.mxu0 0
    %2174 = vmatprep.subr.bf16.mxu0 0
    %2175 = vmatpush1.bf16.msra.mxu0 0
    %2176 = vmatprep.subr.bf16.mxu0 0
    %2177 = vmatpush1.bf16.msra.mxu0 0
    %2178 = vmatprep.subr.bf16.mxu0 0
    %2179 = vmatpush1.bf16.msra.mxu0 0
    %2180 = vmatprep.subr.bf16.mxu0 0
    %2181 = vmatpush1.bf16.msra.mxu0 0
    %2182 = vmatprep.subr.bf16.mxu0 0
    %2183 = vmatpush1.bf16.msra.mxu0 0
    %2184 = vmatprep.subr.bf16.mxu0 0
    %2185 = vmatpush1.bf16.msra.mxu0 0
    %2186 = vmatprep.subr.bf16.mxu0 0
    %2187 = vmatpush1.bf16.msra.mxu0 0
    %2188 = vmatprep.subr.bf16.mxu0 0
    %2189 = vmatpush1.bf16.msra.mxu0 0
    %2190 = vmatprep.subr.bf16.mxu0 0
    %2191 = vmatpush1.bf16.msra.mxu0 0
    %2192 = vmatprep.mubr.bf16.mxu0 0
    %2193 = vmatmul.mubr.bf16.gmra.mrb[0].mxu0 %v2158
    %v2194 = vpop.f32.mrb[0].mxu0
    %v2195 = vadd.f32 %v2143, %v2194
    %v2196 = vpop.f32.mrb[0].mxu0
    %v2197 = vpop.f32.mrb[0].mxu0
    %v2198 = vpop.f32.mrb[0].mxu0
    %2199 = vdwg.mxu0
    %v2200 = vmax.f32 %v2195, 0.0
    %v2201 = vpack.c.bf16 %v2200, %v2200
    %v2203 = vlaneseq
    %v2204 = vshrl.u32 %v2203, 7
    %v2205 = vsub.s32 0, %v2204
    %v2206 = vrot.slane %v500, %v2205
    %v2212 = vunpack.c.l.b16 %v496
    %v2213 = vunpack.c.l.b16 %v497
    %v2214 = vunpack.c.l.b16 %v498
    %v2215 = vunpack.c.l.b16 %v499
    %v2216 = vpack.c.b16 %v2213, %v2212
    %v2217 = vpack.c.b16 %v2215, %v2214
    %v2221 = vsel %vm523, %v2201, 0
    %2223 = vmatprep.subr.bf16.mxu0 0
    %2224 = vmatpush1.bf16.msra.mxu0 %v2216
    %2225 = vmatprep.subr.bf16.mxu0 0
    %2226 = vmatpush1.bf16.msra.mxu0 %v2217
    %2227 = vmatprep.subr.bf16.mxu0 0
    %2228 = vmatpush1.bf16.msra.mxu0 0
    %2229 = vmatprep.subr.bf16.mxu0 0
    %2230 = vmatpush1.bf16.msra.mxu0 0
    %2231 = vmatprep.subr.bf16.mxu0 0
    %2232 = vmatpush1.bf16.msra.mxu0 0
    %2233 = vmatprep.subr.bf16.mxu0 0
    %2234 = vmatpush1.bf16.msra.mxu0 0
    %2235 = vmatprep.subr.bf16.mxu0 0
    %2236 = vmatpush1.bf16.msra.mxu0 0
    %2237 = vmatprep.subr.bf16.mxu0 0
    %2238 = vmatpush1.bf16.msra.mxu0 0
    %2239 = vmatprep.subr.bf16.mxu0 0
    %2240 = vmatpush1.bf16.msra.mxu0 0
    %2241 = vmatprep.subr.bf16.mxu0 0
    %2242 = vmatpush1.bf16.msra.mxu0 0
    %2243 = vmatprep.subr.bf16.mxu0 0
    %2244 = vmatpush1.bf16.msra.mxu0 0
    %2245 = vmatprep.subr.bf16.mxu0 0
    %2246 = vmatpush1.bf16.msra.mxu0 0
    %2247 = vmatprep.subr.bf16.mxu0 0
    %2248 = vmatpush1.bf16.msra.mxu0 0
    %2249 = vmatprep.subr.bf16.mxu0 0
    %2250 = vmatpush1.bf16.msra.mxu0 0
    %2251 = vmatprep.subr.bf16.mxu0 0
    %2252 = vmatpush1.bf16.msra.mxu0 0
    %2253 = vmatprep.subr.bf16.mxu0 0
    %2254 = vmatpush1.bf16.msra.mxu0 0
    %2255 = vmatprep.mubr.bf16.mxu0 0
    %2256 = vmatmul.mubr.bf16.gmra.mrb[0].mxu0 %v2221
    %v2257 = vpop.f32.mrb[0].mxu0
    %v2258 = vadd.f32 %v2206, %v2257
    %v2259 = vpop.f32.mrb[0].mxu0
    %v2260 = vpop.f32.mrb[0].mxu0
    %v2261 = vpop.f32.mrb[0].mxu0
    %2262 = vdwg.mxu0
    %v2263 = vsel %vm804, %v2258, 0.0
    %2272 = vrot.lane.b32.xlu0 %v413, 8
    %v2273 = vpop.permute.xlu0 %2272
    %2274 = vrot.lane.b32.xlu0 %v414, 8
    %v2275 = vpop.permute.xlu0 %2274
    %2276 = vrot.lane.b32.xlu0 %v415, 8
    %v2277 = vpop.permute.xlu0 %2276
    %2278 = vrot.lane.b32.xlu0 %v416, 8
    %v2279 = vpop.permute.xlu0 %2278
    %2280 = vrot.lane.b32.xlu0 %v417, 8
    %v2281 = vpop.permute.xlu0 %2280
    %2282 = vrot.lane.b32.xlu0 %v418, 8
    %v2283 = vpop.permute.xlu0 %2282
    %2284 = vrot.lane.b32.xlu0 %v419, 8
    %v2285 = vpop.permute.xlu0 %2284
    %2286 = vrot.lane.b32.xlu0 %v420, 8
    %v2287 = vpop.permute.xlu0 %2286
    %v2296 = vsel %vm718, %v1365, %v2273
    %v2297 = vsel %vm718, %v1368, %v2275
    %v2298 = vsel %vm718, %v1373, %v2277
    %v2299 = vsel %vm718, %v1376, %v2279
    %v2300 = vsel %vm718, %v1381, %v2281
    %v2301 = vsel %vm718, %v1384, %v2283
    %v2302 = vsel %vm718, %v1389, %v2285
    %v2303 = vsel %vm718, %v1392, %v2287
    %v2304 = vld [vmem:[%s67] sm:$0xf]
    %v2305 = vld [vmem:[%s67 + $0x4] sm:$0x3]
    %v2306 = vld [vmem:[%s69] sm:$0xf]
    %v2307 = vld [vmem:[%s69 + $0x4] sm:$0x3]
    %v2308 = vld [vmem:[%s71] sm:$0xf]
    %v2309 = vld [vmem:[%s71 + $0x4] sm:$0x3]
    %v2310 = vld [vmem:[%s73] sm:$0x7]
    %v2311 = vld [vmem:[#allocation9] sm:$0x1]
    %v2312 = vld [vmem:[%s77] sm:$0xf]
    %v2313 = vld [vmem:[%s77 + $0x4] sm:$0xf]
    %v2314 = vld [vmem:[%s77 + $0x8] sm:$0xf]
    %v2315 = vld [vmem:[%s77 + $0xc] sm:$0xf]
    %v2316 = vld [vmem:[#allocation10] sm:$0x1]
    %v2317 = vld [vmem:[%s81] sm:$0xf]
    %v2318 = vld [vmem:[%s81 + $0x4] sm:$0xf]
    %v2319 = vld [vmem:[%s81 + $0x8] sm:$0xf]
    %v2320 = vld [vmem:[%s81 + $0xc] sm:$0xf]
    %v2321 = vld [vmem:[#allocation12] sm:$0x1]
    %v2322 = vld [vmem:[%s85] sm:$0xf]
    %v2323 = vld [vmem:[%s85 + $0x4] sm:$0x3]
    %v2324 = vld [vmem:[%s87] sm:$0xf]
    %v2325 = vld [vmem:[%s89] sm:$0x7]
    %v2326 = vld [vmem:[#allocation13] sm:$0x1]
    %v2327 = vld [vmem:[%s93] sm:$0xf]
    %v2328 = vld [vmem:[%s93 + $0x4] sm:$0xf]
    %v2329 = vld [vmem:[%s93 + $0x8] sm:$0xf]
    %v2330 = vld [vmem:[%s93 + $0xc] sm:$0xf]
    %v2331 = vld [vmem:[#allocation15] sm:$0x1]
    %v2332 = vld [vmem:[%s97] sm:$0xf]
    %v2333 = vld [vmem:[%s97 + $0x4] sm:$0xf]
    %v2334 = vld [vmem:[%s97 + $0x8] sm:$0xf]
    %v2335 = vld [vmem:[%s97 + $0xc] sm:$0xf]
    %v2336 = vld [vmem:[#allocation16] sm:$0x1]
    %v2337 = vpack.c.bf16 %v1901, %v1900
    %v2338 = vpack.c.bf16 %v1903, %v1902
    %2339 = vmatprep.subr.bf16.mxu0 0
    %2340 = vmatpush1.bf16.msra.mxu0 %v2337
    %2341 = vmatprep.subr.bf16.mxu0 0
    %2342 = vmatpush1.bf16.msra.mxu0 %v2338
    %2343 = vmatprep.subr.bf16.mxu0 0
    %2344 = vmatpush1.bf16.msra.mxu0 0
    %2345 = vmatprep.subr.bf16.mxu0 0
    %2346 = vmatpush1.bf16.msra.mxu0 0
    %2347 = vmatprep.subr.bf16.mxu0 0
    %2348 = vmatpush1.bf16.msra.mxu0 0
    %2349 = vmatprep.subr.bf16.mxu0 0
    %2350 = vmatpush1.bf16.msra.mxu0 0
    %2351 = vmatprep.subr.bf16.mxu0 0
    %2352 = vmatpush1.bf16.msra.mxu0 0
    %2353 = vmatprep.subr.bf16.mxu0 0
    %2354 = vmatpush1.bf16.msra.mxu0 0
    %2355 = vmatprep.subr.bf16.mxu0 0
    %2356 = vmatpush1.bf16.msra.mxu0 0
    %2357 = vmatprep.subr.bf16.mxu0 0
    %2358 = vmatpush1.bf16.msra.mxu0 0
    %2359 = vmatprep.subr.bf16.mxu0 0
    %2360 = vmatpush1.bf16.msra.mxu0 0
    %2361 = vmatprep.subr.bf16.mxu0 0
    %2362 = vmatpush1.bf16.msra.mxu0 0
    %2363 = vmatprep.subr.bf16.mxu0 0
    %2364 = vmatpush1.bf16.msra.mxu0 0
    %2365 = vmatprep.subr.bf16.mxu0 0
    %2366 = vmatpush1.bf16.msra.mxu0 0
    %2367 = vmatprep.subr.bf16.mxu0 0
    %2368 = vmatpush1.bf16.msra.mxu0 0
    %2369 = vmatprep.subr.bf16.mxu0 0
    %2370 = vmatpush1.bf16.msra.mxu0 0
    %2371 = vmatprep.mubr.bf16.mxu0 0
    %2372 = vmatmul.mubr.bf16.gmra.mrb[0].mxu0 %v525
    %v2373 = vpop.f32.mrb[0].mxu0
    %v2374 = vadd.f32 0.0, %v2373
    %v2375 = vpop.f32.mrb[0].mxu0
    %v2376 = vpop.f32.mrb[0].mxu0
    %v2377 = vadd.f32 0.0, %v2376
    %v2378 = vpop.f32.mrb[0].mxu0
    %2379 = vmatprep.mubr.bf16.mxu0 0
    %2380 = vmatmul.mubr.bf16.gmra.mrb[0].mxu0 %v528
    %v2381 = vpop.f32.mrb[0].mxu0
    %v2382 = vadd.f32 0.0, %v2381
    %v2383 = vpop.f32.mrb[0].mxu0
    %v2384 = vpop.f32.mrb[0].mxu0
    %v2385 = vadd.f32 0.0, %v2384
    %v2386 = vpop.f32.mrb[0].mxu0
    %2387 = vmatprep.mubr.bf16.mxu0 0
    %2388 = vmatmul.mubr.bf16.gmra.mrb[0].mxu0 %v531
    %v2389 = vpop.f32.mrb[0].mxu0
    %v2390 = vadd.f32 0.0, %v2389
    %v2391 = vpop.f32.mrb[0].mxu0
    %v2392 = vpop.f32.mrb[0].mxu0
    %v2393 = vadd.f32 0.0, %v2392
    %v2394 = vpop.f32.mrb[0].mxu0
    %2395 = vmatprep.mubr.bf16.mxu0 0
    %2396 = vmatmul.mubr.bf16.gmra.mrb[0].mxu0 %v534
    %v2397 = vpop.f32.mrb[0].mxu0
    %v2398 = vadd.f32 0.0, %v2397
    %v2399 = vpop.f32.mrb[0].mxu0
    %v2400 = vpop.f32.mrb[0].mxu0
    %v2401 = vadd.f32 0.0, %v2400
    %v2402 = vpop.f32.mrb[0].mxu0
    %2403 = vdwg.mxu0
    %2404 = vmatprep.subr.bf16.mxu0 0
    %2405 = vmatpush1.bf16.msra.mxu0 %v2337
    %2406 = vmatprep.subr.bf16.mxu0 0
    %2407 = vmatpush1.bf16.msra.mxu0 %v2338
    %2408 = vmatprep.subr.bf16.mxu0 0
    %2409 = vmatpush1.bf16.msra.mxu0 0
    %2410 = vmatprep.subr.bf16.mxu0 0
    %2411 = vmatpush1.bf16.msra.mxu0 0
    %2412 = vmatprep.subr.bf16.mxu0 0
    %2413 = vmatpush1.bf16.msra.mxu0 0
    %2414 = vmatprep.subr.bf16.mxu0 0
    %2415 = vmatpush1.bf16.msra.mxu0 0
    %2416 = vmatprep.subr.bf16.mxu0 0
    %2417 = vmatpush1.bf16.msra.mxu0 0
    %2418 = vmatprep.subr.bf16.mxu0 0
    %2419 = vmatpush1.bf16.msra.mxu0 0
    %2420 = vmatprep.subr.bf16.mxu0 0
    %2421 = vmatpush1.bf16.msra.mxu0 0
    %2422 = vmatprep.subr.bf16.mxu0 0
    %2423 = vmatpush1.bf16.msra.mxu0 0
    %2424 = vmatprep.subr.bf16.mxu0 0
    %2425 = vmatpush1.bf16.msra.mxu0 0
    %2426 = vmatprep.subr.bf16.mxu0 0
    %2427 = vmatpush1.bf16.msra.mxu0 0
    %2428 = vmatprep.subr.bf16.mxu0 0
    %2429 = vmatpush1.bf16.msra.mxu0 0
    %2430 = vmatprep.subr.bf16.mxu0 0
    %2431 = vmatpush1.bf16.msra.mxu0 0
    %2432 = vmatprep.subr.bf16.mxu0 0
    %2433 = vmatpush1.bf16.msra.mxu0 0
    %2434 = vmatprep.subr.bf16.mxu0 0
    %2435 = vmatpush1.bf16.msra.mxu0 0
    %2436 = vmatprep.mubr.bf16.mxu0 0
    %2437 = vmatmul.mubr.bf16.gmra.mrb[0].mxu0 %v622
    %v2438 = vpop.f32.mrb[0].mxu0
    %v2439 = vadd.f32 0.0, %v2438
    %v2440 = vpop.f32.mrb[0].mxu0
    %v2441 = vpop.f32.mrb[0].mxu0
    %v2442 = vadd.f32 0.0, %v2441
    %v2443 = vpop.f32.mrb[0].mxu0
    %2444 = vmatprep.mubr.bf16.mxu0 0
    %2445 = vmatmul.mubr.bf16.gmra.mrb[0].mxu0 %v625
    %v2446 = vpop.f32.mrb[0].mxu0
    %v2447 = vadd.f32 0.0, %v2446
    %v2448 = vpop.f32.mrb[0].mxu0
    %v2449 = vpop.f32.mrb[0].mxu0
    %v2450 = vadd.f32 0.0, %v2449
    %v2451 = vpop.f32.mrb[0].mxu0
    %2452 = vmatprep.mubr.bf16.mxu0 0
    %2453 = vmatmul.mubr.bf16.gmra.mrb[0].mxu0 %v628
    %v2454 = vpop.f32.mrb[0].mxu0
    %v2455 = vadd.f32 0.0, %v2454
    %v2456 = vpop.f32.mrb[0].mxu0
    %v2457 = vpop.f32.mrb[0].mxu0
    %v2458 = vadd.f32 0.0, %v2457
    %v2459 = vpop.f32.mrb[0].mxu0
    %2460 = vmatprep.mubr.bf16.mxu0 0
    %2461 = vmatmul.mubr.bf16.gmra.mrb[0].mxu0 %v631
    %v2462 = vpop.f32.mrb[0].mxu0
    %v2463 = vadd.f32 0.0, %v2462
    %v2464 = vpop.f32.mrb[0].mxu0
    %v2465 = vpop.f32.mrb[0].mxu0
    %v2466 = vadd.f32 0.0, %v2465
    %v2467 = vpop.f32.mrb[0].mxu0
    %2468 = vdwg.mxu0
    %v2469 = vpack.c.bf16 %v2263, %v2263
    %v2471 = vsel %vm731, %v2469, 0
    %2473 = vmatprep.subr.bf16.mxu0 0
    %2474 = vmatpush1.bf16.msra.mxu0 %v2471
    %2475 = vmatprep.subr.bf16.mxu0 0
    %2476 = vmatpush1.bf16.msra.mxu0 0
    %2477 = vmatprep.subr.bf16.mxu0 0
    %2478 = vmatpush1.bf16.msra.mxu0 0
    %2479 = vmatprep.subr.bf16.mxu0 0
    %2480 = vmatpush1.bf16.msra.mxu0 0
    %2481 = vmatprep.subr.bf16.mxu0 0
    %2482 = vmatpush1.bf16.msra.mxu0 0
    %2483 = vmatprep.subr.bf16.mxu0 0
    %2484 = vmatpush1.bf16.msra.mxu0 0
    %2485 = vmatprep.subr.bf16.mxu0 0
    %2486 = vmatpush1.bf16.msra.mxu0 0
    %2487 = vmatprep.subr.bf16.mxu0 0
    %2488 = vmatpush1.bf16.msra.mxu0 0
    %2489 = vmatprep.subr.bf16.mxu0 0
    %2490 = vmatpush1.bf16.msra.mxu0 0
    %2491 = vmatprep.subr.bf16.mxu0 0
    %2492 = vmatpush1.bf16.msra.mxu0 0
    %2493 = vmatprep.subr.bf16.mxu0 0
    %2494 = vmatpush1.bf16.msra.mxu0 0
    %2495 = vmatprep.subr.bf16.mxu0 0
    %2496 = vmatpush1.bf16.msra.mxu0 0
    %2497 = vmatprep.subr.bf16.mxu0 0
    %2498 = vmatpush1.bf16.msra.mxu0 0
    %2499 = vmatprep.subr.bf16.mxu0 0
    %2500 = vmatpush1.bf16.msra.mxu0 0
    %2501 = vmatprep.subr.bf16.mxu0 0
    %2502 = vmatpush1.bf16.msra.mxu0 0
    %2503 = vmatprep.subr.bf16.mxu0 0
    %2504 = vmatpush1.bf16.msra.mxu0 0
    %2505 = vmatprep.mubr.bf16.mxu0 0
    %2506 = vmatmul.mubr.bf16.gmra.mrb[0].mxu0 %v720
    %v2507 = vpop.f32.mrb[0].mxu0
    %v2508 = vadd.f32 0.0, %v2507
    %v2509 = vpop.f32.mrb[0].mxu0
    %v2510 = vpop.f32.mrb[0].mxu0
    %v2511 = vadd.f32 0.0, %v2510
    %v2512 = vpop.f32.mrb[0].mxu0
    %2513 = vmatprep.mubr.bf16.mxu0 0
    %2514 = vmatmul.mubr.bf16.gmra.mrb[0].mxu0 %v723
    %v2515 = vpop.f32.mrb[0].mxu0
    %v2516 = vadd.f32 0.0, %v2515
    %v2517 = vpop.f32.mrb[0].mxu0
    %v2518 = vpop.f32.mrb[0].mxu0
    %v2519 = vadd.f32 0.0, %v2518
    %v2520 = vpop.f32.mrb[0].mxu0
    %2521 = vmatprep.mubr.bf16.mxu0 0
    %2522 = vmatmul.mubr.bf16.gmra.mrb[0].mxu0 %v726
    %v2523 = vpop.f32.mrb[0].mxu0
    %v2524 = vadd.f32 0.0, %v2523
    %v2525 = vpop.f32.mrb[0].mxu0
    %v2526 = vpop.f32.mrb[0].mxu0
    %v2527 = vadd.f32 0.0, %v2526
    %v2528 = vpop.f32.mrb[0].mxu0
    %2529 = vmatprep.mubr.bf16.mxu0 0
    %2530 = vmatmul.mubr.bf16.gmra.mrb[0].mxu0 %v729
    %v2531 = vpop.f32.mrb[0].mxu0
    %v2532 = vadd.f32 0.0, %v2531
    %v2533 = vpop.f32.mrb[0].mxu0
    %v2534 = vpop.f32.mrb[0].mxu0
    %v2535 = vadd.f32 0.0, %v2534
    %v2536 = vpop.f32.mrb[0].mxu0
    %2537 = vdwg.mxu0
    %v2538 = vpack.c.bf16 %v2377, %v2374
    %v2539 = vpack.c.bf16 %v2385, %v2382
    %v2540 = vpack.c.bf16 %v2393, %v2390
    %v2541 = vpack.c.bf16 %v2401, %v2398
    %v2544 = vunpack.c.l.b16 %v2304
    %v2545 = vunpack.c.l.b16 %v2305
    %v2546 = vpack.c.b16 %v2545, %v2544
    %vm2547 = vcmask 97280
    %v2549 = vsel %vm2547, %v2538, 0
    %v2552 = vsel %vm2547, %v2539, 0
    %v2555 = vsel %vm2547, %v2540, 0
    %v2558 = vsel %vm2547, %v2541, 0
    %vm2560 = vcmask 1045504
    %v2562 = vsel %vm2560, %v2546, 0
    %2564 = vmatprep.subr.bf16.mxu0 0
    %2565 = vmatpush1.bf16.msra.mxu0 %v2562
    %2566 = vmatprep.subr.bf16.mxu0 0
    %2567 = vmatpush1.bf16.msra.mxu0 0
    %2568 = vmatprep.subr.bf16.mxu0 0
    %2569 = vmatpush1.bf16.msra.mxu0 0
    %2570 = vmatprep.subr.bf16.mxu0 0
    %2571 = vmatpush1.bf16.msra.mxu0 0
    %2572 = vmatprep.subr.bf16.mxu0 0
    %2573 = vmatpush1.bf16.msra.mxu0 0
    %2574 = vmatprep.subr.bf16.mxu0 0
    %2575 = vmatpush1.bf16.msra.mxu0 0
    %2576 = vmatprep.subr.bf16.mxu0 0
    %2577 = vmatpush1.bf16.msra.mxu0 0
    %2578 = vmatprep.subr.bf16.mxu0 0
    %2579 = vmatpush1.bf16.msra.mxu0 0
    %2580 = vmatprep.subr.bf16.mxu0 0
    %2581 = vmatpush1.bf16.msra.mxu0 0
    %2582 = vmatprep.subr.bf16.mxu0 0
    %2583 = vmatpush1.bf16.msra.mxu0 0
    %2584 = vmatprep.subr.bf16.mxu0 0
    %2585 = vmatpush1.bf16.msra.mxu0 0
    %2586 = vmatprep.subr.bf16.mxu0 0
    %2587 = vmatpush1.bf16.msra.mxu0 0
    %2588 = vmatprep.subr.bf16.mxu0 0
    %2589 = vmatpush1.bf16.msra.mxu0 0
    %2590 = vmatprep.subr.bf16.mxu0 0
    %2591 = vmatpush1.bf16.msra.mxu0 0
    %2592 = vmatprep.subr.bf16.mxu0 0
    %2593 = vmatpush1.bf16.msra.mxu0 0
    %2594 = vmatprep.subr.bf16.mxu0 0
    %2595 = vmatpush1.bf16.msra.mxu0 0
    %2596 = vmatprep.mubr.bf16.mxu0 0
    %2597 = vmatmul.mubr.bf16.gmra.mrb[0].mxu0 %v2549
    %v2598 = vpop.f32.mrb[0].mxu0
    %v2599 = vadd.f32 0.0, %v2598
    %v2600 = vpop.f32.mrb[0].mxu0
    %v2601 = vpop.f32.mrb[0].mxu0
    %v2602 = vadd.f32 0.0, %v2601
    %v2603 = vpop.f32.mrb[0].mxu0
    %2604 = vmatprep.mubr.bf16.mxu0 0
    %2605 = vmatmul.mubr.bf16.gmra.mrb[0].mxu0 %v2552
    %v2606 = vpop.f32.mrb[0].mxu0
    %v2607 = vadd.f32 0.0, %v2606
    %v2608 = vpop.f32.mrb[0].mxu0
    %v2609 = vpop.f32.mrb[0].mxu0
    %v2610 = vadd.f32 0.0, %v2609
    %v2611 = vpop.f32.mrb[0].mxu0
    %2612 = vmatprep.mubr.bf16.mxu0 0
    %2613 = vmatmul.mubr.bf16.gmra.mrb[0].mxu0 %v2555
    %v2614 = vpop.f32.mrb[0].mxu0
    %v2615 = vadd.f32 0.0, %v2614
    %v2616 = vpop.f32.mrb[0].mxu0
    %v2617 = vpop.f32.mrb[0].mxu0
    %v2618 = vadd.f32 0.0, %v2617
    %v2619 = vpop.f32.mrb[0].mxu0
    %2620 = vmatprep.mubr.bf16.mxu0 0
    %2621 = vmatmul.mubr.bf16.gmra.mrb[0].mxu0 %v2558
    %v2622 = vpop.f32.mrb[0].mxu0
    %v2623 = vadd.f32 0.0, %v2622
    %v2624 = vpop.f32.mrb[0].mxu0
    %v2625 = vpop.f32.mrb[0].mxu0
    %v2626 = vadd.f32 0.0, %v2625
    %v2627 = vpop.f32.mrb[0].mxu0
    %2628 = vdwg.mxu0
    %v2630 = vlaneseq
    %v2631 = vshrl.u32 %v2630, 7
    %v2632 = vsub.s32 0, %v2631
    %v2633 = vrot.slane %v2311, %v2632
    %v2635 = vadd.f32 %v2633, %v2599
    %v2636 = vadd.f32 %v2633, %v2602
    %v2637 = vadd.f32 %v2633, %v2607
    %v2638 = vadd.f32 %v2633, %v2610
    %v2639 = vadd.f32 %v2633, %v2615
    %v2640 = vadd.f32 %v2633, %v2618
    %v2641 = vadd.f32 %v2633, %v2623
    %v2642 = vadd.f32 %v2633, %v2626
    %v2643 = vpack.c.bf16 %v2442, %v2439
    %v2644 = vpack.c.bf16 %v2450, %v2447
    %v2645 = vpack.c.bf16 %v2458, %v2455
    %v2646 = vpack.c.bf16 %v2466, %v2463
    %v2649 = vunpack.c.l.b16 %v2306
    %v2650 = vunpack.c.l.b16 %v2307
    %v2651 = vpack.c.b16 %v2650, %v2649
    %v2653 = vsel %vm2547, %v2643, 0
    %v2656 = vsel %vm2547, %v2644, 0
    %v2659 = vsel %vm2547, %v2645, 0
    %v2662 = vsel %vm2547, %v2646, 0
    %v2665 = vsel %vm2560, %v2651, 0
    %2667 = vmatprep.subr.bf16.mxu0 0
    %2668 = vmatpush1.bf16.msra.mxu0 %v2665
    %2669 = vmatprep.subr.bf16.mxu0 0
    %2670 = vmatpush1.bf16.msra.mxu0 0
    %2671 = vmatprep.subr.bf16.mxu0 0
    %2672 = vmatpush1.bf16.msra.mxu0 0
    %2673 = vmatprep.subr.bf16.mxu0 0
    %2674 = vmatpush1.bf16.msra.mxu0 0
    %2675 = vmatprep.subr.bf16.mxu0 0
    %2676 = vmatpush1.bf16.msra.mxu0 0
    %2677 = vmatprep.subr.bf16.mxu0 0
    %2678 = vmatpush1.bf16.msra.mxu0 0
    %2679 = vmatprep.subr.bf16.mxu0 0
    %2680 = vmatpush1.bf16.msra.mxu0 0
    %2681 = vmatprep.subr.bf16.mxu0 0
    %2682 = vmatpush1.bf16.msra.mxu0 0
    %2683 = vmatprep.subr.bf16.mxu0 0
    %2684 = vmatpush1.bf16.msra.mxu0 0
    %2685 = vmatprep.subr.bf16.mxu0 0
    %2686 = vmatpush1.bf16.msra.mxu0 0
    %2687 = vmatprep.subr.bf16.mxu0 0
    %2688 = vmatpush1.bf16.msra.mxu0 0
    %2689 = vmatprep.subr.bf16.mxu0 0
    %2690 = vmatpush1.bf16.msra.mxu0 0
    %2691 = vmatprep.subr.bf16.mxu0 0
    %2692 = vmatpush1.bf16.msra.mxu0 0
    %2693 = vmatprep.subr.bf16.mxu0 0
    %2694 = vmatpush1.bf16.msra.mxu0 0
    %2695 = vmatprep.subr.bf16.mxu0 0
    %2696 = vmatpush1.bf16.msra.mxu0 0
    %2697 = vmatprep.subr.bf16.mxu0 0
    %2698 = vmatpush1.bf16.msra.mxu0 0
    %2699 = vmatprep.mubr.bf16.mxu0 0
    %2700 = vmatmul.mubr.bf16.gmra.mrb[0].mxu0 %v2653
    %v2701 = vpop.f32.mrb[0].mxu0
    %v2702 = vadd.f32 0.0, %v2701
    %v2703 = vpop.f32.mrb[0].mxu0
    %v2704 = vpop.f32.mrb[0].mxu0
    %v2705 = vadd.f32 0.0, %v2704
    %v2706 = vpop.f32.mrb[0].mxu0
    %2707 = vmatprep.mubr.bf16.mxu0 0
    %2708 = vmatmul.mubr.bf16.gmra.mrb[0].mxu0 %v2656
    %v2709 = vpop.f32.mrb[0].mxu0
    %v2710 = vadd.f32 0.0, %v2709
    %v2711 = vpop.f32.mrb[0].mxu0
    %v2712 = vpop.f32.mrb[0].mxu0
    %v2713 = vadd.f32 0.0, %v2712
    %v2714 = vpop.f32.mrb[0].mxu0
    %2715 = vmatprep.mubr.bf16.mxu0 0
    %2716 = vmatmul.mubr.bf16.gmra.mrb[0].mxu0 %v2659
    %v2717 = vpop.f32.mrb[0].mxu0
    %v2718 = vadd.f32 0.0, %v2717
    %v2719 = vpop.f32.mrb[0].mxu0
    %v2720 = vpop.f32.mrb[0].mxu0
    %v2721 = vadd.f32 0.0, %v2720
    %v2722 = vpop.f32.mrb[0].mxu0
    %2723 = vmatprep.mubr.bf16.mxu0 0
    %2724 = vmatmul.mubr.bf16.gmra.mrb[0].mxu0 %v2662
    %v2725 = vpop.f32.mrb[0].mxu0
    %v2726 = vadd.f32 0.0, %v2725
    %v2727 = vpop.f32.mrb[0].mxu0
    %v2728 = vpop.f32.mrb[0].mxu0
    %v2729 = vadd.f32 0.0, %v2728
    %v2730 = vpop.f32.mrb[0].mxu0
    %2731 = vdwg.mxu0
    %v2732 = vadd.f32 %v2635, %v2702
    %v2733 = vadd.f32 %v2636, %v2705
    %v2734 = vadd.f32 %v2637, %v2710
    %v2735 = vadd.f32 %v2638, %v2713
    %v2736 = vadd.f32 %v2639, %v2718
    %v2737 = vadd.f32 %v2640, %v2721
    %v2738 = vadd.f32 %v2641, %v2726
    %v2739 = vadd.f32 %v2642, %v2729
    %v2740 = vpack.c.bf16 %v2297, %v2296
    %v2741 = vpack.c.bf16 %v2299, %v2298
    %v2742 = vpack.c.bf16 %v2301, %v2300
    %v2743 = vpack.c.bf16 %v2303, %v2302
    %v2746 = vunpack.c.l.b16 %v2308
    %v2747 = vunpack.c.l.b16 %v2309
    %v2748 = vpack.c.b16 %v2747, %v2746
    %vm2749 = vcmask 89088
    %v2751 = vsel %vm2749, %v2740, 0
    %v2754 = vsel %vm2749, %v2741, 0
    %v2757 = vsel %vm2749, %v2742, 0
    %v2760 = vsel %vm2749, %v2743, 0
    %vm2762 = vcmask 1044480
    %v2763 = vsel %vm2762, 4294967295, 65535
    %v2764 = vsel %vm2560, %v2763, 0
    %v2766 = vand.u32 %v2748, %v2764
    %2768 = vmatprep.subr.bf16.mxu0 0
    %2769 = vmatpush1.bf16.msra.mxu0 %v2766
    %2770 = vmatprep.subr.bf16.mxu0 0
    %2771 = vmatpush1.bf16.msra.mxu0 0
    %2772 = vmatprep.subr.bf16.mxu0 0
    %2773 = vmatpush1.bf16.msra.mxu0 0
    %2774 = vmatprep.subr.bf16.mxu0 0
    %2775 = vmatpush1.bf16.msra.mxu0 0
    %2776 = vmatprep.subr.bf16.mxu0 0
    %2777 = vmatpush1.bf16.msra.mxu0 0
    %2778 = vmatprep.subr.bf16.mxu0 0
    %2779 = vmatpush1.bf16.msra.mxu0 0
    %2780 = vmatprep.subr.bf16.mxu0 0
    %2781 = vmatpush1.bf16.msra.mxu0 0
    %2782 = vmatprep.subr.bf16.mxu0 0
    %2783 = vmatpush1.bf16.msra.mxu0 0
    %2784 = vmatprep.subr.bf16.mxu0 0
    %2785 = vmatpush1.bf16.msra.mxu0 0
    %2786 = vmatprep.subr.bf16.mxu0 0
    %2787 = vmatpush1.bf16.msra.mxu0 0
    %2788 = vmatprep.subr.bf16.mxu0 0
    %2789 = vmatpush1.bf16.msra.mxu0 0
    %2790 = vmatprep.subr.bf16.mxu0 0
    %2791 = vmatpush1.bf16.msra.mxu0 0
    %2792 = vmatprep.subr.bf16.mxu0 0
    %2793 = vmatpush1.bf16.msra.mxu0 0
    %2794 = vmatprep.subr.bf16.mxu0 0
    %2795 = vmatpush1.bf16.msra.mxu0 0
    %2796 = vmatprep.subr.bf16.mxu0 0
    %2797 = vmatpush1.bf16.msra.mxu0 0
    %2798 = vmatprep.subr.bf16.mxu0 0
    %2799 = vmatpush1.bf16.msra.mxu0 0
    %2800 = vmatprep.mubr.bf16.mxu0 0
    %2801 = vmatmul.mubr.bf16.gmra.mrb[0].mxu0 %v2751
    %v2802 = vpop.f32.mrb[0].mxu0
    %v2803 = vadd.f32 0.0, %v2802
    %v2804 = vpop.f32.mrb[0].mxu0
    %v2805 = vpop.f32.mrb[0].mxu0
    %v2806 = vadd.f32 0.0, %v2805
    %v2807 = vpop.f32.mrb[0].mxu0
    %2808 = vmatprep.mubr.bf16.mxu0 0
    %2809 = vmatmul.mubr.bf16.gmra.mrb[0].mxu0 %v2754
    %v2810 = vpop.f32.mrb[0].mxu0
    %v2811 = vadd.f32 0.0, %v2810
    %v2812 = vpop.f32.mrb[0].mxu0
    %v2813 = vpop.f32.mrb[0].mxu0
    %v2814 = vadd.f32 0.0, %v2813
    %v2815 = vpop.f32.mrb[0].mxu0
    %2816 = vmatprep.mubr.bf16.mxu0 0
    %2817 = vmatmul.mubr.bf16.gmra.mrb[0].mxu0 %v2757
    %v2818 = vpop.f32.mrb[0].mxu0
    %v2819 = vadd.f32 0.0, %v2818
    %v2820 = vpop.f32.mrb[0].mxu0
    %v2821 = vpop.f32.mrb[0].mxu0
    %v2822 = vadd.f32 0.0, %v2821
    %v2823 = vpop.f32.mrb[0].mxu0
    %2824 = vmatprep.mubr.bf16.mxu0 0
    %2825 = vmatmul.mubr.bf16.gmra.mrb[0].mxu0 %v2760
    %v2826 = vpop.f32.mrb[0].mxu0
    %v2827 = vadd.f32 0.0, %v2826
    %v2828 = vpop.f32.mrb[0].mxu0
    %v2829 = vpop.f32.mrb[0].mxu0
    %v2830 = vadd.f32 0.0, %v2829
    %v2831 = vpop.f32.mrb[0].mxu0
    %2832 = vdwg.mxu0
    %v2833 = vadd.f32 %v2732, %v2803
    %v2834 = vadd.f32 %v2733, %v2806
    %v2835 = vadd.f32 %v2734, %v2811
    %v2836 = vadd.f32 %v2735, %v2814
    %v2837 = vadd.f32 %v2736, %v2819
    %v2838 = vadd.f32 %v2737, %v2822
    %v2839 = vadd.f32 %v2738, %v2827
    %v2840 = vadd.f32 %v2739, %v2830
    %v2841 = vpack.c.bf16 %v2511, %v2508
    %v2842 = vpack.c.bf16 %v2519, %v2516
    %v2843 = vpack.c.bf16 %v2527, %v2524
    %v2844 = vpack.c.bf16 %v2535, %v2532
    %vm2845 = vcmask 48128
    %v2847 = vsel %vm2845, %v2841, 0
    %v2850 = vsel %vm2845, %v2842, 0
    %v2853 = vsel %vm2845, %v2843, 0
    %v2856 = vsel %vm2845, %v2844, 0
    %vm2858 = vcmask 1042432
    %v2860 = vsel %vm2858, %v2310, 0
    %2862 = vmatprep.subr.bf16.mxu0 0
    %2863 = vmatpush1.bf16.msra.mxu0 %v2860
    %2864 = vmatprep.subr.bf16.mxu0 0
    %2865 = vmatpush1.bf16.msra.mxu0 0
    %2866 = vmatprep.subr.bf16.mxu0 0
    %2867 = vmatpush1.bf16.msra.mxu0 0
    %2868 = vmatprep.subr.bf16.mxu0 0
    %2869 = vmatpush1.bf16.msra.mxu0 0
    %2870 = vmatprep.subr.bf16.mxu0 0
    %2871 = vmatpush1.bf16.msra.mxu0 0
    %2872 = vmatprep.subr.bf16.mxu0 0
    %2873 = vmatpush1.bf16.msra.mxu0 0
    %2874 = vmatprep.subr.bf16.mxu0 0
    %2875 = vmatpush1.bf16.msra.mxu0 0
    %2876 = vmatprep.subr.bf16.mxu0 0
    %2877 = vmatpush1.bf16.msra.mxu0 0
    %2878 = vmatprep.subr.bf16.mxu0 0
    %2879 = vmatpush1.bf16.msra.mxu0 0
    %2880 = vmatprep.subr.bf16.mxu0 0
    %2881 = vmatpush1.bf16.msra.mxu0 0
    %2882 = vmatprep.subr.bf16.mxu0 0
    %2883 = vmatpush1.bf16.msra.mxu0 0
    %2884 = vmatprep.subr.bf16.mxu0 0
    %2885 = vmatpush1.bf16.msra.mxu0 0
    %2886 = vmatprep.subr.bf16.mxu0 0
    %2887 = vmatpush1.bf16.msra.mxu0 0
    %2888 = vmatprep.subr.bf16.mxu0 0
    %2889 = vmatpush1.bf16.msra.mxu0 0
    %2890 = vmatprep.subr.bf16.mxu0 0
    %2891 = vmatpush1.bf16.msra.mxu0 0
    %2892 = vmatprep.subr.bf16.mxu0 0
    %2893 = vmatpush1.bf16.msra.mxu0 0
    %2894 = vmatprep.mubr.bf16.mxu0 0
    %2895 = vmatmul.mubr.bf16.gmra.mrb[0].mxu0 %v2847
    %v2896 = vpop.f32.mrb[0].mxu0
    %v2897 = vadd.f32 0.0, %v2896
    %v2898 = vpop.f32.mrb[0].mxu0
    %v2899 = vpop.f32.mrb[0].mxu0
    %v2900 = vadd.f32 0.0, %v2899
    %v2901 = vpop.f32.mrb[0].mxu0
    %2902 = vmatprep.mubr.bf16.mxu0 0
    %2903 = vmatmul.mubr.bf16.gmra.mrb[0].mxu0 %v2850
    %v2904 = vpop.f32.mrb[0].mxu0
    %v2905 = vadd.f32 0.0, %v2904
    %v2906 = vpop.f32.mrb[0].mxu0
    %v2907 = vpop.f32.mrb[0].mxu0
    %v2908 = vadd.f32 0.0, %v2907
    %v2909 = vpop.f32.mrb[0].mxu0
    %2910 = vmatprep.mubr.bf16.mxu0 0
    %2911 = vmatmul.mubr.bf16.gmra.mrb[0].mxu0 %v2853
    %v2912 = vpop.f32.mrb[0].mxu0
    %v2913 = vadd.f32 0.0, %v2912
    %v2914 = vpop.f32.mrb[0].mxu0
    %v2915 = vpop.f32.mrb[0].mxu0
    %v2916 = vadd.f32 0.0, %v2915
    %v2917 = vpop.f32.mrb[0].mxu0
    %2918 = vmatprep.mubr.bf16.mxu0 0
    %2919 = vmatmul.mubr.bf16.gmra.mrb[0].mxu0 %v2856
    %v2920 = vpop.f32.mrb[0].mxu0
    %v2921 = vadd.f32 0.0, %v2920
    %v2922 = vpop.f32.mrb[0].mxu0
    %v2923 = vpop.f32.mrb[0].mxu0
    %v2924 = vadd.f32 0.0, %v2923
    %v2925 = vpop.f32.mrb[0].mxu0
    %2926 = vdwg.mxu0
    %v2927 = vadd.f32 %v2833, %v2897
    %v2928 = vadd.f32 %v2834, %v2900
    %v2929 = vadd.f32 %v2835, %v2905
    %v2930 = vadd.f32 %v2836, %v2908
    %v2931 = vadd.f32 %v2837, %v2913
    %v2932 = vadd.f32 %v2838, %v2916
    %v2933 = vadd.f32 %v2839, %v2921
    %v2934 = vadd.f32 %v2840, %v2924
    %v2935 = vmax.f32 %v2927, 0.0
    %v2936 = vmax.f32 %v2928, 0.0
    %v2937 = vmax.f32 %v2929, 0.0
    %v2938 = vmax.f32 %v2930, 0.0
    %v2939 = vmax.f32 %v2931, 0.0
    %v2940 = vmax.f32 %v2932, 0.0
    %v2941 = vmax.f32 %v2933, 0.0
    %v2942 = vmax.f32 %v2934, 0.0
    %v2943 = vpack.c.bf16 %v2936, %v2935
    %v2944 = vpack.c.bf16 %v2938, %v2937
    %v2945 = vpack.c.bf16 %v2940, %v2939
    %v2946 = vpack.c.bf16 %v2942, %v2941
    %v2948 = vlaneseq
    %v2949 = vshrl.u32 %v2948, 7
    %v2950 = vsub.s32 0, %v2949
    %v2951 = vrot.slane %v2316, %v2950
    %v2957 = vunpack.c.l.b16 %v2312
    %v2958 = vunpack.c.l.b16 %v2313
    %v2959 = vunpack.c.l.b16 %v2314
    %v2960 = vunpack.c.l.b16 %v2315
    %v2961 = vpack.c.b16 %v2958, %v2957
    %v2962 = vpack.c.b16 %v2960, %v2959
    %v2966 = vsel %vm523, %v2943, 0
    %v2969 = vsel %vm523, %v2944, 0
    %v2972 = vsel %vm523, %v2945, 0
    %v2975 = vsel %vm523, %v2946, 0
    %2977 = vmatprep.subr.bf16.mxu0 0
    %2978 = vmatpush1.bf16.msra.mxu0 %v2961
    %2979 = vmatprep.subr.bf16.mxu0 0
    %2980 = vmatpush1.bf16.msra.mxu0 %v2962
    %2981 = vmatprep.subr.bf16.mxu0 0
    %2982 = vmatpush1.bf16.msra.mxu0 0
    %2983 = vmatprep.subr.bf16.mxu0 0
    %2984 = vmatpush1.bf16.msra.mxu0 0
    %2985 = vmatprep.subr.bf16.mxu0 0
    %2986 = vmatpush1.bf16.msra.mxu0 0
    %2987 = vmatprep.subr.bf16.mxu0 0
    %2988 = vmatpush1.bf16.msra.mxu0 0
    %2989 = vmatprep.subr.bf16.mxu0 0
    %2990 = vmatpush1.bf16.msra.mxu0 0
    %2991 = vmatprep.subr.bf16.mxu0 0
    %2992 = vmatpush1.bf16.msra.mxu0 0
    %2993 = vmatprep.subr.bf16.mxu0 0
    %2994 = vmatpush1.bf16.msra.mxu0 0
    %2995 = vmatprep.subr.bf16.mxu0 0
    %2996 = vmatpush1.bf16.msra.mxu0 0
    %2997 = vmatprep.subr.bf16.mxu0 0
    %2998 = vmatpush1.bf16.msra.mxu0 0
    %2999 = vmatprep.subr.bf16.mxu0 0
    %3000 = vmatpush1.bf16.msra.mxu0 0
    %3001 = vmatprep.subr.bf16.mxu0 0
    %3002 = vmatpush1.bf16.msra.mxu0 0
    %3003 = vmatprep.subr.bf16.mxu0 0
    %3004 = vmatpush1.bf16.msra.mxu0 0
    %3005 = vmatprep.subr.bf16.mxu0 0
    %3006 = vmatpush1.bf16.msra.mxu0 0
    %3007 = vmatprep.subr.bf16.mxu0 0
    %3008 = vmatpush1.bf16.msra.mxu0 0
    %3009 = vmatprep.mubr.bf16.mxu0 0
    %3010 = vmatmul.mubr.bf16.gmra.mrb[0].mxu0 %v2966
    %v3011 = vpop.f32.mrb[0].mxu0
    %v3012 = vadd.f32 %v2951, %v3011
    %v3013 = vpop.f32.mrb[0].mxu0
    %v3014 = vpop.f32.mrb[0].mxu0
    %v3015 = vadd.f32 %v2951, %v3014
    %v3016 = vpop.f32.mrb[0].mxu0
    %3017 = vmatprep.mubr.bf16.mxu0 0
    %3018 = vmatmul.mubr.bf16.gmra.mrb[0].mxu0 %v2969
    %v3019 = vpop.f32.mrb[0].mxu0
    %v3020 = vadd.f32 %v2951, %v3019
    %v3021 = vpop.f32.mrb[0].mxu0
    %v3022 = vpop.f32.mrb[0].mxu0
    %v3023 = vadd.f32 %v2951, %v3022
    %v3024 = vpop.f32.mrb[0].mxu0
    %3025 = vmatprep.mubr.bf16.mxu0 0
    %3026 = vmatmul.mubr.bf16.gmra.mrb[0].mxu0 %v2972
    %v3027 = vpop.f32.mrb[0].mxu0
    %v3028 = vadd.f32 %v2951, %v3027
    %v3029 = vpop.f32.mrb[0].mxu0
    %v3030 = vpop.f32.mrb[0].mxu0
    %v3031 = vadd.f32 %v2951, %v3030
    %v3032 = vpop.f32.mrb[0].mxu0
    %3033 = vmatprep.mubr.bf16.mxu0 0
    %3034 = vmatmul.mubr.bf16.gmra.mrb[0].mxu0 %v2975
    %v3035 = vpop.f32.mrb[0].mxu0
    %v3036 = vadd.f32 %v2951, %v3035
    %v3037 = vpop.f32.mrb[0].mxu0
    %v3038 = vpop.f32.mrb[0].mxu0
    %v3039 = vadd.f32 %v2951, %v3038
    %v3040 = vpop.f32.mrb[0].mxu0
    %3041 = vdwg.mxu0
    %v3042 = vmax.f32 %v3012, 0.0
    %v3043 = vmax.f32 %v3015, 0.0
    %v3044 = vmax.f32 %v3020, 0.0
    %v3045 = vmax.f32 %v3023, 0.0
    %v3046 = vmax.f32 %v3028, 0.0
    %v3047 = vmax.f32 %v3031, 0.0
    %v3048 = vmax.f32 %v3036, 0.0
    %v3049 = vmax.f32 %v3039, 0.0
    %v3050 = vpack.c.bf16 %v3043, %v3042
    %v3051 = vpack.c.bf16 %v3045, %v3044
    %v3052 = vpack.c.bf16 %v3047, %v3046
    %v3053 = vpack.c.bf16 %v3049, %v3048
    %v3055 = vlaneseq
    %v3056 = vshrl.u32 %v3055, 7
    %v3057 = vsub.s32 0, %v3056
    %v3058 = vrot.slane %v2321, %v3057
    %v3064 = vunpack.c.l.b16 %v2317
    %v3065 = vunpack.c.l.b16 %v2318
    %v3066 = vunpack.c.l.b16 %v2319
    %v3067 = vunpack.c.l.b16 %v2320
    %v3068 = vpack.c.b16 %v3065, %v3064
    %v3069 = vpack.c.b16 %v3067, %v3066
    %v3073 = vsel %vm523, %v3050, 0
    %v3076 = vsel %vm523, %v3051, 0
    %v3079 = vsel %vm523, %v3052, 0
    %v3082 = vsel %vm523, %v3053, 0
    %3084 = vmatprep.subr.bf16.mxu0 0
    %3085 = vmatpush1.bf16.msra.mxu0 %v3068
    %3086 = vmatprep.subr.bf16.mxu0 0
    %3087 = vmatpush1.bf16.msra.mxu0 %v3069
    %3088 = vmatprep.subr.bf16.mxu0 0
    %3089 = vmatpush1.bf16.msra.mxu0 0
    %3090 = vmatprep.subr.bf16.mxu0 0
    %3091 = vmatpush1.bf16.msra.mxu0 0
    %3092 = vmatprep.subr.bf16.mxu0 0
    %3093 = vmatpush1.bf16.msra.mxu0 0
    %3094 = vmatprep.subr.bf16.mxu0 0
    %3095 = vmatpush1.bf16.msra.mxu0 0
    %3096 = vmatprep.subr.bf16.mxu0 0
    %3097 = vmatpush1.bf16.msra.mxu0 0
    %3098 = vmatprep.subr.bf16.mxu0 0
    %3099 = vmatpush1.bf16.msra.mxu0 0
    %3100 = vmatprep.subr.bf16.mxu0 0
    %3101 = vmatpush1.bf16.msra.mxu0 0
    %3102 = vmatprep.subr.bf16.mxu0 0
    %3103 = vmatpush1.bf16.msra.mxu0 0
    %3104 = vmatprep.subr.bf16.mxu0 0
    %3105 = vmatpush1.bf16.msra.mxu0 0
    %3106 = vmatprep.subr.bf16.mxu0 0
    %3107 = vmatpush1.bf16.msra.mxu0 0
    %3108 = vmatprep.subr.bf16.mxu0 0
    %3109 = vmatpush1.bf16.msra.mxu0 0
    %3110 = vmatprep.subr.bf16.mxu0 0
    %3111 = vmatpush1.bf16.msra.mxu0 0
    %3112 = vmatprep.subr.bf16.mxu0 0
    %3113 = vmatpush1.bf16.msra.mxu0 0
    %3114 = vmatprep.subr.bf16.mxu0 0
    %3115 = vmatpush1.bf16.msra.mxu0 0
    %3116 = vmatprep.mubr.bf16.mxu0 0
    %3117 = vmatmul.mubr.bf16.gmra.mrb[0].mxu0 %v3073
    %v3118 = vpop.f32.mrb[0].mxu0
    %v3119 = vadd.f32 %v3058, %v3118
    %v3120 = vpop.f32.mrb[0].mxu0
    %v3121 = vpop.f32.mrb[0].mxu0
    %v3122 = vadd.f32 %v3058, %v3121
    %v3123 = vpop.f32.mrb[0].mxu0
    %3124 = vmatprep.mubr.bf16.mxu0 0
    %3125 = vmatmul.mubr.bf16.gmra.mrb[0].mxu0 %v3076
    %v3126 = vpop.f32.mrb[0].mxu0
    %v3127 = vadd.f32 %v3058, %v3126
    %v3128 = vpop.f32.mrb[0].mxu0
    %v3129 = vpop.f32.mrb[0].mxu0
    %v3130 = vadd.f32 %v3058, %v3129
    %v3131 = vpop.f32.mrb[0].mxu0
    %3132 = vmatprep.mubr.bf16.mxu0 0
    %3133 = vmatmul.mubr.bf16.gmra.mrb[0].mxu0 %v3079
    %v3134 = vpop.f32.mrb[0].mxu0
    %v3135 = vadd.f32 %v3058, %v3134
    %v3136 = vpop.f32.mrb[0].mxu0
    %v3137 = vpop.f32.mrb[0].mxu0
    %v3138 = vadd.f32 %v3058, %v3137
    %v3139 = vpop.f32.mrb[0].mxu0
    %3140 = vmatprep.mubr.bf16.mxu0 0
    %3141 = vmatmul.mubr.bf16.gmra.mrb[0].mxu0 %v3082
    %v3142 = vpop.f32.mrb[0].mxu0
    %v3143 = vadd.f32 %v3058, %v3142
    %v3144 = vpop.f32.mrb[0].mxu0
    %v3145 = vpop.f32.mrb[0].mxu0
    %v3146 = vadd.f32 %v3058, %v3145
    %v3147 = vpop.f32.mrb[0].mxu0
    %3148 = vdwg.mxu0
    %v3149 = vpack.c.bf16 %v3122, %v3119
    %v3150 = vpack.c.bf16 %v3130, %v3127
    %v3151 = vpack.c.bf16 %v3138, %v3135
    %v3152 = vpack.c.bf16 %v3146, %v3143
    %3153 = vmatprep.subr.bf16.mxu0 0
    %3154 = vmatpush1.bf16.msra.mxu0 %v3149
    %3155 = vmatprep.subr.bf16.mxu0 0
    %3156 = vmatpush1.bf16.msra.mxu0 %v3150
    %3157 = vmatprep.subr.bf16.mxu0 0
    %3158 = vmatpush1.bf16.msra.mxu0 %v3151
    %3159 = vmatprep.subr.bf16.mxu0 0
    %3160 = vmatpush1.bf16.msra.mxu0 %v3152
    %3161 = vmatprep.subr.bf16.mxu0 0
    %3162 = vmatpush1.bf16.msra.mxu0 0
    %3163 = vmatprep.subr.bf16.mxu0 0
    %3164 = vmatpush1.bf16.msra.mxu0 0
    %3165 = vmatprep.subr.bf16.mxu0 0
    %3166 = vmatpush1.bf16.msra.mxu0 0
    %3167 = vmatprep.subr.bf16.mxu0 0
    %3168 = vmatpush1.bf16.msra.mxu0 0
    %3169 = vmatprep.subr.bf16.mxu0 0
    %3170 = vmatpush1.bf16.msra.mxu0 0
    %3171 = vmatprep.subr.bf16.mxu0 0
    %3172 = vmatpush1.bf16.msra.mxu0 0
    %3173 = vmatprep.subr.bf16.mxu0 0
    %3174 = vmatpush1.bf16.msra.mxu0 0
    %3175 = vmatprep.subr.bf16.mxu0 0
    %3176 = vmatpush1.bf16.msra.mxu0 0
    %3177 = vmatprep.subr.bf16.mxu0 0
    %3178 = vmatpush1.bf16.msra.mxu0 0
    %3179 = vmatprep.subr.bf16.mxu0 0
    %3180 = vmatpush1.bf16.msra.mxu0 0
    %3181 = vmatprep.subr.bf16.mxu0 0
    %3182 = vmatpush1.bf16.msra.mxu0 0
    %3183 = vmatprep.subr.bf16.mxu0 0
    %3184 = vmatpush1.bf16.msra.mxu0 0
    %3185 = vmatprep.mubr.bf16.mxu0 0
    %3186 = vmatmul.mubr.bf16.gmra.mrb[0].mxu0 %v1411
    %v3187 = vpop.f32.mrb[0].mxu0
    %v3188 = vadd.f32 0.0, %v3187
    %v3189 = vpop.f32.mrb[0].mxu0
    %v3190 = vpop.f32.mrb[0].mxu0
    %v3191 = vadd.f32 0.0, %v3190
    %v3192 = vpop.f32.mrb[0].mxu0
    %3193 = vmatprep.mubr.bf16.mxu0 0
    %3194 = vmatmul.mubr.bf16.gmra.mrb[0].mxu0 %v1414
    %v3195 = vpop.f32.mrb[0].mxu0
    %v3196 = vadd.f32 0.0, %v3195
    %v3197 = vpop.f32.mrb[0].mxu0
    %v3198 = vpop.f32.mrb[0].mxu0
    %v3199 = vadd.f32 0.0, %v3198
    %v3200 = vpop.f32.mrb[0].mxu0
    %3201 = vdwg.mxu0
    %3202 = vmatprep.subr.bf16.mxu0 0
    %3203 = vmatpush1.bf16.msra.mxu0 %v2471
    %3204 = vmatprep.subr.bf16.mxu0 0
    %3205 = vmatpush1.bf16.msra.mxu0 0
    %3206 = vmatprep.subr.bf16.mxu0 0
    %3207 = vmatpush1.bf16.msra.mxu0 0
    %3208 = vmatprep.subr.bf16.mxu0 0
    %3209 = vmatpush1.bf16.msra.mxu0 0
    %3210 = vmatprep.subr.bf16.mxu0 0
    %3211 = vmatpush1.bf16.msra.mxu0 0
    %3212 = vmatprep.subr.bf16.mxu0 0
    %3213 = vmatpush1.bf16.msra.mxu0 0
    %3214 = vmatprep.subr.bf16.mxu0 0
    %3215 = vmatpush1.bf16.msra.mxu0 0
    %3216 = vmatprep.subr.bf16.mxu0 0
    %3217 = vmatpush1.bf16.msra.mxu0 0
    %3218 = vmatprep.subr.bf16.mxu0 0
    %3219 = vmatpush1.bf16.msra.mxu0 0
    %3220 = vmatprep.subr.bf16.mxu0 0
    %3221 = vmatpush1.bf16.msra.mxu0 0
    %3222 = vmatprep.subr.bf16.mxu0 0
    %3223 = vmatpush1.bf16.msra.mxu0 0
    %3224 = vmatprep.subr.bf16.mxu0 0
    %3225 = vmatpush1.bf16.msra.mxu0 0
    %3226 = vmatprep.subr.bf16.mxu0 0
    %3227 = vmatpush1.bf16.msra.mxu0 0
    %3228 = vmatprep.subr.bf16.mxu0 0
    %3229 = vmatpush1.bf16.msra.mxu0 0
    %3230 = vmatprep.subr.bf16.mxu0 0
    %3231 = vmatpush1.bf16.msra.mxu0 0
    %3232 = vmatprep.subr.bf16.mxu0 0
    %3233 = vmatpush1.bf16.msra.mxu0 0
    %3234 = vmatprep.mubr.bf16.mxu0 0
    %3235 = vmatmul.mubr.bf16.gmra.mrb[0].mxu0 %v1476
    %v3236 = vpop.f32.mrb[0].mxu0
    %v3237 = vadd.f32 0.0, %v3236
    %v3238 = vpop.f32.mrb[0].mxu0
    %v3239 = vpop.f32.mrb[0].mxu0
    %v3240 = vadd.f32 0.0, %v3239
    %v3241 = vpop.f32.mrb[0].mxu0
    %3242 = vmatprep.mubr.bf16.mxu0 0
    %3243 = vmatmul.mubr.bf16.gmra.mrb[0].mxu0 %v1479
    %v3244 = vpop.f32.mrb[0].mxu0
    %v3245 = vadd.f32 0.0, %v3244
    %v3246 = vpop.f32.mrb[0].mxu0
    %v3247 = vpop.f32.mrb[0].mxu0
    %v3248 = vadd.f32 0.0, %v3247
    %v3249 = vpop.f32.mrb[0].mxu0
    %3250 = vdwg.mxu0
    %v3253 = vunpack.c.l.b16 %v2322
    %v3254 = vunpack.c.l.b16 %v2323
    %v3255 = vpack.c.b16 %v3254, %v3253
    %v3257 = vsel %vm2547, %v2337, 0
    %v3260 = vsel %vm2547, %v2338, 0
    %v3263 = vsel %vm2560, %v3255, 0
    %3265 = vmatprep.subr.bf16.mxu0 0
    %3266 = vmatpush1.bf16.msra.mxu0 %v3263
    %3267 = vmatprep.subr.bf16.mxu0 0
    %3268 = vmatpush1.bf16.msra.mxu0 0
    %3269 = vmatprep.subr.bf16.mxu0 0
    %3270 = vmatpush1.bf16.msra.mxu0 0
    %3271 = vmatprep.subr.bf16.mxu0 0
    %3272 = vmatpush1.bf16.msra.mxu0 0
    %3273 = vmatprep.subr.bf16.mxu0 0
    %3274 = vmatpush1.bf16.msra.mxu0 0
    %3275 = vmatprep.subr.bf16.mxu0 0
    %3276 = vmatpush1.bf16.msra.mxu0 0
    %3277 = vmatprep.subr.bf16.mxu0 0
    %3278 = vmatpush1.bf16.msra.mxu0 0
    %3279 = vmatprep.subr.bf16.mxu0 0
    %3280 = vmatpush1.bf16.msra.mxu0 0
    %3281 = vmatprep.subr.bf16.mxu0 0
    %3282 = vmatpush1.bf16.msra.mxu0 0
    %3283 = vmatprep.subr.bf16.mxu0 0
    %3284 = vmatpush1.bf16.msra.mxu0 0
    %3285 = vmatprep.subr.bf16.mxu0 0
    %3286 = vmatpush1.bf16.msra.mxu0 0
    %3287 = vmatprep.subr.bf16.mxu0 0
    %3288 = vmatpush1.bf16.msra.mxu0 0
    %3289 = vmatprep.subr.bf16.mxu0 0
    %3290 = vmatpush1.bf16.msra.mxu0 0
    %3291 = vmatprep.subr.bf16.mxu0 0
    %3292 = vmatpush1.bf16.msra.mxu0 0
    %3293 = vmatprep.subr.bf16.mxu0 0
    %3294 = vmatpush1.bf16.msra.mxu0 0
    %3295 = vmatprep.subr.bf16.mxu0 0
    %3296 = vmatpush1.bf16.msra.mxu0 0
    %3297 = vmatprep.mubr.bf16.mxu0 0
    %3298 = vmatmul.mubr.bf16.gmra.mrb[0].mxu0 %v3257
    %v3299 = vpop.f32.mrb[0].mxu0
    %v3300 = vadd.f32 0.0, %v3299
    %v3301 = vpop.f32.mrb[0].mxu0
    %v3302 = vpop.f32.mrb[0].mxu0
    %v3303 = vadd.f32 0.0, %v3302
    %v3304 = vpop.f32.mrb[0].mxu0
    %3305 = vmatprep.mubr.bf16.mxu0 0
    %3306 = vmatmul.mubr.bf16.gmra.mrb[0].mxu0 %v3260
    %v3307 = vpop.f32.mrb[0].mxu0
    %v3308 = vadd.f32 0.0, %v3307
    %v3309 = vpop.f32.mrb[0].mxu0
    %v3310 = vpop.f32.mrb[0].mxu0
    %v3311 = vadd.f32 0.0, %v3310
    %v3312 = vpop.f32.mrb[0].mxu0
    %3313 = vdwg.mxu0
    %v3315 = vlaneseq
    %v3316 = vshrl.u32 %v3315, 7
    %v3317 = vsub.s32 0, %v3316
    %v3318 = vrot.slane %v2326, %v3317
    %v3320 = vadd.f32 %v3318, %v3300
    %v3321 = vadd.f32 %v3318, %v3303
    %v3322 = vadd.f32 %v3318, %v3308
    %v3323 = vadd.f32 %v3318, %v3311
    %v3324 = vpack.c.bf16 %v3191, %v3188
    %v3325 = vpack.c.bf16 %v3199, %v3196
    %v3327 = vsel %vm718, %v3324, 0
    %v3330 = vsel %vm718, %v3325, 0
    %v3333 = vsel %vm731, %v2324, 0
    %3335 = vmatprep.subr.bf16.mxu0 0
    %3336 = vmatpush1.bf16.msra.mxu0 %v3333
    %3337 = vmatprep.subr.bf16.mxu0 0
    %3338 = vmatpush1.bf16.msra.mxu0 0
    %3339 = vmatprep.subr.bf16.mxu0 0
    %3340 = vmatpush1.bf16.msra.mxu0 0
    %3341 = vmatprep.subr.bf16.mxu0 0
    %3342 = vmatpush1.bf16.msra.mxu0 0
    %3343 = vmatprep.subr.bf16.mxu0 0
    %3344 = vmatpush1.bf16.msra.mxu0 0
    %3345 = vmatprep.subr.bf16.mxu0 0
    %3346 = vmatpush1.bf16.msra.mxu0 0
    %3347 = vmatprep.subr.bf16.mxu0 0
    %3348 = vmatpush1.bf16.msra.mxu0 0
    %3349 = vmatprep.subr.bf16.mxu0 0
    %3350 = vmatpush1.bf16.msra.mxu0 0
    %3351 = vmatprep.subr.bf16.mxu0 0
    %3352 = vmatpush1.bf16.msra.mxu0 0
    %3353 = vmatprep.subr.bf16.mxu0 0
    %3354 = vmatpush1.bf16.msra.mxu0 0
    %3355 = vmatprep.subr.bf16.mxu0 0
    %3356 = vmatpush1.bf16.msra.mxu0 0
    %3357 = vmatprep.subr.bf16.mxu0 0
    %3358 = vmatpush1.bf16.msra.mxu0 0
    %3359 = vmatprep.subr.bf16.mxu0 0
    %3360 = vmatpush1.bf16.msra.mxu0 0
    %3361 = vmatprep.subr.bf16.mxu0 0
    %3362 = vmatpush1.bf16.msra.mxu0 0
    %3363 = vmatprep.subr.bf16.mxu0 0
    %3364 = vmatpush1.bf16.msra.mxu0 0
    %3365 = vmatprep.subr.bf16.mxu0 0
    %3366 = vmatpush1.bf16.msra.mxu0 0
    %3367 = vmatprep.mubr.bf16.mxu0 0
    %3368 = vmatmul.mubr.bf16.gmra.mrb[0].mxu0 %v3327
    %v3369 = vpop.f32.mrb[0].mxu0
    %v3370 = vadd.f32 0.0, %v3369
    %v3371 = vpop.f32.mrb[0].mxu0
    %v3372 = vpop.f32.mrb[0].mxu0
    %v3373 = vadd.f32 0.0, %v3372
    %v3374 = vpop.f32.mrb[0].mxu0
    %3375 = vmatprep.mubr.bf16.mxu0 0
    %3376 = vmatmul.mubr.bf16.gmra.mrb[0].mxu0 %v3330
    %v3377 = vpop.f32.mrb[0].mxu0
    %v3378 = vadd.f32 0.0, %v3377
    %v3379 = vpop.f32.mrb[0].mxu0
    %v3380 = vpop.f32.mrb[0].mxu0
    %v3381 = vadd.f32 0.0, %v3380
    %v3382 = vpop.f32.mrb[0].mxu0
    %3383 = vdwg.mxu0
    %v3384 = vadd.f32 %v3320, %v3370
    %v3385 = vadd.f32 %v3321, %v3373
    %v3386 = vadd.f32 %v3322, %v3378
    %v3387 = vadd.f32 %v3323, %v3381
    %v3388 = vpack.c.bf16 %v3240, %v3237
    %v3389 = vpack.c.bf16 %v3248, %v3245
    %v3391 = vsel %vm2845, %v3388, 0
    %v3394 = vsel %vm2845, %v3389, 0
    %v3397 = vsel %vm2858, %v2325, 0
    %3399 = vmatprep.subr.bf16.mxu0 0
    %3400 = vmatpush1.bf16.msra.mxu0 %v3397
    %3401 = vmatprep.subr.bf16.mxu0 0
    %3402 = vmatpush1.bf16.msra.mxu0 0
    %3403 = vmatprep.subr.bf16.mxu0 0
    %3404 = vmatpush1.bf16.msra.mxu0 0
    %3405 = vmatprep.subr.bf16.mxu0 0
    %3406 = vmatpush1.bf16.msra.mxu0 0
    %3407 = vmatprep.subr.bf16.mxu0 0
    %3408 = vmatpush1.bf16.msra.mxu0 0
    %3409 = vmatprep.subr.bf16.mxu0 0
    %3410 = vmatpush1.bf16.msra.mxu0 0
    %3411 = vmatprep.subr.bf16.mxu0 0
    %3412 = vmatpush1.bf16.msra.mxu0 0
    %3413 = vmatprep.subr.bf16.mxu0 0
    %3414 = vmatpush1.bf16.msra.mxu0 0
    %3415 = vmatprep.subr.bf16.mxu0 0
    %3416 = vmatpush1.bf16.msra.mxu0 0
    %3417 = vmatprep.subr.bf16.mxu0 0
    %3418 = vmatpush1.bf16.msra.mxu0 0
    %3419 = vmatprep.subr.bf16.mxu0 0
    %3420 = vmatpush1.bf16.msra.mxu0 0
    %3421 = vmatprep.subr.bf16.mxu0 0
    %3422 = vmatpush1.bf16.msra.mxu0 0
    %3423 = vmatprep.subr.bf16.mxu0 0
    %3424 = vmatpush1.bf16.msra.mxu0 0
    %3425 = vmatprep.subr.bf16.mxu0 0
    %3426 = vmatpush1.bf16.msra.mxu0 0
    %3427 = vmatprep.subr.bf16.mxu0 0
    %3428 = vmatpush1.bf16.msra.mxu0 0
    %3429 = vmatprep.subr.bf16.mxu0 0
    %3430 = vmatpush1.bf16.msra.mxu0 0
    %3431 = vmatprep.mubr.bf16.mxu0 0
    %3432 = vmatmul.mubr.bf16.gmra.mrb[0].mxu0 %v3391
    %v3433 = vpop.f32.mrb[0].mxu0
    %v3434 = vadd.f32 0.0, %v3433
    %v3435 = vpop.f32.mrb[0].mxu0
    %v3436 = vpop.f32.mrb[0].mxu0
    %v3437 = vadd.f32 0.0, %v3436
    %v3438 = vpop.f32.mrb[0].mxu0
    %3439 = vmatprep.mubr.bf16.mxu0 0
    %3440 = vmatmul.mubr.bf16.gmra.mrb[0].mxu0 %v3394
    %v3441 = vpop.f32.mrb[0].mxu0
    %v3442 = vadd.f32 0.0, %v3441
    %v3443 = vpop.f32.mrb[0].mxu0
    %v3444 = vpop.f32.mrb[0].mxu0
    %v3445 = vadd.f32 0.0, %v3444
    %v3446 = vpop.f32.mrb[0].mxu0
    %3447 = vdwg.mxu0
    %v3448 = vadd.f32 %v3384, %v3434
    %v3449 = vadd.f32 %v3385, %v3437
    %v3450 = vadd.f32 %v3386, %v3442
    %v3451 = vadd.f32 %v3387, %v3445
    %v3452 = vmax.f32 %v3448, 0.0
    %v3453 = vmax.f32 %v3449, 0.0
    %v3454 = vmax.f32 %v3450, 0.0
    %v3455 = vmax.f32 %v3451, 0.0
    %v3456 = vpack.c.bf16 %v3453, %v3452
    %v3457 = vpack.c.bf16 %v3455, %v3454
    %v3459 = vlaneseq
    %v3460 = vshrl.u32 %v3459, 7
    %v3461 = vsub.s32 0, %v3460
    %v3462 = vrot.slane %v2331, %v3461
    %v3468 = vunpack.c.l.b16 %v2327
    %v3469 = vunpack.c.l.b16 %v2328
    %v3470 = vunpack.c.l.b16 %v2329
    %v3471 = vunpack.c.l.b16 %v2330
    %v3472 = vpack.c.b16 %v3469, %v3468
    %v3473 = vpack.c.b16 %v3471, %v3470
    %v3477 = vsel %vm523, %v3456, 0
    %v3480 = vsel %vm523, %v3457, 0
    %3482 = vmatprep.subr.bf16.mxu0 0
    %3483 = vmatpush1.bf16.msra.mxu0 %v3472
    %3484 = vmatprep.subr.bf16.mxu0 0
    %3485 = vmatpush1.bf16.msra.mxu0 %v3473
    %3486 = vmatprep.subr.bf16.mxu0 0
    %3487 = vmatpush1.bf16.msra.mxu0 0
    %3488 = vmatprep.subr.bf16.mxu0 0
    %3489 = vmatpush1.bf16.msra.mxu0 0
    %3490 = vmatprep.subr.bf16.mxu0 0
    %3491 = vmatpush1.bf16.msra.mxu0 0
    %3492 = vmatprep.subr.bf16.mxu0 0
    %3493 = vmatpush1.bf16.msra.mxu0 0
    %3494 = vmatprep.subr.bf16.mxu0 0
    %3495 = vmatpush1.bf16.msra.mxu0 0
    %3496 = vmatprep.subr.bf16.mxu0 0
    %3497 = vmatpush1.bf16.msra.mxu0 0
    %3498 = vmatprep.subr.bf16.mxu0 0
    %3499 = vmatpush1.bf16.msra.mxu0 0
    %3500 = vmatprep.subr.bf16.mxu0 0
    %3501 = vmatpush1.bf16.msra.mxu0 0
    %3502 = vmatprep.subr.bf16.mxu0 0
    %3503 = vmatpush1.bf16.msra.mxu0 0
    %3504 = vmatprep.subr.bf16.mxu0 0
    %3505 = vmatpush1.bf16.msra.mxu0 0
    %3506 = vmatprep.subr.bf16.mxu0 0
    %3507 = vmatpush1.bf16.msra.mxu0 0
    %3508 = vmatprep.subr.bf16.mxu0 0
    %3509 = vmatpush1.bf16.msra.mxu0 0
    %3510 = vmatprep.subr.bf16.mxu0 0
    %3511 = vmatpush1.bf16.msra.mxu0 0
    %3512 = vmatprep.subr.bf16.mxu0 0
    %3513 = vmatpush1.bf16.msra.mxu0 0
    %3514 = vmatprep.mubr.bf16.mxu0 0
    %3515 = vmatmul.mubr.bf16.gmra.mrb[0].mxu0 %v3477
    %v3516 = vpop.f32.mrb[0].mxu0
    %v3517 = vadd.f32 %v3462, %v3516
    %v3518 = vpop.f32.mrb[0].mxu0
    %v3519 = vpop.f32.mrb[0].mxu0
    %v3520 = vadd.f32 %v3462, %v3519
    %v3521 = vpop.f32.mrb[0].mxu0
    %3522 = vmatprep.mubr.bf16.mxu0 0
    %3523 = vmatmul.mubr.bf16.gmra.mrb[0].mxu0 %v3480
    %v3524 = vpop.f32.mrb[0].mxu0
    %v3525 = vadd.f32 %v3462, %v3524
    %v3526 = vpop.f32.mrb[0].mxu0
    %v3527 = vpop.f32.mrb[0].mxu0
    %v3528 = vadd.f32 %v3462, %v3527
    %v3529 = vpop.f32.mrb[0].mxu0
    %3530 = vdwg.mxu0
    %v3531 = vmax.f32 %v3517, 0.0
    %v3532 = vmax.f32 %v3520, 0.0
    %v3533 = vmax.f32 %v3525, 0.0
    %v3534 = vmax.f32 %v3528, 0.0
    %v3535 = vpack.c.bf16 %v3532, %v3531
    %v3536 = vpack.c.bf16 %v3534, %v3533
    %v3538 = vlaneseq
    %v3539 = vshrl.u32 %v3538, 7
    %v3540 = vsub.s32 0, %v3539
    %v3541 = vrot.slane %v2336, %v3540
    %v3547 = vunpack.c.l.b16 %v2332
    %v3548 = vunpack.c.l.b16 %v2333
    %v3549 = vunpack.c.l.b16 %v2334
    %v3550 = vunpack.c.l.b16 %v2335
    %v3551 = vpack.c.b16 %v3548, %v3547
    %v3552 = vpack.c.b16 %v3550, %v3549
    %v3556 = vsel %vm523, %v3535, 0
    %v3559 = vsel %vm523, %v3536, 0
    %3561 = vmatprep.subr.bf16.mxu0 0
    %3562 = vmatpush1.bf16.msra.mxu0 %v3551
    %3563 = vmatprep.subr.bf16.mxu0 0
    %3564 = vmatpush1.bf16.msra.mxu0 %v3552
    %3565 = vmatprep.subr.bf16.mxu0 0
    %3566 = vmatpush1.bf16.msra.mxu0 0
    %3567 = vmatprep.subr.bf16.mxu0 0
    %3568 = vmatpush1.bf16.msra.mxu0 0
    %3569 = vmatprep.subr.bf16.mxu0 0
    %3570 = vmatpush1.bf16.msra.mxu0 0
    %3571 = vmatprep.subr.bf16.mxu0 0
    %3572 = vmatpush1.bf16.msra.mxu0 0
    %3573 = vmatprep.subr.bf16.mxu0 0
    %3574 = vmatpush1.bf16.msra.mxu0 0
    %3575 = vmatprep.subr.bf16.mxu0 0
    %3576 = vmatpush1.bf16.msra.mxu0 0
    %3577 = vmatprep.subr.bf16.mxu0 0
    %3578 = vmatpush1.bf16.msra.mxu0 0
    %3579 = vmatprep.subr.bf16.mxu0 0
    %3580 = vmatpush1.bf16.msra.mxu0 0
    %3581 = vmatprep.subr.bf16.mxu0 0
    %3582 = vmatpush1.bf16.msra.mxu0 0
    %3583 = vmatprep.subr.bf16.mxu0 0
    %3584 = vmatpush1.bf16.msra.mxu0 0
    %3585 = vmatprep.subr.bf16.mxu0 0
    %3586 = vmatpush1.bf16.msra.mxu0 0
    %3587 = vmatprep.subr.bf16.mxu0 0
    %3588 = vmatpush1.bf16.msra.mxu0 0
    %3589 = vmatprep.subr.bf16.mxu0 0
    %3590 = vmatpush1.bf16.msra.mxu0 0
    %3591 = vmatprep.subr.bf16.mxu0 0
    %3592 = vmatpush1.bf16.msra.mxu0 0
    %3593 = vmatprep.mubr.bf16.mxu0 0
    %3594 = vmatmul.mubr.bf16.gmra.mrb[0].mxu0 %v3556
    %v3595 = vpop.f32.mrb[0].mxu0
    %v3596 = vadd.f32 %v3541, %v3595
    %v3597 = vpop.f32.mrb[0].mxu0
    %v3598 = vpop.f32.mrb[0].mxu0
    %v3599 = vadd.f32 %v3541, %v3598
    %v3600 = vpop.f32.mrb[0].mxu0
    %3601 = vmatprep.mubr.bf16.mxu0 0
    %3602 = vmatmul.mubr.bf16.gmra.mrb[0].mxu0 %v3559
    %v3603 = vpop.f32.mrb[0].mxu0
    %v3604 = vadd.f32 %v3541, %v3603
    %v3605 = vpop.f32.mrb[0].mxu0
    %v3606 = vpop.f32.mrb[0].mxu0
    %v3607 = vadd.f32 %v3541, %v3606
    %v3608 = vpop.f32.mrb[0].mxu0
    %3609 = vdwg.mxu0
    %3614 = vrot.lane.b32.xlu0 %v1900, 8
    %v3615 = vpop.permute.xlu0 %3614
    %3616 = vrot.lane.b32.xlu0 %v1901, 8
    %v3617 = vpop.permute.xlu0 %3616
    %3618 = vrot.lane.b32.xlu0 %v1902, 8
    %v3619 = vpop.permute.xlu0 %3618
    %3620 = vrot.lane.b32.xlu0 %v1903, 8
    %v3621 = vpop.permute.xlu0 %3620
    %v3626 = vsel %vm718, %v3596, %v3615
    %v3627 = vsel %vm718, %v3599, %v3617
    %v3628 = vsel %vm718, %v3604, %v3619
    %v3629 = vsel %vm718, %v3607, %v3621
    %v3630 = vpack.c.bf16 %v3627, %v3626
    %v3631 = vpack.c.bf16 %v3629, %v3628
    %v3633 = vlaneseq
    %v3634 = vshrl.u32 %v3633, 7
    %v3635 = vsub.s32 0, %v3634
    %v3636 = vrot.slane %v457, %v3635
    %v3641 = vunpack.c.l.b16 %v454
    %v3642 = vunpack.c.l.b16 %v455
    %v3643 = vunpack.c.l.b16 %v456
    %v3644 = vpack.c.b16 %v3642, %v3641
    %v3645 = vpack.c.b16 %v3643, %v3643
    %vm3647 = vcmask 162816
    %v3649 = vsel %vm3647, %v3630, 0
    %v3652 = vsel %vm3647, %v3631, 0
    %v3655 = vsel %vm817, %v3645, 0
    %3657 = vmatprep.subr.bf16.mxu0 0
    %3658 = vmatpush1.bf16.msra.mxu0 %v3644
    %3659 = vmatprep.subr.bf16.mxu0 0
    %3660 = vmatpush1.bf16.msra.mxu0 %v3655
    %3661 = vmatprep.subr.bf16.mxu0 0
    %3662 = vmatpush1.bf16.msra.mxu0 0
    %3663 = vmatprep.subr.bf16.mxu0 0
    %3664 = vmatpush1.bf16.msra.mxu0 0
    %3665 = vmatprep.subr.bf16.mxu0 0
    %3666 = vmatpush1.bf16.msra.mxu0 0
    %3667 = vmatprep.subr.bf16.mxu0 0
    %3668 = vmatpush1.bf16.msra.mxu0 0
    %3669 = vmatprep.subr.bf16.mxu0 0
    %3670 = vmatpush1.bf16.msra.mxu0 0
    %3671 = vmatprep.subr.bf16.mxu0 0
    %3672 = vmatpush1.bf16.msra.mxu0 0
    %3673 = vmatprep.subr.bf16.mxu0 0
    %3674 = vmatpush1.bf16.msra.mxu0 0
    %3675 = vmatprep.subr.bf16.mxu0 0
    %3676 = vmatpush1.bf16.msra.mxu0 0
    %3677 = vmatprep.subr.bf16.mxu0 0
    %3678 = vmatpush1.bf16.msra.mxu0 0
    %3679 = vmatprep.subr.bf16.mxu0 0
    %3680 = vmatpush1.bf16.msra.mxu0 0
    %3681 = vmatprep.subr.bf16.mxu0 0
    %3682 = vmatpush1.bf16.msra.mxu0 0
    %3683 = vmatprep.subr.bf16.mxu0 0
    %3684 = vmatpush1.bf16.msra.mxu0 0
    %3685 = vmatprep.subr.bf16.mxu0 0
    %3686 = vmatpush1.bf16.msra.mxu0 0
    %3687 = vmatprep.subr.bf16.mxu0 0
    %3688 = vmatpush1.bf16.msra.mxu0 0
    %3689 = vmatprep.mubr.bf16.mxu0 0
    %3690 = vmatmul.mubr.bf16.gmra.mrb[0].mxu0 %v3649
    %v3691 = vpop.f32.mrb[0].mxu0
    %v3692 = vadd.f32 %v3636, %v3691
    %v3693 = vpop.f32.mrb[0].mxu0
    %v3694 = vpop.f32.mrb[0].mxu0
    %v3695 = vadd.f32 %v3636, %v3694
    %v3696 = vpop.f32.mrb[0].mxu0
    %3697 = vmatprep.mubr.bf16.mxu0 0
    %3698 = vmatmul.mubr.bf16.gmra.mrb[0].mxu0 %v3652
    %v3699 = vpop.f32.mrb[0].mxu0
    %v3700 = vadd.f32 %v3636, %v3699
    %v3701 = vpop.f32.mrb[0].mxu0
    %v3702 = vpop.f32.mrb[0].mxu0
    %v3703 = vadd.f32 %v3636, %v3702
    %v3704 = vpop.f32.mrb[0].mxu0
    %3705 = vdwg.mxu0
    %vm3706 = vcmask 39936
    %3707 = vst.msk [vmem:[%s121] sm:$0xff] %vm3706, %v3692
    %3708 = vst.msk [vmem:[%s121 + $0x8] sm:$0xff] %vm3706, %v3695
    %3709 = vst.msk [vmem:[%s121 + $0x10] sm:$0xff] %vm3706, %v3700
    %3710 = vst.msk [vmem:[%s121 + $0x18] sm:$0xff] %vm3706, %v3703
    // Predicated region
    $region298: #{tpu_custom_call.1} parent=1 // pred_check
      _
    $region299: #{tpu_custom_call.1} parent=1 // pred_check_branch
      %3712 = sbr.rel (0) target = $region301
    $region300: #{tpu_custom_call.1} parent=1 // pred_region
      _
    $region301: #{tpu_custom_call.1} parent=1 // pred_fallthru
      _
    // Predicated region
    $region302: #{tpu_custom_call.1} parent=1 // pred_check
      _
    $region303: #{tpu_custom_call.1} parent=1 // pred_check_branch
      %3714 = sbr.rel (0) target = $region305
    $region304: #{tpu_custom_call.1} parent=1 // pred_region
      _
    $region305: #{tpu_custom_call.1} parent=1 // pred_fallthru
      _
    %3715 = vsyncpa [#allocation3], 1
    %3716 = vsyncpa [#allocation5], 1
    %3717 = vsyncpa [#allocation8], 1
    %3718 = vsyncpa [#allocation11], 1
    %3719 = vsyncpa [#allocation14], 1
    %3720 = vsyncpa [#allocation17], 1
    %3721 = vsyncpa [#allocation20], 1
    %3722 = vsyncpa [#allocation23], 1

</llo_original>
